<compile_context>
chip_gen: v5e
topology: v5e:2x2
jax: 0.10.0
libtpu: 0.0.40
codegen_flags: <defaults>
</compile_context>

<pallas_src>
import functools

import jax
import jax.numpy as jnp
from jax import lax
from jax.experimental import pallas as pl
from jax.experimental.pallas import tpu as pltpu

KSIZE = 7
PAD = 3


def attention_kernel(cw_ref, cb_ref, w1t_ref, b1_ref, w2_ref, b2_ref,
                     x_ref, o_ref,
                     ca_scr, red_scr, pad_scr, att2_scr, att_scr,
                     *, H, W, Cb):
    # cw_ref : SMEM (2*7*7,) flattened 7x7 conv weight, layout [in_ch, kh, kw]
    # cb_ref : SMEM (1,)     conv bias
    # w1t_ref: VMEM (C, Cr)  fc1 weight transposed
    # b1_ref : VMEM (1, Cr)  fc1 bias
    # w2_ref : VMEM (C, Cr)  fc2 weight
    # b2_ref : VMEM (C, 1)   fc2 bias
    # x_ref  : VMEM (Nb, C, H*W) lane-dense input block
    # o_ref  : VMEM (Nb, C, H*W) output block
    f32 = jnp.float32
    Nb = x_ref.shape[0]
    C = x_ref.shape[1]
    HW = H * W
    num_chunks = C // Cb
    assert num_chunks * Cb == C

    # ---- zero only the 3-wide halo of the padded conv scratch ---------------
    pad_scr[:, :, 0:PAD, :] = jnp.zeros((2, Nb, PAD, W + 2 * PAD), f32)
    pad_scr[:, :, PAD + H:PAD + H + PAD, :] = jnp.zeros(
        (2, Nb, PAD, W + 2 * PAD), f32)
    pad_scr[:, :, :, 0:PAD] = jnp.zeros((2, Nb, H + 2 * PAD, PAD), f32)
    pad_scr[:, :, :, PAD + W:PAD + W + PAD] = jnp.zeros(
        (2, Nb, H + 2 * PAD, PAD), f32)

    # ---- channel attention: global average pool (chunked over C) ------------
    for i in range(num_chunks):
        c0 = i * Cb
        xc = x_ref[:, c0:c0 + Cb, :].astype(f32)                 # (Nb, Cb, HW)
        ca_scr[:, c0:c0 + Cb, :] = jnp.sum(xc, axis=-1, keepdims=True)

    # ---- channel attention MLP: a = sigmoid(fc2(relu(fc1(mean)))) -----------
    inv_hw = 1.0 / float(HW)
    w1t = w1t_ref[...]                                           # (C, Cr)
    b1 = b1_ref[...]                                             # (1, Cr)
    w2 = w2_ref[...]                                             # (C, Cr)
    b2 = b2_ref[...]                                             # (C, 1)
    for nb in range(Nb):
        s_nb = ca_scr[nb] * inv_hw                               # (C, 1)
        hid = jnp.sum(w1t * s_nb, axis=0, keepdims=True) + b1
        hid = jnp.maximum(hid, 0.0)                              # (1, Cr)
        a_nb = jnp.sum(w2 * hid, axis=1, keepdims=True) + b2
        ca_scr[nb] = jax.nn.sigmoid(a_nb)                        # (C, 1)

    # ---- spatial attention inputs: channel mean & max of y = x * a ----------
    inv_c = 1.0 / float(C)
    psum_acc = None
    pmax_acc = None
    for i in range(num_chunks):
        c0 = i * Cb
        xc = x_ref[:, c0:c0 + Cb, :].astype(f32)                 # (Nb, Cb, HW)
        yc = xc * ca_scr[:, c0:c0 + Cb, :]
        psum = jnp.sum(yc, axis=1)                               # (Nb, HW)
        pmax = jnp.max(yc, axis=1)                               # (Nb, HW)
        if i == 0:
            psum_acc, pmax_acc = psum, pmax
        else:
            psum_acc = psum_acc + psum
            pmax_acc = jnp.maximum(pmax_acc, pmax)
    red_scr[0] = psum_acc * inv_c                                # avg plane (pre-scaled)
    red_scr[1] = pmax_acc                                        # max plane

    # ---- scatter the flat (Nb, HW) maps into the padded 2-D conv scratch ----
    for nb in range(Nb):
        for r in range(H):
            lo = r * W
            pad_scr[0, nb, PAD + r:PAD + r + 1, PAD:PAD + W] = (
                red_scr[0, nb:nb + 1, lo:lo + W])
            pad_scr[1, nb, PAD + r:PAD + r + 1, PAD:PAD + W] = (
                red_scr[1, nb:nb + 1, lo:lo + W])

    # ---- 7x7 "same" conv over the 2-channel [avg, max] map, then sigmoid ----
    acc = cb_ref[0] + jnp.zeros((Nb, H, W), f32)
    for dy in range(KSIZE):
        rows = pad_scr[:, :, dy:dy + H, :]                       # (2, Nb, H, W+6)
        for dx in range(KSIZE):
            win = rows[:, :, :, dx:dx + W]                       # (2, Nb, H, W)
            w_avg = cw_ref[dy * KSIZE + dx]
            w_max = cw_ref[KSIZE * KSIZE + dy * KSIZE + dx]
            acc = acc + w_avg * win[0] + w_max * win[1]
    att2_scr[...] = jax.nn.sigmoid(acc)                          # (Nb, H, W)

    # ---- flatten att back to lane-dense (Nb, 1, HW) --------------------------
    for nb in range(Nb):
        for r in range(H):
            lo = r * W
            att_scr[nb, 0:1, lo:lo + W] = att2_scr[nb, r:r + 1, :]

    # ---- out = x * a (per-channel) * att (per-pixel), chunked over C ---------
    att = att_scr[...]                                           # (Nb, 1, HW)
    for i in range(num_chunks):
        c0 = i * Cb
        xc = x_ref[:, c0:c0 + Cb, :].astype(f32)
        scaled = xc * ca_scr[:, c0:c0 + Cb, :] * att
        o_ref[:, c0:c0 + Cb, :] = scaled.astype(o_ref.dtype)


def _pick_batch_block(N, block_bytes_per_elem):
    target = 1 << 20                     # aim for >= ~1 MiB moved per grid step
    budget = 24 << 20                    # keep double-buffered in+out blocks modest
    cap = min(max(1, target // max(1, block_bytes_per_elem)),
              max(1, budget // max(1, 4 * block_bytes_per_elem)))
    if N >= 2:
        cap = min(cap, max(1, N // 2))   # keep >=2 grid steps (feed both v7x TCs)
    nb = 1
    for d in range(1, N + 1):
        if N % d == 0 and d <= cap:
            nb = d
    return nb


def _pick_chan_chunk(C, HW):
    limit = max(8, (128 * 1024) // max(1, 4 * HW))   # <=~128 KiB of f32 per chunk
    for cb in (64, 32, 16, 8):
        if C % cb == 0 and cb <= limit:
            return cb
    return C


def attention_forward(x, fc1_w, fc1_b, fc2_w, fc2_b, conv_w, conv_b):
    """Fused CBAM Attention forward.

    x: (N, C, H, W); fc1_w: (Cr, C, 1, 1); fc1_b: (Cr,);
    fc2_w: (C, Cr, 1, 1); fc2_b: (C,); conv_w: (1, 2, 7, 7); conv_b: (1,).
    """
    N, C, H, W = x.shape
    Cr = fc1_w.shape[0]
    HW = H * W

    x_flat = x.reshape(N, C, HW)                                  # free reshape

    w1t = jnp.asarray(fc1_w, jnp.float32).reshape(Cr, C).T        # (C, Cr)
    b1r = jnp.asarray(fc1_b, jnp.float32).reshape(1, Cr)
    w2m = jnp.asarray(fc2_w, jnp.float32).reshape(C, Cr)
    b2c = jnp.asarray(fc2_b, jnp.float32).reshape(C, 1)
    cwf = jnp.asarray(conv_w, jnp.float32).reshape(-1)            # (2*49,)
    cbf = jnp.asarray(conv_b, jnp.float32).reshape(-1)            # (1,)

    Nb = _pick_batch_block(N, C * HW * x.dtype.itemsize)
    Cb = _pick_chan_chunk(C, HW)

    kernel = functools.partial(attention_kernel, H=H, W=W, Cb=Cb)

    out_flat = pl.pallas_call(
        kernel,
        out_shape=jax.ShapeDtypeStruct((N, C, HW), x.dtype),
        grid=(N // Nb,),
        in_specs=[
            pl.BlockSpec(memory_space=pltpu.MemorySpace.SMEM),         # conv w
            pl.BlockSpec(memory_space=pltpu.MemorySpace.SMEM),         # conv b
            pl.BlockSpec((C, Cr), lambda n: (0, 0)),                   # fc1 w^T
            pl.BlockSpec((1, Cr), lambda n: (0, 0)),                   # fc1 b
            pl.BlockSpec((C, Cr), lambda n: (0, 0)),                   # fc2 w
            pl.BlockSpec((C, 1), lambda n: (0, 0)),                    # fc2 b
            pl.BlockSpec((Nb, C, HW), lambda n: (n, 0, 0)),            # x
        ],
        out_specs=pl.BlockSpec((Nb, C, HW), lambda n: (n, 0, 0)),
        scratch_shapes=[
            pltpu.VMEM((Nb, C, 1), jnp.float32),                       # chan scale
            pltpu.VMEM((2, Nb, HW), jnp.float32),                      # avg/max of y
            pltpu.VMEM((2, Nb, H + 2 * PAD, W + 2 * PAD), jnp.float32),  # padded conv in
            pltpu.VMEM((Nb, H, W), jnp.float32),                       # att (2-D)
            pltpu.VMEM((Nb, 1, HW), jnp.float32),                      # att (flat)
        ],
        compiler_params=pltpu.CompilerParams(
            dimension_semantics=("parallel",),
            vmem_limit_bytes=32 * 1024 * 1024),
    )(cwf, cbf, w1t, b1r, w2m, b2c, x_flat)

    return out_flat.reshape(N, C, H, W)


def attention_ref(x, fc1_w, fc1_b, fc2_w, fc2_b, conv_w, conv_b):
    N, C, H, W = x.shape
    Cr = fc1_w.shape[0]
    # channel attention
    s = jnp.mean(x, axis=(2, 3))                                   # (N, C)
    hid = jax.nn.relu(s @ fc1_w.reshape(Cr, C).T + fc1_b)          # (N, Cr)
    a = jax.nn.sigmoid(hid @ fc2_w.reshape(C, Cr).T + fc2_b)       # (N, C)
    y = x * a[:, :, None, None]
    # spatial attention
    avg = jnp.mean(y, axis=1, keepdims=True)
    mx = jnp.max(y, axis=1, keepdims=True)
    cat = jnp.concatenate([avg, mx], axis=1)                       # (N, 2, H, W)
    conv = lax.conv_general_dilated(
        cat, conv_w, window_strides=(1, 1),
        padding=((PAD, PAD), (PAD, PAD)),
        dimension_numbers=("NCHW", "OIHW", "NCHW"))
    att = jax.nn.sigmoid(conv + conv_b.reshape(1, 1, 1, 1))
    return y * att


if __name__ == "__main__":
    key = jax.random.PRNGKey(0)
    kx, k1, k2, k3, k4, k5, k6 = jax.random.split(key, 7)

    N, C, H, W = 2, 32, 16, 16
    reduction = 16
    Cr = int(C / reduction)                    # nn.Conv2d(C, C // 16, 1) -> 2

    x = jax.random.normal(kx, (N, C, H, W), dtype=jnp.float32)

    def _uniform(k, shape, fan_in):
        bound = 1.0 / (fan_in ** 0.5)
        return jax.random.uniform(k, shape, minval=-bound, maxval=bound,
                                  dtype=jnp.float32)

    fc1_w = _uniform(k1, (Cr, C, 1, 1), C)
    fc1_b = _uniform(k2, (Cr,), C)
    fc2_w = _uniform(k3, (C, Cr, 1, 1), Cr)
    fc2_b = _uniform(k4, (C,), Cr)
    conv_w = _uniform(k5, (1, 2, KSIZE, KSIZE), 2 * KSIZE * KSIZE)
    conv_b = _uniform(k6, (1,), 2 * KSIZE * KSIZE)

    out = attention_forward(x, fc1_w, fc1_b, fc2_w, fc2_b, conv_w, conv_b)
    out = jax.block_until_ready(out)

    ref = attention_ref(x, fc1_w, fc1_b, fc2_w, fc2_b, conv_w, conv_b)
    assert out.shape == (N, C, H, W)
    err = float(jnp.max(jnp.abs(out.astype(jnp.float32) - ref)))
    assert err < 1e-4, err
    print("KERNEL_OK")
</pallas_src>

<mosaic_0001>
module attributes {stable_mosaic.version = 11 : i64} {
  func.func @attention_kernel(%arg0: i32, %arg1: memref<98xf32, #tpu.memory_space<smem>>, %arg2: memref<1xf32, #tpu.memory_space<smem>>, %arg3: memref<32x2xf32, #tpu.memory_space<vmem>>, %arg4: memref<1x2xf32, #tpu.memory_space<vmem>>, %arg5: memref<32x2xf32, #tpu.memory_space<vmem>>, %arg6: memref<32x1xf32, #tpu.memory_space<vmem>>, %arg7: memref<1x32x256xf32, #tpu.memory_space<vmem>>, %arg8: memref<1x32x256xf32, #tpu.memory_space<vmem>>, %arg9: memref<1x32x1xf32, #tpu.memory_space<vmem>>, %arg10: memref<2x1x256xf32, #tpu.memory_space<vmem>>, %arg11: memref<2x1x22x22xf32, #tpu.memory_space<vmem>>, %arg12: memref<1x16x16xf32, #tpu.memory_space<vmem>>, %arg13: memref<1x1x256xf32, #tpu.memory_space<vmem>>) attributes {dimension_semantics = [#tpu.dimension_semantics<parallel>], iteration_bounds = array<i64: 2>, scalar_prefetch = 0 : i64, scratch_operands = 5 : i64, tpu.core_type = #tpu.core_type<tc>, window_params = [{transform_indices = @transform_0, window_bounds = array<i64: 98>}, {transform_indices = @transform_1, window_bounds = array<i64: 1>}, {pipeline_mode = #tpu.pipeline_mode<synchronous>, transform_indices = @transform_2, window_bounds = array<i64: 32, 2>}, {pipeline_mode = #tpu.pipeline_mode<synchronous>, transform_indices = @transform_3, window_bounds = array<i64: 1, 2>}, {pipeline_mode = #tpu.pipeline_mode<synchronous>, transform_indices = @transform_4, window_bounds = array<i64: 32, 2>}, {pipeline_mode = #tpu.pipeline_mode<synchronous>, transform_indices = @transform_5, window_bounds = array<i64: 32, 1>}, {transform_indices = @transform_6, window_bounds = array<i64: 1, 32, 256>}, {transform_indices = @transform_7, window_bounds = array<i64: 1, 32, 256>}]} {
    %cst = arith.constant 0.000000e+00 : f32
    %0 = vector.broadcast %cst : f32 to vector<2x1x3x22xf32>
    %c0 = arith.constant 0 : index
    %c0_0 = arith.constant 0 : index
    %c0_1 = arith.constant 0 : index
    %c0_2 = arith.constant 0 : index
    %1 = vector.load %arg11[%c0, %c0_0, %c0_1, %c0_2] : memref<2x1x22x22xf32, #tpu.memory_space<vmem>>, vector<2x1x3x22xf32>
    tpu.vector_store %arg11[%c0, %c0_0, %c0_1, %c0_2], %0 {strides = array<i32>} : memref<2x1x22x22xf32, #tpu.memory_space<vmem>>, vector<2x1x3x22xf32>,
    %cst_3 = arith.constant 0.000000e+00 : f32
    %2 = vector.broadcast %cst_3 : f32 to vector<2x1x3x22xf32>
    %c0_4 = arith.constant 0 : index
    %c0_5 = arith.constant 0 : index
    %c19 = arith.constant 19 : index
    %c0_6 = arith.constant 0 : index
    %3 = vector.load %arg11[%c0_4, %c0_5, %c19, %c0_6] : memref<2x1x22x22xf32, #tpu.memory_space<vmem>>, vector<2x1x3x22xf32>
    tpu.vector_store %arg11[%c0_4, %c0_5, %c19, %c0_6], %2 {strides = array<i32>} : memref<2x1x22x22xf32, #tpu.memory_space<vmem>>, vector<2x1x3x22xf32>,
    %cst_7 = arith.constant 0.000000e+00 : f32
    %4 = vector.broadcast %cst_7 : f32 to vector<2x1x22x3xf32>
    %c0_8 = arith.constant 0 : index
    %c0_9 = arith.constant 0 : index
    %c0_10 = arith.constant 0 : index
    %c0_11 = arith.constant 0 : index
    %5 = vector.load %arg11[%c0_8, %c0_9, %c0_10, %c0_11] : memref<2x1x22x22xf32, #tpu.memory_space<vmem>>, vector<2x1x22x3xf32>
    tpu.vector_store %arg11[%c0_8, %c0_9, %c0_10, %c0_11], %4 {strides = array<i32>} : memref<2x1x22x22xf32, #tpu.memory_space<vmem>>, vector<2x1x22x3xf32>,
    %cst_12 = arith.constant 0.000000e+00 : f32
    %6 = vector.broadcast %cst_12 : f32 to vector<2x1x22x3xf32>
    %c0_13 = arith.constant 0 : index
    %c0_14 = arith.constant 0 : index
    %c0_15 = arith.constant 0 : index
    %c19_16 = arith.constant 19 : index
    %7 = vector.load %arg11[%c0_13, %c0_14, %c0_15, %c19_16] : memref<2x1x22x22xf32, #tpu.memory_space<vmem>>, vector<2x1x22x3xf32>
    tpu.vector_store %arg11[%c0_13, %c0_14, %c0_15, %c19_16], %6 {strides = array<i32>} : memref<2x1x22x22xf32, #tpu.memory_space<vmem>>, vector<2x1x22x3xf32>,
    %c0_17 = arith.constant 0 : index
    %c0_18 = arith.constant 0 : index
    %c0_19 = arith.constant 0 : index
    %8 = vector.load %arg7[%c0_17, %c0_18, %c0_19] : memref<1x32x256xf32, #tpu.memory_space<vmem>>, vector<1x32x256xf32>
    %cst_20 = arith.constant dense<0.000000e+00> : vector<1x32xf32>
    %9 = vector.multi_reduction <add>, %8, %cst_20 [2] : vector<1x32x256xf32> to vector<1x32xf32>
    %10 = vector.shape_cast %9 : vector<1x32xf32> to vector<1x32x1xf32>
    %c0_21 = arith.constant 0 : index
    %c0_22 = arith.constant 0 : index
    %c0_23 = arith.constant 0 : index
    %11 = vector.load %arg9[%c0_21, %c0_22, %c0_23] : memref<1x32x1xf32, #tpu.memory_space<vmem>>, vector<1x32x1xf32>
    tpu.vector_store %arg9[%c0_21, %c0_22, %c0_23], %10 {strides = array<i32>} : memref<1x32x1xf32, #tpu.memory_space<vmem>>, vector<1x32x1xf32>,
    %c0_24 = arith.constant 0 : index
    %c0_25 = arith.constant 0 : index
    %12 = vector.load %arg3[%c0_24, %c0_25] : memref<32x2xf32, #tpu.memory_space<vmem>>, vector<32x2xf32>
    %c0_26 = arith.constant 0 : index
    %c0_27 = arith.constant 0 : index
    %13 = vector.load %arg4[%c0_26, %c0_27] : memref<1x2xf32, #tpu.memory_space<vmem>>, vector<1x2xf32>
    %c0_28 = arith.constant 0 : index
    %c0_29 = arith.constant 0 : index
    %14 = vector.load %arg5[%c0_28, %c0_29] : memref<32x2xf32, #tpu.memory_space<vmem>>, vector<32x2xf32>
    %c0_30 = arith.constant 0 : index
    %c0_31 = arith.constant 0 : index
    %15 = vector.load %arg6[%c0_30, %c0_31] : memref<32x1xf32, #tpu.memory_space<vmem>>, vector<32x1xf32>
    %c0_32 = arith.constant 0 : index
    %c0_33 = arith.constant 0 : index
    %c0_34 = arith.constant 0 : index
    %16 = vector.load %arg9[%c0_32, %c0_33, %c0_34] : memref<1x32x1xf32, #tpu.memory_space<vmem>>, vector<1x32x1xf32>
    %17 = vector.shape_cast %16 : vector<1x32x1xf32> to vector<32x1xf32>
    %cst_35 = arith.constant 3.906250e-03 : f32
    %18 = vector.broadcast %cst_35 : f32 to vector<32x1xf32>
    %19 = arith.mulf %17, %18 : vector<32x1xf32>
    %20 = vector.broadcast %19 : vector<32x1xf32> to vector<32x2xf32>
    %21 = arith.mulf %12, %20 : vector<32x2xf32>
    %cst_36 = arith.constant dense<0.000000e+00> : vector<2xf32>
    %22 = vector.multi_reduction <add>, %21, %cst_36 [0] : vector<32x2xf32> to vector<2xf32>
    %23 = vector.shape_cast %22 : vector<2xf32> to vector<1x2xf32>
    %24 = arith.addf %23, %13 : vector<1x2xf32>
    %cst_37 = arith.constant 0.000000e+00 : f32
    %25 = vector.broadcast %cst_37 : f32 to vector<1x2xf32>
    %26 = arith.maximumf %24, %25 : vector<1x2xf32>
    %27 = vector.broadcast %26 : vector<1x2xf32> to vector<32x2xf32>
    %28 = arith.mulf %14, %27 : vector<32x2xf32>
    %cst_38 = arith.constant dense<0.000000e+00> : vector<32xf32>
    %29 = vector.multi_reduction <add>, %28, %cst_38 [1] : vector<32x2xf32> to vector<32xf32>
    %30 = vector.shape_cast %29 : vector<32xf32> to vector<32x1xf32>
    %31 = arith.addf %30, %15 : vector<32x1xf32>
    %32 = arith.negf %31 : vector<32x1xf32>
    %33 = math.exp %32 : vector<32x1xf32>
    %cst_39 = arith.constant 1.000000e+00 : f32
    %34 = vector.broadcast %cst_39 : f32 to vector<32x1xf32>
    %35 = arith.addf %34, %33 : vector<32x1xf32>
    %36 = arith.divf %34, %35 : vector<32x1xf32>
    %c0_40 = arith.constant 0 : index
    %c0_41 = arith.constant 0 : index
    %c0_42 = arith.constant 0 : index
    %37 = vector.load %arg9[%c0_40, %c0_41, %c0_42] : memref<1x32x1xf32, #tpu.memory_space<vmem>>, vector<1x32x1xf32>
    %38 = vector.shape_cast %37 : vector<1x32x1xf32> to vector<32x1xf32>
    %39 = vector.shape_cast %36 : vector<32x1xf32> to vector<1x32x1xf32>
    tpu.vector_store %arg9[%c0_40, %c0_41, %c0_42], %39 {strides = array<i32>} : memref<1x32x1xf32, #tpu.memory_space<vmem>>, vector<1x32x1xf32>,
    %c0_43 = arith.constant 0 : index
    %c0_44 = arith.constant 0 : index
    %c0_45 = arith.constant 0 : index
    %40 = vector.load %arg7[%c0_43, %c0_44, %c0_45] : memref<1x32x256xf32, #tpu.memory_space<vmem>>, vector<1x32x256xf32>
    %c0_46 = arith.constant 0 : index
    %c0_47 = arith.constant 0 : index
    %c0_48 = arith.constant 0 : index
    %41 = vector.load %arg9[%c0_46, %c0_47, %c0_48] : memref<1x32x1xf32, #tpu.memory_space<vmem>>, vector<1x32x1xf32>
    %42 = vector.broadcast %41 : vector<1x32x1xf32> to vector<1x32x256xf32>
    %43 = arith.mulf %40, %42 : vector<1x32x256xf32>
    %cst_49 = arith.constant dense<0.000000e+00> : vector<1x256xf32>
    %44 = vector.multi_reduction <add>, %43, %cst_49 [1] : vector<1x32x256xf32> to vector<1x256xf32>
    %cst_50 = arith.constant dense<0xFF800000> : vector<1x256xf32>
    %45 = vector.multi_reduction <maximumf>, %43, %cst_50 [1] : vector<1x32x256xf32> to vector<1x256xf32>
    %cst_51 = arith.constant 3.125000e-02 : f32
    %46 = vector.broadcast %cst_51 : f32 to vector<1x256xf32>
    %47 = arith.mulf %44, %46 : vector<1x256xf32>
    %c0_52 = arith.constant 0 : index
    %c0_53 = arith.constant 0 : index
    %c0_54 = arith.constant 0 : index
    %48 = vector.load %arg10[%c0_52, %c0_53, %c0_54] : memref<2x1x256xf32, #tpu.memory_space<vmem>>, vector<1x1x256xf32>
    %49 = vector.shape_cast %48 : vector<1x1x256xf32> to vector<1x256xf32>
    %50 = vector.shape_cast %47 : vector<1x256xf32> to vector<1x1x256xf32>
    tpu.vector_store %arg10[%c0_52, %c0_53, %c0_54], %50 {strides = array<i32>} : memref<2x1x256xf32, #tpu.memory_space<vmem>>, vector<1x1x256xf32>,
    %c1 = arith.constant 1 : index
    %c0_55 = arith.constant 0 : index
    %c0_56 = arith.constant 0 : index
    %51 = vector.load %arg10[%c1, %c0_55, %c0_56] : memref<2x1x256xf32, #tpu.memory_space<vmem>>, vector<1x1x256xf32>
    %52 = vector.shape_cast %51 : vector<1x1x256xf32> to vector<1x256xf32>
    %53 = vector.shape_cast %45 : vector<1x256xf32> to vector<1x1x256xf32>
    tpu.vector_store %arg10[%c1, %c0_55, %c0_56], %53 {strides = array<i32>} : memref<2x1x256xf32, #tpu.memory_space<vmem>>, vector<1x1x256xf32>,
    %c0_57 = arith.constant 0 : index
    %c0_58 = arith.constant 0 : index
    %c0_59 = arith.constant 0 : index
    %54 = vector.load %arg10[%c0_57, %c0_58, %c0_59] : memref<2x1x256xf32, #tpu.memory_space<vmem>>, vector<1x1x16xf32>
    %55 = vector.shape_cast %54 : vector<1x1x16xf32> to vector<1x16xf32>
    %c0_60 = arith.constant 0 : index
    %c0_61 = arith.constant 0 : index
    %c3 = arith.constant 3 : index
    %c3_62 = arith.constant 3 : index
    %56 = vector.load %arg11[%c0_60, %c0_61, %c3, %c3_62] : memref<2x1x22x22xf32, #tpu.memory_space<vmem>>, vector<1x1x1x16xf32>
    %57 = vector.shape_cast %56 : vector<1x1x1x16xf32> to vector<1x16xf32>
    %58 = vector.shape_cast %55 : vector<1x16xf32> to vector<1x1x1x16xf32>
    tpu.vector_store %arg11[%c0_60, %c0_61, %c3, %c3_62], %58 {strides = array<i32>} : memref<2x1x22x22xf32, #tpu.memory_space<vmem>>, vector<1x1x1x16xf32>,
    %c1_63 = arith.constant 1 : index
    %c0_64 = arith.constant 0 : index
    %c0_65 = arith.constant 0 : index
    %59 = vector.load %arg10[%c1_63, %c0_64, %c0_65] : memref<2x1x256xf32, #tpu.memory_space<vmem>>, vector<1x1x16xf32>
    %60 = vector.shape_cast %59 : vector<1x1x16xf32> to vector<1x16xf32>
    %c1_66 = arith.constant 1 : index
    %c0_67 = arith.constant 0 : index
    %c3_68 = arith.constant 3 : index
    %c3_69 = arith.constant 3 : index
    %61 = vector.load %arg11[%c1_66, %c0_67, %c3_68, %c3_69] : memref<2x1x22x22xf32, #tpu.memory_space<vmem>>, vector<1x1x1x16xf32>
    %62 = vector.shape_cast %61 : vector<1x1x1x16xf32> to vector<1x16xf32>
    %63 = vector.shape_cast %60 : vector<1x16xf32> to vector<1x1x1x16xf32>
    tpu.vector_store %arg11[%c1_66, %c0_67, %c3_68, %c3_69], %63 {strides = array<i32>} : memref<2x1x22x22xf32, #tpu.memory_space<vmem>>, vector<1x1x1x16xf32>,
    %c0_70 = arith.constant 0 : index
    %c0_71 = arith.constant 0 : index
    %c16 = arith.constant 16 : index
    %64 = vector.load %arg10[%c0_70, %c0_71, %c16] : memref<2x1x256xf32, #tpu.memory_space<vmem>>, vector<1x1x16xf32>
    %65 = vector.shape_cast %64 : vector<1x1x16xf32> to vector<1x16xf32>
    %c0_72 = arith.constant 0 : index
    %c0_73 = arith.constant 0 : index
    %c4 = arith.constant 4 : index
    %c3_74 = arith.constant 3 : index
    %66 = vector.load %arg11[%c0_72, %c0_73, %c4, %c3_74] : memref<2x1x22x22xf32, #tpu.memory_space<vmem>>, vector<1x1x1x16xf32>
    %67 = vector.shape_cast %66 : vector<1x1x1x16xf32> to vector<1x16xf32>
    %68 = vector.shape_cast %65 : vector<1x16xf32> to vector<1x1x1x16xf32>
    tpu.vector_store %arg11[%c0_72, %c0_73, %c4, %c3_74], %68 {strides = array<i32>} : memref<2x1x22x22xf32, #tpu.memory_space<vmem>>, vector<1x1x1x16xf32>,
    %c1_75 = arith.constant 1 : index
    %c0_76 = arith.constant 0 : index
    %c16_77 = arith.constant 16 : index
    %69 = vector.load %arg10[%c1_75, %c0_76, %c16_77] : memref<2x1x256xf32, #tpu.memory_space<vmem>>, vector<1x1x16xf32>
    %70 = vector.shape_cast %69 : vector<1x1x16xf32> to vector<1x16xf32>
    %c1_78 = arith.constant 1 : index
    %c0_79 = arith.constant 0 : index
    %c4_80 = arith.constant 4 : index
    %c3_81 = arith.constant 3 : index
    %71 = vector.load %arg11[%c1_78, %c0_79, %c4_80, %c3_81] : memref<2x1x22x22xf32, #tpu.memory_space<vmem>>, vector<1x1x1x16xf32>
    %72 = vector.shape_cast %71 : vector<1x1x1x16xf32> to vector<1x16xf32>
    %73 = vector.shape_cast %70 : vector<1x16xf32> to vector<1x1x1x16xf32>
    tpu.vector_store %arg11[%c1_78, %c0_79, %c4_80, %c3_81], %73 {strides = array<i32>} : memref<2x1x22x22xf32, #tpu.memory_space<vmem>>, vector<1x1x1x16xf32>,
    %c0_82 = arith.constant 0 : index
    %c0_83 = arith.constant 0 : index
    %c32 = arith.constant 32 : index
    %74 = vector.load %arg10[%c0_82, %c0_83, %c32] : memref<2x1x256xf32, #tpu.memory_space<vmem>>, vector<1x1x16xf32>
    %75 = vector.shape_cast %74 : vector<1x1x16xf32> to vector<1x16xf32>
    %c0_84 = arith.constant 0 : index
    %c0_85 = arith.constant 0 : index
    %c5 = arith.constant 5 : index
    %c3_86 = arith.constant 3 : index
    %76 = vector.load %arg11[%c0_84, %c0_85, %c5, %c3_86] : memref<2x1x22x22xf32, #tpu.memory_space<vmem>>, vector<1x1x1x16xf32>
    %77 = vector.shape_cast %76 : vector<1x1x1x16xf32> to vector<1x16xf32>
    %78 = vector.shape_cast %75 : vector<1x16xf32> to vector<1x1x1x16xf32>
    tpu.vector_store %arg11[%c0_84, %c0_85, %c5, %c3_86], %78 {strides = array<i32>} : memref<2x1x22x22xf32, #tpu.memory_space<vmem>>, vector<1x1x1x16xf32>,
    %c1_87 = arith.constant 1 : index
    %c0_88 = arith.constant 0 : index
    %c32_89 = arith.constant 32 : index
    %79 = vector.load %arg10[%c1_87, %c0_88, %c32_89] : memref<2x1x256xf32, #tpu.memory_space<vmem>>, vector<1x1x16xf32>
    %80 = vector.shape_cast %79 : vector<1x1x16xf32> to vector<1x16xf32>
    %c1_90 = arith.constant 1 : index
    %c0_91 = arith.constant 0 : index
    %c5_92 = arith.constant 5 : index
    %c3_93 = arith.constant 3 : index
    %81 = vector.load %arg11[%c1_90, %c0_91, %c5_92, %c3_93] : memref<2x1x22x22xf32, #tpu.memory_space<vmem>>, vector<1x1x1x16xf32>
    %82 = vector.shape_cast %81 : vector<1x1x1x16xf32> to vector<1x16xf32>
    %83 = vector.shape_cast %80 : vector<1x16xf32> to vector<1x1x1x16xf32>
    tpu.vector_store %arg11[%c1_90, %c0_91, %c5_92, %c3_93], %83 {strides = array<i32>} : memref<2x1x22x22xf32, #tpu.memory_space<vmem>>, vector<1x1x1x16xf32>,
    %c0_94 = arith.constant 0 : index
    %c0_95 = arith.constant 0 : index
    %c48 = arith.constant 48 : index
    %84 = vector.load %arg10[%c0_94, %c0_95, %c48] : memref<2x1x256xf32, #tpu.memory_space<vmem>>, vector<1x1x16xf32>
    %85 = vector.shape_cast %84 : vector<1x1x16xf32> to vector<1x16xf32>
    %c0_96 = arith.constant 0 : index
    %c0_97 = arith.constant 0 : index
    %c6 = arith.constant 6 : index
    %c3_98 = arith.constant 3 : index
    %86 = vector.load %arg11[%c0_96, %c0_97, %c6, %c3_98] : memref<2x1x22x22xf32, #tpu.memory_space<vmem>>, vector<1x1x1x16xf32>
    %87 = vector.shape_cast %86 : vector<1x1x1x16xf32> to vector<1x16xf32>
    %88 = vector.shape_cast %85 : vector<1x16xf32> to vector<1x1x1x16xf32>
    tpu.vector_store %arg11[%c0_96, %c0_97, %c6, %c3_98], %88 {strides = array<i32>} : memref<2x1x22x22xf32, #tpu.memory_space<vmem>>, vector<1x1x1x16xf32>,
    %c1_99 = arith.constant 1 : index
    %c0_100 = arith.constant 0 : index
    %c48_101 = arith.constant 48 : index
    %89 = vector.load %arg10[%c1_99, %c0_100, %c48_101] : memref<2x1x256xf32, #tpu.memory_space<vmem>>, vector<1x1x16xf32>
    %90 = vector.shape_cast %89 : vector<1x1x16xf32> to vector<1x16xf32>
    %c1_102 = arith.constant 1 : index
    %c0_103 = arith.constant 0 : index
    %c6_104 = arith.constant 6 : index
    %c3_105 = arith.constant 3 : index
    %91 = vector.load %arg11[%c1_102, %c0_103, %c6_104, %c3_105] : memref<2x1x22x22xf32, #tpu.memory_space<vmem>>, vector<1x1x1x16xf32>
    %92 = vector.shape_cast %91 : vector<1x1x1x16xf32> to vector<1x16xf32>
    %93 = vector.shape_cast %90 : vector<1x16xf32> to vector<1x1x1x16xf32>
    tpu.vector_store %arg11[%c1_102, %c0_103, %c6_104, %c3_105], %93 {strides = array<i32>} : memref<2x1x22x22xf32, #tpu.memory_space<vmem>>, vector<1x1x1x16xf32>,
    %c0_106 = arith.constant 0 : index
    %c0_107 = arith.constant 0 : index
    %c64 = arith.constant 64 : index
    %94 = vector.load %arg10[%c0_106, %c0_107, %c64] : memref<2x1x256xf32, #tpu.memory_space<vmem>>, vector<1x1x16xf32>
    %95 = vector.shape_cast %94 : vector<1x1x16xf32> to vector<1x16xf32>
    %c0_108 = arith.constant 0 : index
    %c0_109 = arith.constant 0 : index
    %c7 = arith.constant 7 : index
    %c3_110 = arith.constant 3 : index
    %96 = vector.load %arg11[%c0_108, %c0_109, %c7, %c3_110] : memref<2x1x22x22xf32, #tpu.memory_space<vmem>>, vector<1x1x1x16xf32>
    %97 = vector.shape_cast %96 : vector<1x1x1x16xf32> to vector<1x16xf32>
    %98 = vector.shape_cast %95 : vector<1x16xf32> to vector<1x1x1x16xf32>
    tpu.vector_store %arg11[%c0_108, %c0_109, %c7, %c3_110], %98 {strides = array<i32>} : memref<2x1x22x22xf32, #tpu.memory_space<vmem>>, vector<1x1x1x16xf32>,
    %c1_111 = arith.constant 1 : index
    %c0_112 = arith.constant 0 : index
    %c64_113 = arith.constant 64 : index
    %99 = vector.load %arg10[%c1_111, %c0_112, %c64_113] : memref<2x1x256xf32, #tpu.memory_space<vmem>>, vector<1x1x16xf32>
    %100 = vector.shape_cast %99 : vector<1x1x16xf32> to vector<1x16xf32>
    %c1_114 = arith.constant 1 : index
    %c0_115 = arith.constant 0 : index
    %c7_116 = arith.constant 7 : index
    %c3_117 = arith.constant 3 : index
    %101 = vector.load %arg11[%c1_114, %c0_115, %c7_116, %c3_117] : memref<2x1x22x22xf32, #tpu.memory_space<vmem>>, vector<1x1x1x16xf32>
    %102 = vector.shape_cast %101 : vector<1x1x1x16xf32> to vector<1x16xf32>
    %103 = vector.shape_cast %100 : vector<1x16xf32> to vector<1x1x1x16xf32>
    tpu.vector_store %arg11[%c1_114, %c0_115, %c7_116, %c3_117], %103 {strides = array<i32>} : memref<2x1x22x22xf32, #tpu.memory_space<vmem>>, vector<1x1x1x16xf32>,
    %c0_118 = arith.constant 0 : index
    %c0_119 = arith.constant 0 : index
    %c80 = arith.constant 80 : index
    %104 = vector.load %arg10[%c0_118, %c0_119, %c80] : memref<2x1x256xf32, #tpu.memory_space<vmem>>, vector<1x1x16xf32>
    %105 = vector.shape_cast %104 : vector<1x1x16xf32> to vector<1x16xf32>
    %c0_120 = arith.constant 0 : index
    %c0_121 = arith.constant 0 : index
    %c8 = arith.constant 8 : index
    %c3_122 = arith.constant 3 : index
    %106 = vector.load %arg11[%c0_120, %c0_121, %c8, %c3_122] : memref<2x1x22x22xf32, #tpu.memory_space<vmem>>, vector<1x1x1x16xf32>
    %107 = vector.shape_cast %106 : vector<1x1x1x16xf32> to vector<1x16xf32>
    %108 = vector.shape_cast %105 : vector<1x16xf32> to vector<1x1x1x16xf32>
    tpu.vector_store %arg11[%c0_120, %c0_121, %c8, %c3_122], %108 {strides = array<i32>} : memref<2x1x22x22xf32, #tpu.memory_space<vmem>>, vector<1x1x1x16xf32>,
    %c1_123 = arith.constant 1 : index
    %c0_124 = arith.constant 0 : index
    %c80_125 = arith.constant 80 : index
    %109 = vector.load %arg10[%c1_123, %c0_124, %c80_125] : memref<2x1x256xf32, #tpu.memory_space<vmem>>, vector<1x1x16xf32>
    %110 = vector.shape_cast %109 : vector<1x1x16xf32> to vector<1x16xf32>
    %c1_126 = arith.constant 1 : index
    %c0_127 = arith.constant 0 : index
    %c8_128 = arith.constant 8 : index
    %c3_129 = arith.constant 3 : index
    %111 = vector.load %arg11[%c1_126, %c0_127, %c8_128, %c3_129] : memref<2x1x22x22xf32, #tpu.memory_space<vmem>>, vector<1x1x1x16xf32>
    %112 = vector.shape_cast %111 : vector<1x1x1x16xf32> to vector<1x16xf32>
    %113 = vector.shape_cast %110 : vector<1x16xf32> to vector<1x1x1x16xf32>
    tpu.vector_store %arg11[%c1_126, %c0_127, %c8_128, %c3_129], %113 {strides = array<i32>} : memref<2x1x22x22xf32, #tpu.memory_space<vmem>>, vector<1x1x1x16xf32>,
    %c0_130 = arith.constant 0 : index
    %c0_131 = arith.constant 0 : index
    %c96 = arith.constant 96 : index
    %114 = vector.load %arg10[%c0_130, %c0_131, %c96] : memref<2x1x256xf32, #tpu.memory_space<vmem>>, vector<1x1x16xf32>
    %115 = vector.shape_cast %114 : vector<1x1x16xf32> to vector<1x16xf32>
    %c0_132 = arith.constant 0 : index
    %c0_133 = arith.constant 0 : index
    %c9 = arith.constant 9 : index
    %c3_134 = arith.constant 3 : index
    %116 = vector.load %arg11[%c0_132, %c0_133, %c9, %c3_134] : memref<2x1x22x22xf32, #tpu.memory_space<vmem>>, vector<1x1x1x16xf32>
    %117 = vector.shape_cast %116 : vector<1x1x1x16xf32> to vector<1x16xf32>
    %118 = vector.shape_cast %115 : vector<1x16xf32> to vector<1x1x1x16xf32>
    tpu.vector_store %arg11[%c0_132, %c0_133, %c9, %c3_134], %118 {strides = array<i32>} : memref<2x1x22x22xf32, #tpu.memory_space<vmem>>, vector<1x1x1x16xf32>,
    %c1_135 = arith.constant 1 : index
    %c0_136 = arith.constant 0 : index
    %c96_137 = arith.constant 96 : index
    %119 = vector.load %arg10[%c1_135, %c0_136, %c96_137] : memref<2x1x256xf32, #tpu.memory_space<vmem>>, vector<1x1x16xf32>
    %120 = vector.shape_cast %119 : vector<1x1x16xf32> to vector<1x16xf32>
    %c1_138 = arith.constant 1 : index
    %c0_139 = arith.constant 0 : index
    %c9_140 = arith.constant 9 : index
    %c3_141 = arith.constant 3 : index
    %121 = vector.load %arg11[%c1_138, %c0_139, %c9_140, %c3_141] : memref<2x1x22x22xf32, #tpu.memory_space<vmem>>, vector<1x1x1x16xf32>
    %122 = vector.shape_cast %121 : vector<1x1x1x16xf32> to vector<1x16xf32>
    %123 = vector.shape_cast %120 : vector<1x16xf32> to vector<1x1x1x16xf32>
    tpu.vector_store %arg11[%c1_138, %c0_139, %c9_140, %c3_141], %123 {strides = array<i32>} : memref<2x1x22x22xf32, #tpu.memory_space<vmem>>, vector<1x1x1x16xf32>,
    %c0_142 = arith.constant 0 : index
    %c0_143 = arith.constant 0 : index
    %c112 = arith.constant 112 : index
    %124 = vector.load %arg10[%c0_142, %c0_143, %c112] : memref<2x1x256xf32, #tpu.memory_space<vmem>>, vector<1x1x16xf32>
    %125 = vector.shape_cast %124 : vector<1x1x16xf32> to vector<1x16xf32>
    %c0_144 = arith.constant 0 : index
    %c0_145 = arith.constant 0 : index
    %c10 = arith.constant 10 : index
    %c3_146 = arith.constant 3 : index
    %126 = vector.load %arg11[%c0_144, %c0_145, %c10, %c3_146] : memref<2x1x22x22xf32, #tpu.memory_space<vmem>>, vector<1x1x1x16xf32>
    %127 = vector.shape_cast %126 : vector<1x1x1x16xf32> to vector<1x16xf32>
    %128 = vector.shape_cast %125 : vector<1x16xf32> to vector<1x1x1x16xf32>
    tpu.vector_store %arg11[%c0_144, %c0_145, %c10, %c3_146], %128 {strides = array<i32>} : memref<2x1x22x22xf32, #tpu.memory_space<vmem>>, vector<1x1x1x16xf32>,
    %c1_147 = arith.constant 1 : index
    %c0_148 = arith.constant 0 : index
    %c112_149 = arith.constant 112 : index
    %129 = vector.load %arg10[%c1_147, %c0_148, %c112_149] : memref<2x1x256xf32, #tpu.memory_space<vmem>>, vector<1x1x16xf32>
    %130 = vector.shape_cast %129 : vector<1x1x16xf32> to vector<1x16xf32>
    %c1_150 = arith.constant 1 : index
    %c0_151 = arith.constant 0 : index
    %c10_152 = arith.constant 10 : index
    %c3_153 = arith.constant 3 : index
    %131 = vector.load %arg11[%c1_150, %c0_151, %c10_152, %c3_153] : memref<2x1x22x22xf32, #tpu.memory_space<vmem>>, vector<1x1x1x16xf32>
    %132 = vector.shape_cast %131 : vector<1x1x1x16xf32> to vector<1x16xf32>
    %133 = vector.shape_cast %130 : vector<1x16xf32> to vector<1x1x1x16xf32>
    tpu.vector_store %arg11[%c1_150, %c0_151, %c10_152, %c3_153], %133 {strides = array<i32>} : memref<2x1x22x22xf32, #tpu.memory_space<vmem>>, vector<1x1x1x16xf32>,
    %c0_154 = arith.constant 0 : index
    %c0_155 = arith.constant 0 : index
    %c128 = arith.constant 128 : index
    %134 = vector.load %arg10[%c0_154, %c0_155, %c128] : memref<2x1x256xf32, #tpu.memory_space<vmem>>, vector<1x1x16xf32>
    %135 = vector.shape_cast %134 : vector<1x1x16xf32> to vector<1x16xf32>
    %c0_156 = arith.constant 0 : index
    %c0_157 = arith.constant 0 : index
    %c11 = arith.constant 11 : index
    %c3_158 = arith.constant 3 : index
    %136 = vector.load %arg11[%c0_156, %c0_157, %c11, %c3_158] : memref<2x1x22x22xf32, #tpu.memory_space<vmem>>, vector<1x1x1x16xf32>
    %137 = vector.shape_cast %136 : vector<1x1x1x16xf32> to vector<1x16xf32>
    %138 = vector.shape_cast %135 : vector<1x16xf32> to vector<1x1x1x16xf32>
    tpu.vector_store %arg11[%c0_156, %c0_157, %c11, %c3_158], %138 {strides = array<i32>} : memref<2x1x22x22xf32, #tpu.memory_space<vmem>>, vector<1x1x1x16xf32>,
    %c1_159 = arith.constant 1 : index
    %c0_160 = arith.constant 0 : index
    %c128_161 = arith.constant 128 : index
    %139 = vector.load %arg10[%c1_159, %c0_160, %c128_161] : memref<2x1x256xf32, #tpu.memory_space<vmem>>, vector<1x1x16xf32>
    %140 = vector.shape_cast %139 : vector<1x1x16xf32> to vector<1x16xf32>
    %c1_162 = arith.constant 1 : index
    %c0_163 = arith.constant 0 : index
    %c11_164 = arith.constant 11 : index
    %c3_165 = arith.constant 3 : index
    %141 = vector.load %arg11[%c1_162, %c0_163, %c11_164, %c3_165] : memref<2x1x22x22xf32, #tpu.memory_space<vmem>>, vector<1x1x1x16xf32>
    %142 = vector.shape_cast %141 : vector<1x1x1x16xf32> to vector<1x16xf32>
    %143 = vector.shape_cast %140 : vector<1x16xf32> to vector<1x1x1x16xf32>
    tpu.vector_store %arg11[%c1_162, %c0_163, %c11_164, %c3_165], %143 {strides = array<i32>} : memref<2x1x22x22xf32, #tpu.memory_space<vmem>>, vector<1x1x1x16xf32>,
    %c0_166 = arith.constant 0 : index
    %c0_167 = arith.constant 0 : index
    %c144 = arith.constant 144 : index
    %144 = vector.load %arg10[%c0_166, %c0_167, %c144] : memref<2x1x256xf32, #tpu.memory_space<vmem>>, vector<1x1x16xf32>
    %145 = vector.shape_cast %144 : vector<1x1x16xf32> to vector<1x16xf32>
    %c0_168 = arith.constant 0 : index
    %c0_169 = arith.constant 0 : index
    %c12 = arith.constant 12 : index
    %c3_170 = arith.constant 3 : index
    %146 = vector.load %arg11[%c0_168, %c0_169, %c12, %c3_170] : memref<2x1x22x22xf32, #tpu.memory_space<vmem>>, vector<1x1x1x16xf32>
    %147 = vector.shape_cast %146 : vector<1x1x1x16xf32> to vector<1x16xf32>
    %148 = vector.shape_cast %145 : vector<1x16xf32> to vector<1x1x1x16xf32>
    tpu.vector_store %arg11[%c0_168, %c0_169, %c12, %c3_170], %148 {strides = array<i32>} : memref<2x1x22x22xf32, #tpu.memory_space<vmem>>, vector<1x1x1x16xf32>,
    %c1_171 = arith.constant 1 : index
    %c0_172 = arith.constant 0 : index
    %c144_173 = arith.constant 144 : index
    %149 = vector.load %arg10[%c1_171, %c0_172, %c144_173] : memref<2x1x256xf32, #tpu.memory_space<vmem>>, vector<1x1x16xf32>
    %150 = vector.shape_cast %149 : vector<1x1x16xf32> to vector<1x16xf32>
    %c1_174 = arith.constant 1 : index
    %c0_175 = arith.constant 0 : index
    %c12_176 = arith.constant 12 : index
    %c3_177 = arith.constant 3 : index
    %151 = vector.load %arg11[%c1_174, %c0_175, %c12_176, %c3_177] : memref<2x1x22x22xf32, #tpu.memory_space<vmem>>, vector<1x1x1x16xf32>
    %152 = vector.shape_cast %151 : vector<1x1x1x16xf32> to vector<1x16xf32>
    %153 = vector.shape_cast %150 : vector<1x16xf32> to vector<1x1x1x16xf32>
    tpu.vector_store %arg11[%c1_174, %c0_175, %c12_176, %c3_177], %153 {strides = array<i32>} : memref<2x1x22x22xf32, #tpu.memory_space<vmem>>, vector<1x1x1x16xf32>,
    %c0_178 = arith.constant 0 : index
    %c0_179 = arith.constant 0 : index
    %c160 = arith.constant 160 : index
    %154 = vector.load %arg10[%c0_178, %c0_179, %c160] : memref<2x1x256xf32, #tpu.memory_space<vmem>>, vector<1x1x16xf32>
    %155 = vector.shape_cast %154 : vector<1x1x16xf32> to vector<1x16xf32>
    %c0_180 = arith.constant 0 : index
    %c0_181 = arith.constant 0 : index
    %c13 = arith.constant 13 : index
    %c3_182 = arith.constant 3 : index
    %156 = vector.load %arg11[%c0_180, %c0_181, %c13, %c3_182] : memref<2x1x22x22xf32, #tpu.memory_space<vmem>>, vector<1x1x1x16xf32>
    %157 = vector.shape_cast %156 : vector<1x1x1x16xf32> to vector<1x16xf32>
    %158 = vector.shape_cast %155 : vector<1x16xf32> to vector<1x1x1x16xf32>
    tpu.vector_store %arg11[%c0_180, %c0_181, %c13, %c3_182], %158 {strides = array<i32>} : memref<2x1x22x22xf32, #tpu.memory_space<vmem>>, vector<1x1x1x16xf32>,
    %c1_183 = arith.constant 1 : index
    %c0_184 = arith.constant 0 : index
    %c160_185 = arith.constant 160 : index
    %159 = vector.load %arg10[%c1_183, %c0_184, %c160_185] : memref<2x1x256xf32, #tpu.memory_space<vmem>>, vector<1x1x16xf32>
    %160 = vector.shape_cast %159 : vector<1x1x16xf32> to vector<1x16xf32>
    %c1_186 = arith.constant 1 : index
    %c0_187 = arith.constant 0 : index
    %c13_188 = arith.constant 13 : index
    %c3_189 = arith.constant 3 : index
    %161 = vector.load %arg11[%c1_186, %c0_187, %c13_188, %c3_189] : memref<2x1x22x22xf32, #tpu.memory_space<vmem>>, vector<1x1x1x16xf32>
    %162 = vector.shape_cast %161 : vector<1x1x1x16xf32> to vector<1x16xf32>
    %163 = vector.shape_cast %160 : vector<1x16xf32> to vector<1x1x1x16xf32>
    tpu.vector_store %arg11[%c1_186, %c0_187, %c13_188, %c3_189], %163 {strides = array<i32>} : memref<2x1x22x22xf32, #tpu.memory_space<vmem>>, vector<1x1x1x16xf32>,
    %c0_190 = arith.constant 0 : index
    %c0_191 = arith.constant 0 : index
    %c176 = arith.constant 176 : index
    %164 = vector.load %arg10[%c0_190, %c0_191, %c176] : memref<2x1x256xf32, #tpu.memory_space<vmem>>, vector<1x1x16xf32>
    %165 = vector.shape_cast %164 : vector<1x1x16xf32> to vector<1x16xf32>
    %c0_192 = arith.constant 0 : index
    %c0_193 = arith.constant 0 : index
    %c14 = arith.constant 14 : index
    %c3_194 = arith.constant 3 : index
    %166 = vector.load %arg11[%c0_192, %c0_193, %c14, %c3_194] : memref<2x1x22x22xf32, #tpu.memory_space<vmem>>, vector<1x1x1x16xf32>
    %167 = vector.shape_cast %166 : vector<1x1x1x16xf32> to vector<1x16xf32>
    %168 = vector.shape_cast %165 : vector<1x16xf32> to vector<1x1x1x16xf32>
    tpu.vector_store %arg11[%c0_192, %c0_193, %c14, %c3_194], %168 {strides = array<i32>} : memref<2x1x22x22xf32, #tpu.memory_space<vmem>>, vector<1x1x1x16xf32>,
    %c1_195 = arith.constant 1 : index
    %c0_196 = arith.constant 0 : index
    %c176_197 = arith.constant 176 : index
    %169 = vector.load %arg10[%c1_195, %c0_196, %c176_197] : memref<2x1x256xf32, #tpu.memory_space<vmem>>, vector<1x1x16xf32>
    %170 = vector.shape_cast %169 : vector<1x1x16xf32> to vector<1x16xf32>
    %c1_198 = arith.constant 1 : index
    %c0_199 = arith.constant 0 : index
    %c14_200 = arith.constant 14 : index
    %c3_201 = arith.constant 3 : index
    %171 = vector.load %arg11[%c1_198, %c0_199, %c14_200, %c3_201] : memref<2x1x22x22xf32, #tpu.memory_space<vmem>>, vector<1x1x1x16xf32>
    %172 = vector.shape_cast %171 : vector<1x1x1x16xf32> to vector<1x16xf32>
    %173 = vector.shape_cast %170 : vector<1x16xf32> to vector<1x1x1x16xf32>
    tpu.vector_store %arg11[%c1_198, %c0_199, %c14_200, %c3_201], %173 {strides = array<i32>} : memref<2x1x22x22xf32, #tpu.memory_space<vmem>>, vector<1x1x1x16xf32>,
    %c0_202 = arith.constant 0 : index
    %c0_203 = arith.constant 0 : index
    %c192 = arith.constant 192 : index
    %174 = vector.load %arg10[%c0_202, %c0_203, %c192] : memref<2x1x256xf32, #tpu.memory_space<vmem>>, vector<1x1x16xf32>
    %175 = vector.shape_cast %174 : vector<1x1x16xf32> to vector<1x16xf32>
    %c0_204 = arith.constant 0 : index
    %c0_205 = arith.constant 0 : index
    %c15 = arith.constant 15 : index
    %c3_206 = arith.constant 3 : index
    %176 = vector.load %arg11[%c0_204, %c0_205, %c15, %c3_206] : memref<2x1x22x22xf32, #tpu.memory_space<vmem>>, vector<1x1x1x16xf32>
    %177 = vector.shape_cast %176 : vector<1x1x1x16xf32> to vector<1x16xf32>
    %178 = vector.shape_cast %175 : vector<1x16xf32> to vector<1x1x1x16xf32>
    tpu.vector_store %arg11[%c0_204, %c0_205, %c15, %c3_206], %178 {strides = array<i32>} : memref<2x1x22x22xf32, #tpu.memory_space<vmem>>, vector<1x1x1x16xf32>,
    %c1_207 = arith.constant 1 : index
    %c0_208 = arith.constant 0 : index
    %c192_209 = arith.constant 192 : index
    %179 = vector.load %arg10[%c1_207, %c0_208, %c192_209] : memref<2x1x256xf32, #tpu.memory_space<vmem>>, vector<1x1x16xf32>
    %180 = vector.shape_cast %179 : vector<1x1x16xf32> to vector<1x16xf32>
    %c1_210 = arith.constant 1 : index
    %c0_211 = arith.constant 0 : index
    %c15_212 = arith.constant 15 : index
    %c3_213 = arith.constant 3 : index
    %181 = vector.load %arg11[%c1_210, %c0_211, %c15_212, %c3_213] : memref<2x1x22x22xf32, #tpu.memory_space<vmem>>, vector<1x1x1x16xf32>
    %182 = vector.shape_cast %181 : vector<1x1x1x16xf32> to vector<1x16xf32>
    %183 = vector.shape_cast %180 : vector<1x16xf32> to vector<1x1x1x16xf32>
    tpu.vector_store %arg11[%c1_210, %c0_211, %c15_212, %c3_213], %183 {strides = array<i32>} : memref<2x1x22x22xf32, #tpu.memory_space<vmem>>, vector<1x1x1x16xf32>,
    %c0_214 = arith.constant 0 : index
    %c0_215 = arith.constant 0 : index
    %c208 = arith.constant 208 : index
    %184 = vector.load %arg10[%c0_214, %c0_215, %c208] : memref<2x1x256xf32, #tpu.memory_space<vmem>>, vector<1x1x16xf32>
    %185 = vector.shape_cast %184 : vector<1x1x16xf32> to vector<1x16xf32>
    %c0_216 = arith.constant 0 : index
    %c0_217 = arith.constant 0 : index
    %c16_218 = arith.constant 16 : index
    %c3_219 = arith.constant 3 : index
    %186 = vector.load %arg11[%c0_216, %c0_217, %c16_218, %c3_219] : memref<2x1x22x22xf32, #tpu.memory_space<vmem>>, vector<1x1x1x16xf32>
    %187 = vector.shape_cast %186 : vector<1x1x1x16xf32> to vector<1x16xf32>
    %188 = vector.shape_cast %185 : vector<1x16xf32> to vector<1x1x1x16xf32>
    tpu.vector_store %arg11[%c0_216, %c0_217, %c16_218, %c3_219], %188 {strides = array<i32>} : memref<2x1x22x22xf32, #tpu.memory_space<vmem>>, vector<1x1x1x16xf32>,
    %c1_220 = arith.constant 1 : index
    %c0_221 = arith.constant 0 : index
    %c208_222 = arith.constant 208 : index
    %189 = vector.load %arg10[%c1_220, %c0_221, %c208_222] : memref<2x1x256xf32, #tpu.memory_space<vmem>>, vector<1x1x16xf32>
    %190 = vector.shape_cast %189 : vector<1x1x16xf32> to vector<1x16xf32>
    %c1_223 = arith.constant 1 : index
    %c0_224 = arith.constant 0 : index
    %c16_225 = arith.constant 16 : index
    %c3_226 = arith.constant 3 : index
    %191 = vector.load %arg11[%c1_223, %c0_224, %c16_225, %c3_226] : memref<2x1x22x22xf32, #tpu.memory_space<vmem>>, vector<1x1x1x16xf32>
    %192 = vector.shape_cast %191 : vector<1x1x1x16xf32> to vector<1x16xf32>
    %193 = vector.shape_cast %190 : vector<1x16xf32> to vector<1x1x1x16xf32>
    tpu.vector_store %arg11[%c1_223, %c0_224, %c16_225, %c3_226], %193 {strides = array<i32>} : memref<2x1x22x22xf32, #tpu.memory_space<vmem>>, vector<1x1x1x16xf32>,
    %c0_227 = arith.constant 0 : index
    %c0_228 = arith.constant 0 : index
    %c224 = arith.constant 224 : index
    %194 = vector.load %arg10[%c0_227, %c0_228, %c224] : memref<2x1x256xf32, #tpu.memory_space<vmem>>, vector<1x1x16xf32>
    %195 = vector.shape_cast %194 : vector<1x1x16xf32> to vector<1x16xf32>
    %c0_229 = arith.constant 0 : index
    %c0_230 = arith.constant 0 : index
    %c17 = arith.constant 17 : index
    %c3_231 = arith.constant 3 : index
    %196 = vector.load %arg11[%c0_229, %c0_230, %c17, %c3_231] : memref<2x1x22x22xf32, #tpu.memory_space<vmem>>, vector<1x1x1x16xf32>
    %197 = vector.shape_cast %196 : vector<1x1x1x16xf32> to vector<1x16xf32>
    %198 = vector.shape_cast %195 : vector<1x16xf32> to vector<1x1x1x16xf32>
    tpu.vector_store %arg11[%c0_229, %c0_230, %c17, %c3_231], %198 {strides = array<i32>} : memref<2x1x22x22xf32, #tpu.memory_space<vmem>>, vector<1x1x1x16xf32>,
    %c1_232 = arith.constant 1 : index
    %c0_233 = arith.constant 0 : index
    %c224_234 = arith.constant 224 : index
    %199 = vector.load %arg10[%c1_232, %c0_233, %c224_234] : memref<2x1x256xf32, #tpu.memory_space<vmem>>, vector<1x1x16xf32>
    %200 = vector.shape_cast %199 : vector<1x1x16xf32> to vector<1x16xf32>
    %c1_235 = arith.constant 1 : index
    %c0_236 = arith.constant 0 : index
    %c17_237 = arith.constant 17 : index
    %c3_238 = arith.constant 3 : index
    %201 = vector.load %arg11[%c1_235, %c0_236, %c17_237, %c3_238] : memref<2x1x22x22xf32, #tpu.memory_space<vmem>>, vector<1x1x1x16xf32>
    %202 = vector.shape_cast %201 : vector<1x1x1x16xf32> to vector<1x16xf32>
    %203 = vector.shape_cast %200 : vector<1x16xf32> to vector<1x1x1x16xf32>
    tpu.vector_store %arg11[%c1_235, %c0_236, %c17_237, %c3_238], %203 {strides = array<i32>} : memref<2x1x22x22xf32, #tpu.memory_space<vmem>>, vector<1x1x1x16xf32>,
    %c0_239 = arith.constant 0 : index
    %c0_240 = arith.constant 0 : index
    %c240 = arith.constant 240 : index
    %204 = vector.load %arg10[%c0_239, %c0_240, %c240] : memref<2x1x256xf32, #tpu.memory_space<vmem>>, vector<1x1x16xf32>
    %205 = vector.shape_cast %204 : vector<1x1x16xf32> to vector<1x16xf32>
    %c0_241 = arith.constant 0 : index
    %c0_242 = arith.constant 0 : index
    %c18 = arith.constant 18 : index
    %c3_243 = arith.constant 3 : index
    %206 = vector.load %arg11[%c0_241, %c0_242, %c18, %c3_243] : memref<2x1x22x22xf32, #tpu.memory_space<vmem>>, vector<1x1x1x16xf32>
    %207 = vector.shape_cast %206 : vector<1x1x1x16xf32> to vector<1x16xf32>
    %208 = vector.shape_cast %205 : vector<1x16xf32> to vector<1x1x1x16xf32>
    tpu.vector_store %arg11[%c0_241, %c0_242, %c18, %c3_243], %208 {strides = array<i32>} : memref<2x1x22x22xf32, #tpu.memory_space<vmem>>, vector<1x1x1x16xf32>,
    %c1_244 = arith.constant 1 : index
    %c0_245 = arith.constant 0 : index
    %c240_246 = arith.constant 240 : index
    %209 = vector.load %arg10[%c1_244, %c0_245, %c240_246] : memref<2x1x256xf32, #tpu.memory_space<vmem>>, vector<1x1x16xf32>
    %210 = vector.shape_cast %209 : vector<1x1x16xf32> to vector<1x16xf32>
    %c1_247 = arith.constant 1 : index
    %c0_248 = arith.constant 0 : index
    %c18_249 = arith.constant 18 : index
    %c3_250 = arith.constant 3 : index
    %211 = vector.load %arg11[%c1_247, %c0_248, %c18_249, %c3_250] : memref<2x1x22x22xf32, #tpu.memory_space<vmem>>, vector<1x1x1x16xf32>
    %212 = vector.shape_cast %211 : vector<1x1x1x16xf32> to vector<1x16xf32>
    %213 = vector.shape_cast %210 : vector<1x16xf32> to vector<1x1x1x16xf32>
    tpu.vector_store %arg11[%c1_247, %c0_248, %c18_249, %c3_250], %213 {strides = array<i32>} : memref<2x1x22x22xf32, #tpu.memory_space<vmem>>, vector<1x1x1x16xf32>,
    %c0_251 = arith.constant 0 : index
    %214 = memref.load %arg2[%c0_251] : memref<1xf32, #tpu.memory_space<smem>>
    %cst_252 = arith.constant 0.000000e+00 : f32
    %215 = vector.broadcast %cst_252 : f32 to vector<1x16x16xf32>
    %216 = vector.broadcast %214 : f32 to vector<1x16x16xf32>
    %217 = arith.addf %216, %215 : vector<1x16x16xf32>
    %c0_253 = arith.constant 0 : index
    %c0_254 = arith.constant 0 : index
    %c0_255 = arith.constant 0 : index
    %c0_256 = arith.constant 0 : index
    %218 = vector.load %arg11[%c0_253, %c0_254, %c0_255, %c0_256] : memref<2x1x22x22xf32, #tpu.memory_space<vmem>>, vector<2x1x16x22xf32>
    %219 = vector.extract_strided_slice %218 {offsets = [0, 0, 0, 0], sizes = [2, 1, 16, 16], strides = [1, 1, 1, 1]} : vector<2x1x16x22xf32> to vector<2x1x16x16xf32>
    %c0_257 = arith.constant 0 : index
    %220 = memref.load %arg1[%c0_257] : memref<98xf32, #tpu.memory_space<smem>>
    %c49 = arith.constant 49 : index
    %221 = memref.load %arg1[%c49] : memref<98xf32, #tpu.memory_space<smem>>
    %222 = vector.extract_strided_slice %219 {offsets = [0, 0, 0, 0], sizes = [1, 1, 16, 16], strides = [1, 1, 1, 1]} : vector<2x1x16x16xf32> to vector<1x1x16x16xf32>
    %223 = vector.shape_cast %222 : vector<1x1x16x16xf32> to vector<1x16x16xf32>
    %224 = vector.broadcast %220 : f32 to vector<1x16x16xf32>
    %225 = arith.mulf %224, %223 : vector<1x16x16xf32>
    %226 = arith.addf %217, %225 : vector<1x16x16xf32>
    %227 = vector.extract_strided_slice %219 {offsets = [1, 0, 0, 0], sizes = [1, 1, 16, 16], strides = [1, 1, 1, 1]} : vector<2x1x16x16xf32> to vector<1x1x16x16xf32>
    %228 = vector.shape_cast %227 : vector<1x1x16x16xf32> to vector<1x16x16xf32>
    %229 = vector.broadcast %221 : f32 to vector<1x16x16xf32>
    %230 = arith.mulf %229, %228 : vector<1x16x16xf32>
    %231 = arith.addf %226, %230 : vector<1x16x16xf32>
    %232 = vector.extract_strided_slice %218 {offsets = [0, 0, 0, 1], sizes = [2, 1, 16, 16], strides = [1, 1, 1, 1]} : vector<2x1x16x22xf32> to vector<2x1x16x16xf32>
    %c1_258 = arith.constant 1 : index
    %233 = memref.load %arg1[%c1_258] : memref<98xf32, #tpu.memory_space<smem>>
    %c50 = arith.constant 50 : index
    %234 = memref.load %arg1[%c50] : memref<98xf32, #tpu.memory_space<smem>>
    %235 = vector.extract_strided_slice %232 {offsets = [0, 0, 0, 0], sizes = [1, 1, 16, 16], strides = [1, 1, 1, 1]} : vector<2x1x16x16xf32> to vector<1x1x16x16xf32>
    %236 = vector.shape_cast %235 : vector<1x1x16x16xf32> to vector<1x16x16xf32>
    %237 = vector.broadcast %233 : f32 to vector<1x16x16xf32>
    %238 = arith.mulf %237, %236 : vector<1x16x16xf32>
    %239 = arith.addf %231, %238 : vector<1x16x16xf32>
    %240 = vector.extract_strided_slice %232 {offsets = [1, 0, 0, 0], sizes = [1, 1, 16, 16], strides = [1, 1, 1, 1]} : vector<2x1x16x16xf32> to vector<1x1x16x16xf32>
    %241 = vector.shape_cast %240 : vector<1x1x16x16xf32> to vector<1x16x16xf32>
    %242 = vector.broadcast %234 : f32 to vector<1x16x16xf32>
    %243 = arith.mulf %242, %241 : vector<1x16x16xf32>
    %244 = arith.addf %239, %243 : vector<1x16x16xf32>
    %245 = vector.extract_strided_slice %218 {offsets = [0, 0, 0, 2], sizes = [2, 1, 16, 16], strides = [1, 1, 1, 1]} : vector<2x1x16x22xf32> to vector<2x1x16x16xf32>
    %c2 = arith.constant 2 : index
    %246 = memref.load %arg1[%c2] : memref<98xf32, #tpu.memory_space<smem>>
    %c51 = arith.constant 51 : index
    %247 = memref.load %arg1[%c51] : memref<98xf32, #tpu.memory_space<smem>>
    %248 = vector.extract_strided_slice %245 {offsets = [0, 0, 0, 0], sizes = [1, 1, 16, 16], strides = [1, 1, 1, 1]} : vector<2x1x16x16xf32> to vector<1x1x16x16xf32>
    %249 = vector.shape_cast %248 : vector<1x1x16x16xf32> to vector<1x16x16xf32>
    %250 = vector.broadcast %246 : f32 to vector<1x16x16xf32>
    %251 = arith.mulf %250, %249 : vector<1x16x16xf32>
    %252 = arith.addf %244, %251 : vector<1x16x16xf32>
    %253 = vector.extract_strided_slice %245 {offsets = [1, 0, 0, 0], sizes = [1, 1, 16, 16], strides = [1, 1, 1, 1]} : vector<2x1x16x16xf32> to vector<1x1x16x16xf32>
    %254 = vector.shape_cast %253 : vector<1x1x16x16xf32> to vector<1x16x16xf32>
    %255 = vector.broadcast %247 : f32 to vector<1x16x16xf32>
    %256 = arith.mulf %255, %254 : vector<1x16x16xf32>
    %257 = arith.addf %252, %256 : vector<1x16x16xf32>
    %258 = vector.extract_strided_slice %218 {offsets = [0, 0, 0, 3], sizes = [2, 1, 16, 16], strides = [1, 1, 1, 1]} : vector<2x1x16x22xf32> to vector<2x1x16x16xf32>
    %c3_259 = arith.constant 3 : index
    %259 = memref.load %arg1[%c3_259] : memref<98xf32, #tpu.memory_space<smem>>
    %c52 = arith.constant 52 : index
    %260 = memref.load %arg1[%c52] : memref<98xf32, #tpu.memory_space<smem>>
    %261 = vector.extract_strided_slice %258 {offsets = [0, 0, 0, 0], sizes = [1, 1, 16, 16], strides = [1, 1, 1, 1]} : vector<2x1x16x16xf32> to vector<1x1x16x16xf32>
    %262 = vector.shape_cast %261 : vector<1x1x16x16xf32> to vector<1x16x16xf32>
    %263 = vector.broadcast %259 : f32 to vector<1x16x16xf32>
    %264 = arith.mulf %263, %262 : vector<1x16x16xf32>
    %265 = arith.addf %257, %264 : vector<1x16x16xf32>
    %266 = vector.extract_strided_slice %258 {offsets = [1, 0, 0, 0], sizes = [1, 1, 16, 16], strides = [1, 1, 1, 1]} : vector<2x1x16x16xf32> to vector<1x1x16x16xf32>
    %267 = vector.shape_cast %266 : vector<1x1x16x16xf32> to vector<1x16x16xf32>
    %268 = vector.broadcast %260 : f32 to vector<1x16x16xf32>
    %269 = arith.mulf %268, %267 : vector<1x16x16xf32>
    %270 = arith.addf %265, %269 : vector<1x16x16xf32>
    %271 = vector.extract_strided_slice %218 {offsets = [0, 0, 0, 4], sizes = [2, 1, 16, 16], strides = [1, 1, 1, 1]} : vector<2x1x16x22xf32> to vector<2x1x16x16xf32>
    %c4_260 = arith.constant 4 : index
    %272 = memref.load %arg1[%c4_260] : memref<98xf32, #tpu.memory_space<smem>>
    %c53 = arith.constant 53 : index
    %273 = memref.load %arg1[%c53] : memref<98xf32, #tpu.memory_space<smem>>
    %274 = vector.extract_strided_slice %271 {offsets = [0, 0, 0, 0], sizes = [1, 1, 16, 16], strides = [1, 1, 1, 1]} : vector<2x1x16x16xf32> to vector<1x1x16x16xf32>
    %275 = vector.shape_cast %274 : vector<1x1x16x16xf32> to vector<1x16x16xf32>
    %276 = vector.broadcast %272 : f32 to vector<1x16x16xf32>
    %277 = arith.mulf %276, %275 : vector<1x16x16xf32>
    %278 = arith.addf %270, %277 : vector<1x16x16xf32>
    %279 = vector.extract_strided_slice %271 {offsets = [1, 0, 0, 0], sizes = [1, 1, 16, 16], strides = [1, 1, 1, 1]} : vector<2x1x16x16xf32> to vector<1x1x16x16xf32>
    %280 = vector.shape_cast %279 : vector<1x1x16x16xf32> to vector<1x16x16xf32>
    %281 = vector.broadcast %273 : f32 to vector<1x16x16xf32>
    %282 = arith.mulf %281, %280 : vector<1x16x16xf32>
    %283 = arith.addf %278, %282 : vector<1x16x16xf32>
    %284 = vector.extract_strided_slice %218 {offsets = [0, 0, 0, 5], sizes = [2, 1, 16, 16], strides = [1, 1, 1, 1]} : vector<2x1x16x22xf32> to vector<2x1x16x16xf32>
    %c5_261 = arith.constant 5 : index
    %285 = memref.load %arg1[%c5_261] : memref<98xf32, #tpu.memory_space<smem>>
    %c54 = arith.constant 54 : index
    %286 = memref.load %arg1[%c54] : memref<98xf32, #tpu.memory_space<smem>>
    %287 = vector.extract_strided_slice %284 {offsets = [0, 0, 0, 0], sizes = [1, 1, 16, 16], strides = [1, 1, 1, 1]} : vector<2x1x16x16xf32> to vector<1x1x16x16xf32>
    %288 = vector.shape_cast %287 : vector<1x1x16x16xf32> to vector<1x16x16xf32>
    %289 = vector.broadcast %285 : f32 to vector<1x16x16xf32>
    %290 = arith.mulf %289, %288 : vector<1x16x16xf32>
    %291 = arith.addf %283, %290 : vector<1x16x16xf32>
    %292 = vector.extract_strided_slice %284 {offsets = [1, 0, 0, 0], sizes = [1, 1, 16, 16], strides = [1, 1, 1, 1]} : vector<2x1x16x16xf32> to vector<1x1x16x16xf32>
    %293 = vector.shape_cast %292 : vector<1x1x16x16xf32> to vector<1x16x16xf32>
    %294 = vector.broadcast %286 : f32 to vector<1x16x16xf32>
    %295 = arith.mulf %294, %293 : vector<1x16x16xf32>
    %296 = arith.addf %291, %295 : vector<1x16x16xf32>
    %297 = vector.extract_strided_slice %218 {offsets = [0, 0, 0, 6], sizes = [2, 1, 16, 16], strides = [1, 1, 1, 1]} : vector<2x1x16x22xf32> to vector<2x1x16x16xf32>
    %c6_262 = arith.constant 6 : index
    %298 = memref.load %arg1[%c6_262] : memref<98xf32, #tpu.memory_space<smem>>
    %c55 = arith.constant 55 : index
    %299 = memref.load %arg1[%c55] : memref<98xf32, #tpu.memory_space<smem>>
    %300 = vector.extract_strided_slice %297 {offsets = [0, 0, 0, 0], sizes = [1, 1, 16, 16], strides = [1, 1, 1, 1]} : vector<2x1x16x16xf32> to vector<1x1x16x16xf32>
    %301 = vector.shape_cast %300 : vector<1x1x16x16xf32> to vector<1x16x16xf32>
    %302 = vector.broadcast %298 : f32 to vector<1x16x16xf32>
    %303 = arith.mulf %302, %301 : vector<1x16x16xf32>
    %304 = arith.addf %296, %303 : vector<1x16x16xf32>
    %305 = vector.extract_strided_slice %297 {offsets = [1, 0, 0, 0], sizes = [1, 1, 16, 16], strides = [1, 1, 1, 1]} : vector<2x1x16x16xf32> to vector<1x1x16x16xf32>
    %306 = vector.shape_cast %305 : vector<1x1x16x16xf32> to vector<1x16x16xf32>
    %307 = vector.broadcast %299 : f32 to vector<1x16x16xf32>
    %308 = arith.mulf %307, %306 : vector<1x16x16xf32>
    %309 = arith.addf %304, %308 : vector<1x16x16xf32>
    %c0_263 = arith.constant 0 : index
    %c0_264 = arith.constant 0 : index
    %c1_265 = arith.constant 1 : index
    %c0_266 = arith.constant 0 : index
    %310 = vector.load %arg11[%c0_263, %c0_264, %c1_265, %c0_266] : memref<2x1x22x22xf32, #tpu.memory_space<vmem>>, vector<2x1x16x22xf32>
    %311 = vector.extract_strided_slice %310 {offsets = [0, 0, 0, 0], sizes = [2, 1, 16, 16], strides = [1, 1, 1, 1]} : vector<2x1x16x22xf32> to vector<2x1x16x16xf32>
    %c7_267 = arith.constant 7 : index
    %312 = memref.load %arg1[%c7_267] : memref<98xf32, #tpu.memory_space<smem>>
    %c56 = arith.constant 56 : index
    %313 = memref.load %arg1[%c56] : memref<98xf32, #tpu.memory_space<smem>>
    %314 = vector.extract_strided_slice %311 {offsets = [0, 0, 0, 0], sizes = [1, 1, 16, 16], strides = [1, 1, 1, 1]} : vector<2x1x16x16xf32> to vector<1x1x16x16xf32>
    %315 = vector.shape_cast %314 : vector<1x1x16x16xf32> to vector<1x16x16xf32>
    %316 = vector.broadcast %312 : f32 to vector<1x16x16xf32>
    %317 = arith.mulf %316, %315 : vector<1x16x16xf32>
    %318 = arith.addf %309, %317 : vector<1x16x16xf32>
    %319 = vector.extract_strided_slice %311 {offsets = [1, 0, 0, 0], sizes = [1, 1, 16, 16], strides = [1, 1, 1, 1]} : vector<2x1x16x16xf32> to vector<1x1x16x16xf32>
    %320 = vector.shape_cast %319 : vector<1x1x16x16xf32> to vector<1x16x16xf32>
    %321 = vector.broadcast %313 : f32 to vector<1x16x16xf32>
    %322 = arith.mulf %321, %320 : vector<1x16x16xf32>
    %323 = arith.addf %318, %322 : vector<1x16x16xf32>
    %324 = vector.extract_strided_slice %310 {offsets = [0, 0, 0, 1], sizes = [2, 1, 16, 16], strides = [1, 1, 1, 1]} : vector<2x1x16x22xf32> to vector<2x1x16x16xf32>
    %c8_268 = arith.constant 8 : index
    %325 = memref.load %arg1[%c8_268] : memref<98xf32, #tpu.memory_space<smem>>
    %c57 = arith.constant 57 : index
    %326 = memref.load %arg1[%c57] : memref<98xf32, #tpu.memory_space<smem>>
    %327 = vector.extract_strided_slice %324 {offsets = [0, 0, 0, 0], sizes = [1, 1, 16, 16], strides = [1, 1, 1, 1]} : vector<2x1x16x16xf32> to vector<1x1x16x16xf32>
    %328 = vector.shape_cast %327 : vector<1x1x16x16xf32> to vector<1x16x16xf32>
    %329 = vector.broadcast %325 : f32 to vector<1x16x16xf32>
    %330 = arith.mulf %329, %328 : vector<1x16x16xf32>
    %331 = arith.addf %323, %330 : vector<1x16x16xf32>
    %332 = vector.extract_strided_slice %324 {offsets = [1, 0, 0, 0], sizes = [1, 1, 16, 16], strides = [1, 1, 1, 1]} : vector<2x1x16x16xf32> to vector<1x1x16x16xf32>
    %333 = vector.shape_cast %332 : vector<1x1x16x16xf32> to vector<1x16x16xf32>
    %334 = vector.broadcast %326 : f32 to vector<1x16x16xf32>
    %335 = arith.mulf %334, %333 : vector<1x16x16xf32>
    %336 = arith.addf %331, %335 : vector<1x16x16xf32>
    %337 = vector.extract_strided_slice %310 {offsets = [0, 0, 0, 2], sizes = [2, 1, 16, 16], strides = [1, 1, 1, 1]} : vector<2x1x16x22xf32> to vector<2x1x16x16xf32>
    %c9_269 = arith.constant 9 : index
    %338 = memref.load %arg1[%c9_269] : memref<98xf32, #tpu.memory_space<smem>>
    %c58 = arith.constant 58 : index
    %339 = memref.load %arg1[%c58] : memref<98xf32, #tpu.memory_space<smem>>
    %340 = vector.extract_strided_slice %337 {offsets = [0, 0, 0, 0], sizes = [1, 1, 16, 16], strides = [1, 1, 1, 1]} : vector<2x1x16x16xf32> to vector<1x1x16x16xf32>
    %341 = vector.shape_cast %340 : vector<1x1x16x16xf32> to vector<1x16x16xf32>
    %342 = vector.broadcast %338 : f32 to vector<1x16x16xf32>
    %343 = arith.mulf %342, %341 : vector<1x16x16xf32>
    %344 = arith.addf %336, %343 : vector<1x16x16xf32>
    %345 = vector.extract_strided_slice %337 {offsets = [1, 0, 0, 0], sizes = [1, 1, 16, 16], strides = [1, 1, 1, 1]} : vector<2x1x16x16xf32> to vector<1x1x16x16xf32>
    %346 = vector.shape_cast %345 : vector<1x1x16x16xf32> to vector<1x16x16xf32>
    %347 = vector.broadcast %339 : f32 to vector<1x16x16xf32>
    %348 = arith.mulf %347, %346 : vector<1x16x16xf32>
    %349 = arith.addf %344, %348 : vector<1x16x16xf32>
    %350 = vector.extract_strided_slice %310 {offsets = [0, 0, 0, 3], sizes = [2, 1, 16, 16], strides = [1, 1, 1, 1]} : vector<2x1x16x22xf32> to vector<2x1x16x16xf32>
    %c10_270 = arith.constant 10 : index
    %351 = memref.load %arg1[%c10_270] : memref<98xf32, #tpu.memory_space<smem>>
    %c59 = arith.constant 59 : index
    %352 = memref.load %arg1[%c59] : memref<98xf32, #tpu.memory_space<smem>>
    %353 = vector.extract_strided_slice %350 {offsets = [0, 0, 0, 0], sizes = [1, 1, 16, 16], strides = [1, 1, 1, 1]} : vector<2x1x16x16xf32> to vector<1x1x16x16xf32>
    %354 = vector.shape_cast %353 : vector<1x1x16x16xf32> to vector<1x16x16xf32>
    %355 = vector.broadcast %351 : f32 to vector<1x16x16xf32>
    %356 = arith.mulf %355, %354 : vector<1x16x16xf32>
    %357 = arith.addf %349, %356 : vector<1x16x16xf32>
    %358 = vector.extract_strided_slice %350 {offsets = [1, 0, 0, 0], sizes = [1, 1, 16, 16], strides = [1, 1, 1, 1]} : vector<2x1x16x16xf32> to vector<1x1x16x16xf32>
    %359 = vector.shape_cast %358 : vector<1x1x16x16xf32> to vector<1x16x16xf32>
    %360 = vector.broadcast %352 : f32 to vector<1x16x16xf32>
    %361 = arith.mulf %360, %359 : vector<1x16x16xf32>
    %362 = arith.addf %357, %361 : vector<1x16x16xf32>
    %363 = vector.extract_strided_slice %310 {offsets = [0, 0, 0, 4], sizes = [2, 1, 16, 16], strides = [1, 1, 1, 1]} : vector<2x1x16x22xf32> to vector<2x1x16x16xf32>
    %c11_271 = arith.constant 11 : index
    %364 = memref.load %arg1[%c11_271] : memref<98xf32, #tpu.memory_space<smem>>
    %c60 = arith.constant 60 : index
    %365 = memref.load %arg1[%c60] : memref<98xf32, #tpu.memory_space<smem>>
    %366 = vector.extract_strided_slice %363 {offsets = [0, 0, 0, 0], sizes = [1, 1, 16, 16], strides = [1, 1, 1, 1]} : vector<2x1x16x16xf32> to vector<1x1x16x16xf32>
    %367 = vector.shape_cast %366 : vector<1x1x16x16xf32> to vector<1x16x16xf32>
    %368 = vector.broadcast %364 : f32 to vector<1x16x16xf32>
    %369 = arith.mulf %368, %367 : vector<1x16x16xf32>
    %370 = arith.addf %362, %369 : vector<1x16x16xf32>
    %371 = vector.extract_strided_slice %363 {offsets = [1, 0, 0, 0], sizes = [1, 1, 16, 16], strides = [1, 1, 1, 1]} : vector<2x1x16x16xf32> to vector<1x1x16x16xf32>
    %372 = vector.shape_cast %371 : vector<1x1x16x16xf32> to vector<1x16x16xf32>
    %373 = vector.broadcast %365 : f32 to vector<1x16x16xf32>
    %374 = arith.mulf %373, %372 : vector<1x16x16xf32>
    %375 = arith.addf %370, %374 : vector<1x16x16xf32>
    %376 = vector.extract_strided_slice %310 {offsets = [0, 0, 0, 5], sizes = [2, 1, 16, 16], strides = [1, 1, 1, 1]} : vector<2x1x16x22xf32> to vector<2x1x16x16xf32>
    %c12_272 = arith.constant 12 : index
    %377 = memref.load %arg1[%c12_272] : memref<98xf32, #tpu.memory_space<smem>>
    %c61 = arith.constant 61 : index
    %378 = memref.load %arg1[%c61] : memref<98xf32, #tpu.memory_space<smem>>
    %379 = vector.extract_strided_slice %376 {offsets = [0, 0, 0, 0], sizes = [1, 1, 16, 16], strides = [1, 1, 1, 1]} : vector<2x1x16x16xf32> to vector<1x1x16x16xf32>
    %380 = vector.shape_cast %379 : vector<1x1x16x16xf32> to vector<1x16x16xf32>
    %381 = vector.broadcast %377 : f32 to vector<1x16x16xf32>
    %382 = arith.mulf %381, %380 : vector<1x16x16xf32>
    %383 = arith.addf %375, %382 : vector<1x16x16xf32>
    %384 = vector.extract_strided_slice %376 {offsets = [1, 0, 0, 0], sizes = [1, 1, 16, 16], strides = [1, 1, 1, 1]} : vector<2x1x16x16xf32> to vector<1x1x16x16xf32>
    %385 = vector.shape_cast %384 : vector<1x1x16x16xf32> to vector<1x16x16xf32>
    %386 = vector.broadcast %378 : f32 to vector<1x16x16xf32>
    %387 = arith.mulf %386, %385 : vector<1x16x16xf32>
    %388 = arith.addf %383, %387 : vector<1x16x16xf32>
    %389 = vector.extract_strided_slice %310 {offsets = [0, 0, 0, 6], sizes = [2, 1, 16, 16], strides = [1, 1, 1, 1]} : vector<2x1x16x22xf32> to vector<2x1x16x16xf32>
    %c13_273 = arith.constant 13 : index
    %390 = memref.load %arg1[%c13_273] : memref<98xf32, #tpu.memory_space<smem>>
    %c62 = arith.constant 62 : index
    %391 = memref.load %arg1[%c62] : memref<98xf32, #tpu.memory_space<smem>>
    %392 = vector.extract_strided_slice %389 {offsets = [0, 0, 0, 0], sizes = [1, 1, 16, 16], strides = [1, 1, 1, 1]} : vector<2x1x16x16xf32> to vector<1x1x16x16xf32>
    %393 = vector.shape_cast %392 : vector<1x1x16x16xf32> to vector<1x16x16xf32>
    %394 = vector.broadcast %390 : f32 to vector<1x16x16xf32>
    %395 = arith.mulf %394, %393 : vector<1x16x16xf32>
    %396 = arith.addf %388, %395 : vector<1x16x16xf32>
    %397 = vector.extract_strided_slice %389 {offsets = [1, 0, 0, 0], sizes = [1, 1, 16, 16], strides = [1, 1, 1, 1]} : vector<2x1x16x16xf32> to vector<1x1x16x16xf32>
    %398 = vector.shape_cast %397 : vector<1x1x16x16xf32> to vector<1x16x16xf32>
    %399 = vector.broadcast %391 : f32 to vector<1x16x16xf32>
    %400 = arith.mulf %399, %398 : vector<1x16x16xf32>
    %401 = arith.addf %396, %400 : vector<1x16x16xf32>
    %c0_274 = arith.constant 0 : index
    %c0_275 = arith.constant 0 : index
    %c2_276 = arith.constant 2 : index
    %c0_277 = arith.constant 0 : index
    %402 = vector.load %arg11[%c0_274, %c0_275, %c2_276, %c0_277] : memref<2x1x22x22xf32, #tpu.memory_space<vmem>>, vector<2x1x16x22xf32>
    %403 = vector.extract_strided_slice %402 {offsets = [0, 0, 0, 0], sizes = [2, 1, 16, 16], strides = [1, 1, 1, 1]} : vector<2x1x16x22xf32> to vector<2x1x16x16xf32>
    %c14_278 = arith.constant 14 : index
    %404 = memref.load %arg1[%c14_278] : memref<98xf32, #tpu.memory_space<smem>>
    %c63 = arith.constant 63 : index
    %405 = memref.load %arg1[%c63] : memref<98xf32, #tpu.memory_space<smem>>
    %406 = vector.extract_strided_slice %403 {offsets = [0, 0, 0, 0], sizes = [1, 1, 16, 16], strides = [1, 1, 1, 1]} : vector<2x1x16x16xf32> to vector<1x1x16x16xf32>
    %407 = vector.shape_cast %406 : vector<1x1x16x16xf32> to vector<1x16x16xf32>
    %408 = vector.broadcast %404 : f32 to vector<1x16x16xf32>
    %409 = arith.mulf %408, %407 : vector<1x16x16xf32>
    %410 = arith.addf %401, %409 : vector<1x16x16xf32>
    %411 = vector.extract_strided_slice %403 {offsets = [1, 0, 0, 0], sizes = [1, 1, 16, 16], strides = [1, 1, 1, 1]} : vector<2x1x16x16xf32> to vector<1x1x16x16xf32>
    %412 = vector.shape_cast %411 : vector<1x1x16x16xf32> to vector<1x16x16xf32>
    %413 = vector.broadcast %405 : f32 to vector<1x16x16xf32>
    %414 = arith.mulf %413, %412 : vector<1x16x16xf32>
    %415 = arith.addf %410, %414 : vector<1x16x16xf32>
    %416 = vector.extract_strided_slice %402 {offsets = [0, 0, 0, 1], sizes = [2, 1, 16, 16], strides = [1, 1, 1, 1]} : vector<2x1x16x22xf32> to vector<2x1x16x16xf32>
    %c15_279 = arith.constant 15 : index
    %417 = memref.load %arg1[%c15_279] : memref<98xf32, #tpu.memory_space<smem>>
    %c64_280 = arith.constant 64 : index
    %418 = memref.load %arg1[%c64_280] : memref<98xf32, #tpu.memory_space<smem>>
    %419 = vector.extract_strided_slice %416 {offsets = [0, 0, 0, 0], sizes = [1, 1, 16, 16], strides = [1, 1, 1, 1]} : vector<2x1x16x16xf32> to vector<1x1x16x16xf32>
    %420 = vector.shape_cast %419 : vector<1x1x16x16xf32> to vector<1x16x16xf32>
    %421 = vector.broadcast %417 : f32 to vector<1x16x16xf32>
    %422 = arith.mulf %421, %420 : vector<1x16x16xf32>
    %423 = arith.addf %415, %422 : vector<1x16x16xf32>
    %424 = vector.extract_strided_slice %416 {offsets = [1, 0, 0, 0], sizes = [1, 1, 16, 16], strides = [1, 1, 1, 1]} : vector<2x1x16x16xf32> to vector<1x1x16x16xf32>
    %425 = vector.shape_cast %424 : vector<1x1x16x16xf32> to vector<1x16x16xf32>
    %426 = vector.broadcast %418 : f32 to vector<1x16x16xf32>
    %427 = arith.mulf %426, %425 : vector<1x16x16xf32>
    %428 = arith.addf %423, %427 : vector<1x16x16xf32>
    %429 = vector.extract_strided_slice %402 {offsets = [0, 0, 0, 2], sizes = [2, 1, 16, 16], strides = [1, 1, 1, 1]} : vector<2x1x16x22xf32> to vector<2x1x16x16xf32>
    %c16_281 = arith.constant 16 : index
    %430 = memref.load %arg1[%c16_281] : memref<98xf32, #tpu.memory_space<smem>>
    %c65 = arith.constant 65 : index
    %431 = memref.load %arg1[%c65] : memref<98xf32, #tpu.memory_space<smem>>
    %432 = vector.extract_strided_slice %429 {offsets = [0, 0, 0, 0], sizes = [1, 1, 16, 16], strides = [1, 1, 1, 1]} : vector<2x1x16x16xf32> to vector<1x1x16x16xf32>
    %433 = vector.shape_cast %432 : vector<1x1x16x16xf32> to vector<1x16x16xf32>
    %434 = vector.broadcast %430 : f32 to vector<1x16x16xf32>
    %435 = arith.mulf %434, %433 : vector<1x16x16xf32>
    %436 = arith.addf %428, %435 : vector<1x16x16xf32>
    %437 = vector.extract_strided_slice %429 {offsets = [1, 0, 0, 0], sizes = [1, 1, 16, 16], strides = [1, 1, 1, 1]} : vector<2x1x16x16xf32> to vector<1x1x16x16xf32>
    %438 = vector.shape_cast %437 : vector<1x1x16x16xf32> to vector<1x16x16xf32>
    %439 = vector.broadcast %431 : f32 to vector<1x16x16xf32>
    %440 = arith.mulf %439, %438 : vector<1x16x16xf32>
    %441 = arith.addf %436, %440 : vector<1x16x16xf32>
    %442 = vector.extract_strided_slice %402 {offsets = [0, 0, 0, 3], sizes = [2, 1, 16, 16], strides = [1, 1, 1, 1]} : vector<2x1x16x22xf32> to vector<2x1x16x16xf32>
    %c17_282 = arith.constant 17 : index
    %443 = memref.load %arg1[%c17_282] : memref<98xf32, #tpu.memory_space<smem>>
    %c66 = arith.constant 66 : index
    %444 = memref.load %arg1[%c66] : memref<98xf32, #tpu.memory_space<smem>>
    %445 = vector.extract_strided_slice %442 {offsets = [0, 0, 0, 0], sizes = [1, 1, 16, 16], strides = [1, 1, 1, 1]} : vector<2x1x16x16xf32> to vector<1x1x16x16xf32>
    %446 = vector.shape_cast %445 : vector<1x1x16x16xf32> to vector<1x16x16xf32>
    %447 = vector.broadcast %443 : f32 to vector<1x16x16xf32>
    %448 = arith.mulf %447, %446 : vector<1x16x16xf32>
    %449 = arith.addf %441, %448 : vector<1x16x16xf32>
    %450 = vector.extract_strided_slice %442 {offsets = [1, 0, 0, 0], sizes = [1, 1, 16, 16], strides = [1, 1, 1, 1]} : vector<2x1x16x16xf32> to vector<1x1x16x16xf32>
    %451 = vector.shape_cast %450 : vector<1x1x16x16xf32> to vector<1x16x16xf32>
    %452 = vector.broadcast %444 : f32 to vector<1x16x16xf32>
    %453 = arith.mulf %452, %451 : vector<1x16x16xf32>
    %454 = arith.addf %449, %453 : vector<1x16x16xf32>
    %455 = vector.extract_strided_slice %402 {offsets = [0, 0, 0, 4], sizes = [2, 1, 16, 16], strides = [1, 1, 1, 1]} : vector<2x1x16x22xf32> to vector<2x1x16x16xf32>
    %c18_283 = arith.constant 18 : index
    %456 = memref.load %arg1[%c18_283] : memref<98xf32, #tpu.memory_space<smem>>
    %c67 = arith.constant 67 : index
    %457 = memref.load %arg1[%c67] : memref<98xf32, #tpu.memory_space<smem>>
    %458 = vector.extract_strided_slice %455 {offsets = [0, 0, 0, 0], sizes = [1, 1, 16, 16], strides = [1, 1, 1, 1]} : vector<2x1x16x16xf32> to vector<1x1x16x16xf32>
    %459 = vector.shape_cast %458 : vector<1x1x16x16xf32> to vector<1x16x16xf32>
    %460 = vector.broadcast %456 : f32 to vector<1x16x16xf32>
    %461 = arith.mulf %460, %459 : vector<1x16x16xf32>
    %462 = arith.addf %454, %461 : vector<1x16x16xf32>
    %463 = vector.extract_strided_slice %455 {offsets = [1, 0, 0, 0], sizes = [1, 1, 16, 16], strides = [1, 1, 1, 1]} : vector<2x1x16x16xf32> to vector<1x1x16x16xf32>
    %464 = vector.shape_cast %463 : vector<1x1x16x16xf32> to vector<1x16x16xf32>
    %465 = vector.broadcast %457 : f32 to vector<1x16x16xf32>
    %466 = arith.mulf %465, %464 : vector<1x16x16xf32>
    %467 = arith.addf %462, %466 : vector<1x16x16xf32>
    %468 = vector.extract_strided_slice %402 {offsets = [0, 0, 0, 5], sizes = [2, 1, 16, 16], strides = [1, 1, 1, 1]} : vector<2x1x16x22xf32> to vector<2x1x16x16xf32>
    %c19_284 = arith.constant 19 : index
    %469 = memref.load %arg1[%c19_284] : memref<98xf32, #tpu.memory_space<smem>>
    %c68 = arith.constant 68 : index
    %470 = memref.load %arg1[%c68] : memref<98xf32, #tpu.memory_space<smem>>
    %471 = vector.extract_strided_slice %468 {offsets = [0, 0, 0, 0], sizes = [1, 1, 16, 16], strides = [1, 1, 1, 1]} : vector<2x1x16x16xf32> to vector<1x1x16x16xf32>
    %472 = vector.shape_cast %471 : vector<1x1x16x16xf32> to vector<1x16x16xf32>
    %473 = vector.broadcast %469 : f32 to vector<1x16x16xf32>
    %474 = arith.mulf %473, %472 : vector<1x16x16xf32>
    %475 = arith.addf %467, %474 : vector<1x16x16xf32>
    %476 = vector.extract_strided_slice %468 {offsets = [1, 0, 0, 0], sizes = [1, 1, 16, 16], strides = [1, 1, 1, 1]} : vector<2x1x16x16xf32> to vector<1x1x16x16xf32>
    %477 = vector.shape_cast %476 : vector<1x1x16x16xf32> to vector<1x16x16xf32>
    %478 = vector.broadcast %470 : f32 to vector<1x16x16xf32>
    %479 = arith.mulf %478, %477 : vector<1x16x16xf32>
    %480 = arith.addf %475, %479 : vector<1x16x16xf32>
    %481 = vector.extract_strided_slice %402 {offsets = [0, 0, 0, 6], sizes = [2, 1, 16, 16], strides = [1, 1, 1, 1]} : vector<2x1x16x22xf32> to vector<2x1x16x16xf32>
    %c20 = arith.constant 20 : index
    %482 = memref.load %arg1[%c20] : memref<98xf32, #tpu.memory_space<smem>>
    %c69 = arith.constant 69 : index
    %483 = memref.load %arg1[%c69] : memref<98xf32, #tpu.memory_space<smem>>
    %484 = vector.extract_strided_slice %481 {offsets = [0, 0, 0, 0], sizes = [1, 1, 16, 16], strides = [1, 1, 1, 1]} : vector<2x1x16x16xf32> to vector<1x1x16x16xf32>
    %485 = vector.shape_cast %484 : vector<1x1x16x16xf32> to vector<1x16x16xf32>
    %486 = vector.broadcast %482 : f32 to vector<1x16x16xf32>
    %487 = arith.mulf %486, %485 : vector<1x16x16xf32>
    %488 = arith.addf %480, %487 : vector<1x16x16xf32>
    %489 = vector.extract_strided_slice %481 {offsets = [1, 0, 0, 0], sizes = [1, 1, 16, 16], strides = [1, 1, 1, 1]} : vector<2x1x16x16xf32> to vector<1x1x16x16xf32>
    %490 = vector.shape_cast %489 : vector<1x1x16x16xf32> to vector<1x16x16xf32>
    %491 = vector.broadcast %483 : f32 to vector<1x16x16xf32>
    %492 = arith.mulf %491, %490 : vector<1x16x16xf32>
    %493 = arith.addf %488, %492 : vector<1x16x16xf32>
    %c0_285 = arith.constant 0 : index
    %c0_286 = arith.constant 0 : index
    %c3_287 = arith.constant 3 : index
    %c0_288 = arith.constant 0 : index
    %494 = vector.load %arg11[%c0_285, %c0_286, %c3_287, %c0_288] : memref<2x1x22x22xf32, #tpu.memory_space<vmem>>, vector<2x1x16x22xf32>
    %495 = vector.extract_strided_slice %494 {offsets = [0, 0, 0, 0], sizes = [2, 1, 16, 16], strides = [1, 1, 1, 1]} : vector<2x1x16x22xf32> to vector<2x1x16x16xf32>
    %c21 = arith.constant 21 : index
    %496 = memref.load %arg1[%c21] : memref<98xf32, #tpu.memory_space<smem>>
    %c70 = arith.constant 70 : index
    %497 = memref.load %arg1[%c70] : memref<98xf32, #tpu.memory_space<smem>>
    %498 = vector.extract_strided_slice %495 {offsets = [0, 0, 0, 0], sizes = [1, 1, 16, 16], strides = [1, 1, 1, 1]} : vector<2x1x16x16xf32> to vector<1x1x16x16xf32>
    %499 = vector.shape_cast %498 : vector<1x1x16x16xf32> to vector<1x16x16xf32>
    %500 = vector.broadcast %496 : f32 to vector<1x16x16xf32>
    %501 = arith.mulf %500, %499 : vector<1x16x16xf32>
    %502 = arith.addf %493, %501 : vector<1x16x16xf32>
    %503 = vector.extract_strided_slice %495 {offsets = [1, 0, 0, 0], sizes = [1, 1, 16, 16], strides = [1, 1, 1, 1]} : vector<2x1x16x16xf32> to vector<1x1x16x16xf32>
    %504 = vector.shape_cast %503 : vector<1x1x16x16xf32> to vector<1x16x16xf32>
    %505 = vector.broadcast %497 : f32 to vector<1x16x16xf32>
    %506 = arith.mulf %505, %504 : vector<1x16x16xf32>
    %507 = arith.addf %502, %506 : vector<1x16x16xf32>
    %508 = vector.extract_strided_slice %494 {offsets = [0, 0, 0, 1], sizes = [2, 1, 16, 16], strides = [1, 1, 1, 1]} : vector<2x1x16x22xf32> to vector<2x1x16x16xf32>
    %c22 = arith.constant 22 : index
    %509 = memref.load %arg1[%c22] : memref<98xf32, #tpu.memory_space<smem>>
    %c71 = arith.constant 71 : index
    %510 = memref.load %arg1[%c71] : memref<98xf32, #tpu.memory_space<smem>>
    %511 = vector.extract_strided_slice %508 {offsets = [0, 0, 0, 0], sizes = [1, 1, 16, 16], strides = [1, 1, 1, 1]} : vector<2x1x16x16xf32> to vector<1x1x16x16xf32>
    %512 = vector.shape_cast %511 : vector<1x1x16x16xf32> to vector<1x16x16xf32>
    %513 = vector.broadcast %509 : f32 to vector<1x16x16xf32>
    %514 = arith.mulf %513, %512 : vector<1x16x16xf32>
    %515 = arith.addf %507, %514 : vector<1x16x16xf32>
    %516 = vector.extract_strided_slice %508 {offsets = [1, 0, 0, 0], sizes = [1, 1, 16, 16], strides = [1, 1, 1, 1]} : vector<2x1x16x16xf32> to vector<1x1x16x16xf32>
    %517 = vector.shape_cast %516 : vector<1x1x16x16xf32> to vector<1x16x16xf32>
    %518 = vector.broadcast %510 : f32 to vector<1x16x16xf32>
    %519 = arith.mulf %518, %517 : vector<1x16x16xf32>
    %520 = arith.addf %515, %519 : vector<1x16x16xf32>
    %521 = vector.extract_strided_slice %494 {offsets = [0, 0, 0, 2], sizes = [2, 1, 16, 16], strides = [1, 1, 1, 1]} : vector<2x1x16x22xf32> to vector<2x1x16x16xf32>
    %c23 = arith.constant 23 : index
    %522 = memref.load %arg1[%c23] : memref<98xf32, #tpu.memory_space<smem>>
    %c72 = arith.constant 72 : index
    %523 = memref.load %arg1[%c72] : memref<98xf32, #tpu.memory_space<smem>>
    %524 = vector.extract_strided_slice %521 {offsets = [0, 0, 0, 0], sizes = [1, 1, 16, 16], strides = [1, 1, 1, 1]} : vector<2x1x16x16xf32> to vector<1x1x16x16xf32>
    %525 = vector.shape_cast %524 : vector<1x1x16x16xf32> to vector<1x16x16xf32>
    %526 = vector.broadcast %522 : f32 to vector<1x16x16xf32>
    %527 = arith.mulf %526, %525 : vector<1x16x16xf32>
    %528 = arith.addf %520, %527 : vector<1x16x16xf32>
    %529 = vector.extract_strided_slice %521 {offsets = [1, 0, 0, 0], sizes = [1, 1, 16, 16], strides = [1, 1, 1, 1]} : vector<2x1x16x16xf32> to vector<1x1x16x16xf32>
    %530 = vector.shape_cast %529 : vector<1x1x16x16xf32> to vector<1x16x16xf32>
    %531 = vector.broadcast %523 : f32 to vector<1x16x16xf32>
    %532 = arith.mulf %531, %530 : vector<1x16x16xf32>
    %533 = arith.addf %528, %532 : vector<1x16x16xf32>
    %534 = vector.extract_strided_slice %494 {offsets = [0, 0, 0, 3], sizes = [2, 1, 16, 16], strides = [1, 1, 1, 1]} : vector<2x1x16x22xf32> to vector<2x1x16x16xf32>
    %c24 = arith.constant 24 : index
    %535 = memref.load %arg1[%c24] : memref<98xf32, #tpu.memory_space<smem>>
    %c73 = arith.constant 73 : index
    %536 = memref.load %arg1[%c73] : memref<98xf32, #tpu.memory_space<smem>>
    %537 = vector.extract_strided_slice %534 {offsets = [0, 0, 0, 0], sizes = [1, 1, 16, 16], strides = [1, 1, 1, 1]} : vector<2x1x16x16xf32> to vector<1x1x16x16xf32>
    %538 = vector.shape_cast %537 : vector<1x1x16x16xf32> to vector<1x16x16xf32>
    %539 = vector.broadcast %535 : f32 to vector<1x16x16xf32>
    %540 = arith.mulf %539, %538 : vector<1x16x16xf32>
    %541 = arith.addf %533, %540 : vector<1x16x16xf32>
    %542 = vector.extract_strided_slice %534 {offsets = [1, 0, 0, 0], sizes = [1, 1, 16, 16], strides = [1, 1, 1, 1]} : vector<2x1x16x16xf32> to vector<1x1x16x16xf32>
    %543 = vector.shape_cast %542 : vector<1x1x16x16xf32> to vector<1x16x16xf32>
    %544 = vector.broadcast %536 : f32 to vector<1x16x16xf32>
    %545 = arith.mulf %544, %543 : vector<1x16x16xf32>
    %546 = arith.addf %541, %545 : vector<1x16x16xf32>
    %547 = vector.extract_strided_slice %494 {offsets = [0, 0, 0, 4], sizes = [2, 1, 16, 16], strides = [1, 1, 1, 1]} : vector<2x1x16x22xf32> to vector<2x1x16x16xf32>
    %c25 = arith.constant 25 : index
    %548 = memref.load %arg1[%c25] : memref<98xf32, #tpu.memory_space<smem>>
    %c74 = arith.constant 74 : index
    %549 = memref.load %arg1[%c74] : memref<98xf32, #tpu.memory_space<smem>>
    %550 = vector.extract_strided_slice %547 {offsets = [0, 0, 0, 0], sizes = [1, 1, 16, 16], strides = [1, 1, 1, 1]} : vector<2x1x16x16xf32> to vector<1x1x16x16xf32>
    %551 = vector.shape_cast %550 : vector<1x1x16x16xf32> to vector<1x16x16xf32>
    %552 = vector.broadcast %548 : f32 to vector<1x16x16xf32>
    %553 = arith.mulf %552, %551 : vector<1x16x16xf32>
    %554 = arith.addf %546, %553 : vector<1x16x16xf32>
    %555 = vector.extract_strided_slice %547 {offsets = [1, 0, 0, 0], sizes = [1, 1, 16, 16], strides = [1, 1, 1, 1]} : vector<2x1x16x16xf32> to vector<1x1x16x16xf32>
    %556 = vector.shape_cast %555 : vector<1x1x16x16xf32> to vector<1x16x16xf32>
    %557 = vector.broadcast %549 : f32 to vector<1x16x16xf32>
    %558 = arith.mulf %557, %556 : vector<1x16x16xf32>
    %559 = arith.addf %554, %558 : vector<1x16x16xf32>
    %560 = vector.extract_strided_slice %494 {offsets = [0, 0, 0, 5], sizes = [2, 1, 16, 16], strides = [1, 1, 1, 1]} : vector<2x1x16x22xf32> to vector<2x1x16x16xf32>
    %c26 = arith.constant 26 : index
    %561 = memref.load %arg1[%c26] : memref<98xf32, #tpu.memory_space<smem>>
    %c75 = arith.constant 75 : index
    %562 = memref.load %arg1[%c75] : memref<98xf32, #tpu.memory_space<smem>>
    %563 = vector.extract_strided_slice %560 {offsets = [0, 0, 0, 0], sizes = [1, 1, 16, 16], strides = [1, 1, 1, 1]} : vector<2x1x16x16xf32> to vector<1x1x16x16xf32>
    %564 = vector.shape_cast %563 : vector<1x1x16x16xf32> to vector<1x16x16xf32>
    %565 = vector.broadcast %561 : f32 to vector<1x16x16xf32>
    %566 = arith.mulf %565, %564 : vector<1x16x16xf32>
    %567 = arith.addf %559, %566 : vector<1x16x16xf32>
    %568 = vector.extract_strided_slice %560 {offsets = [1, 0, 0, 0], sizes = [1, 1, 16, 16], strides = [1, 1, 1, 1]} : vector<2x1x16x16xf32> to vector<1x1x16x16xf32>
    %569 = vector.shape_cast %568 : vector<1x1x16x16xf32> to vector<1x16x16xf32>
    %570 = vector.broadcast %562 : f32 to vector<1x16x16xf32>
    %571 = arith.mulf %570, %569 : vector<1x16x16xf32>
    %572 = arith.addf %567, %571 : vector<1x16x16xf32>
    %573 = vector.extract_strided_slice %494 {offsets = [0, 0, 0, 6], sizes = [2, 1, 16, 16], strides = [1, 1, 1, 1]} : vector<2x1x16x22xf32> to vector<2x1x16x16xf32>
    %c27 = arith.constant 27 : index
    %574 = memref.load %arg1[%c27] : memref<98xf32, #tpu.memory_space<smem>>
    %c76 = arith.constant 76 : index
    %575 = memref.load %arg1[%c76] : memref<98xf32, #tpu.memory_space<smem>>
    %576 = vector.extract_strided_slice %573 {offsets = [0, 0, 0, 0], sizes = [1, 1, 16, 16], strides = [1, 1, 1, 1]} : vector<2x1x16x16xf32> to vector<1x1x16x16xf32>
    %577 = vector.shape_cast %576 : vector<1x1x16x16xf32> to vector<1x16x16xf32>
    %578 = vector.broadcast %574 : f32 to vector<1x16x16xf32>
    %579 = arith.mulf %578, %577 : vector<1x16x16xf32>
    %580 = arith.addf %572, %579 : vector<1x16x16xf32>
    %581 = vector.extract_strided_slice %573 {offsets = [1, 0, 0, 0], sizes = [1, 1, 16, 16], strides = [1, 1, 1, 1]} : vector<2x1x16x16xf32> to vector<1x1x16x16xf32>
    %582 = vector.shape_cast %581 : vector<1x1x16x16xf32> to vector<1x16x16xf32>
    %583 = vector.broadcast %575 : f32 to vector<1x16x16xf32>
    %584 = arith.mulf %583, %582 : vector<1x16x16xf32>
    %585 = arith.addf %580, %584 : vector<1x16x16xf32>
    %c0_289 = arith.constant 0 : index
    %c0_290 = arith.constant 0 : index
    %c4_291 = arith.constant 4 : index
    %c0_292 = arith.constant 0 : index
    %586 = vector.load %arg11[%c0_289, %c0_290, %c4_291, %c0_292] : memref<2x1x22x22xf32, #tpu.memory_space<vmem>>, vector<2x1x16x22xf32>
    %587 = vector.extract_strided_slice %586 {offsets = [0, 0, 0, 0], sizes = [2, 1, 16, 16], strides = [1, 1, 1, 1]} : vector<2x1x16x22xf32> to vector<2x1x16x16xf32>
    %c28 = arith.constant 28 : index
    %588 = memref.load %arg1[%c28] : memref<98xf32, #tpu.memory_space<smem>>
    %c77 = arith.constant 77 : index
    %589 = memref.load %arg1[%c77] : memref<98xf32, #tpu.memory_space<smem>>
    %590 = vector.extract_strided_slice %587 {offsets = [0, 0, 0, 0], sizes = [1, 1, 16, 16], strides = [1, 1, 1, 1]} : vector<2x1x16x16xf32> to vector<1x1x16x16xf32>
    %591 = vector.shape_cast %590 : vector<1x1x16x16xf32> to vector<1x16x16xf32>
    %592 = vector.broadcast %588 : f32 to vector<1x16x16xf32>
    %593 = arith.mulf %592, %591 : vector<1x16x16xf32>
    %594 = arith.addf %585, %593 : vector<1x16x16xf32>
    %595 = vector.extract_strided_slice %587 {offsets = [1, 0, 0, 0], sizes = [1, 1, 16, 16], strides = [1, 1, 1, 1]} : vector<2x1x16x16xf32> to vector<1x1x16x16xf32>
    %596 = vector.shape_cast %595 : vector<1x1x16x16xf32> to vector<1x16x16xf32>
    %597 = vector.broadcast %589 : f32 to vector<1x16x16xf32>
    %598 = arith.mulf %597, %596 : vector<1x16x16xf32>
    %599 = arith.addf %594, %598 : vector<1x16x16xf32>
    %600 = vector.extract_strided_slice %586 {offsets = [0, 0, 0, 1], sizes = [2, 1, 16, 16], strides = [1, 1, 1, 1]} : vector<2x1x16x22xf32> to vector<2x1x16x16xf32>
    %c29 = arith.constant 29 : index
    %601 = memref.load %arg1[%c29] : memref<98xf32, #tpu.memory_space<smem>>
    %c78 = arith.constant 78 : index
    %602 = memref.load %arg1[%c78] : memref<98xf32, #tpu.memory_space<smem>>
    %603 = vector.extract_strided_slice %600 {offsets = [0, 0, 0, 0], sizes = [1, 1, 16, 16], strides = [1, 1, 1, 1]} : vector<2x1x16x16xf32> to vector<1x1x16x16xf32>
    %604 = vector.shape_cast %603 : vector<1x1x16x16xf32> to vector<1x16x16xf32>
    %605 = vector.broadcast %601 : f32 to vector<1x16x16xf32>
    %606 = arith.mulf %605, %604 : vector<1x16x16xf32>
    %607 = arith.addf %599, %606 : vector<1x16x16xf32>
    %608 = vector.extract_strided_slice %600 {offsets = [1, 0, 0, 0], sizes = [1, 1, 16, 16], strides = [1, 1, 1, 1]} : vector<2x1x16x16xf32> to vector<1x1x16x16xf32>
    %609 = vector.shape_cast %608 : vector<1x1x16x16xf32> to vector<1x16x16xf32>
    %610 = vector.broadcast %602 : f32 to vector<1x16x16xf32>
    %611 = arith.mulf %610, %609 : vector<1x16x16xf32>
    %612 = arith.addf %607, %611 : vector<1x16x16xf32>
    %613 = vector.extract_strided_slice %586 {offsets = [0, 0, 0, 2], sizes = [2, 1, 16, 16], strides = [1, 1, 1, 1]} : vector<2x1x16x22xf32> to vector<2x1x16x16xf32>
    %c30 = arith.constant 30 : index
    %614 = memref.load %arg1[%c30] : memref<98xf32, #tpu.memory_space<smem>>
    %c79 = arith.constant 79 : index
    %615 = memref.load %arg1[%c79] : memref<98xf32, #tpu.memory_space<smem>>
    %616 = vector.extract_strided_slice %613 {offsets = [0, 0, 0, 0], sizes = [1, 1, 16, 16], strides = [1, 1, 1, 1]} : vector<2x1x16x16xf32> to vector<1x1x16x16xf32>
    %617 = vector.shape_cast %616 : vector<1x1x16x16xf32> to vector<1x16x16xf32>
    %618 = vector.broadcast %614 : f32 to vector<1x16x16xf32>
    %619 = arith.mulf %618, %617 : vector<1x16x16xf32>
    %620 = arith.addf %612, %619 : vector<1x16x16xf32>
    %621 = vector.extract_strided_slice %613 {offsets = [1, 0, 0, 0], sizes = [1, 1, 16, 16], strides = [1, 1, 1, 1]} : vector<2x1x16x16xf32> to vector<1x1x16x16xf32>
    %622 = vector.shape_cast %621 : vector<1x1x16x16xf32> to vector<1x16x16xf32>
    %623 = vector.broadcast %615 : f32 to vector<1x16x16xf32>
    %624 = arith.mulf %623, %622 : vector<1x16x16xf32>
    %625 = arith.addf %620, %624 : vector<1x16x16xf32>
    %626 = vector.extract_strided_slice %586 {offsets = [0, 0, 0, 3], sizes = [2, 1, 16, 16], strides = [1, 1, 1, 1]} : vector<2x1x16x22xf32> to vector<2x1x16x16xf32>
    %c31 = arith.constant 31 : index
    %627 = memref.load %arg1[%c31] : memref<98xf32, #tpu.memory_space<smem>>
    %c80_293 = arith.constant 80 : index
    %628 = memref.load %arg1[%c80_293] : memref<98xf32, #tpu.memory_space<smem>>
    %629 = vector.extract_strided_slice %626 {offsets = [0, 0, 0, 0], sizes = [1, 1, 16, 16], strides = [1, 1, 1, 1]} : vector<2x1x16x16xf32> to vector<1x1x16x16xf32>
    %630 = vector.shape_cast %629 : vector<1x1x16x16xf32> to vector<1x16x16xf32>
    %631 = vector.broadcast %627 : f32 to vector<1x16x16xf32>
    %632 = arith.mulf %631, %630 : vector<1x16x16xf32>
    %633 = arith.addf %625, %632 : vector<1x16x16xf32>
    %634 = vector.extract_strided_slice %626 {offsets = [1, 0, 0, 0], sizes = [1, 1, 16, 16], strides = [1, 1, 1, 1]} : vector<2x1x16x16xf32> to vector<1x1x16x16xf32>
    %635 = vector.shape_cast %634 : vector<1x1x16x16xf32> to vector<1x16x16xf32>
    %636 = vector.broadcast %628 : f32 to vector<1x16x16xf32>
    %637 = arith.mulf %636, %635 : vector<1x16x16xf32>
    %638 = arith.addf %633, %637 : vector<1x16x16xf32>
    %639 = vector.extract_strided_slice %586 {offsets = [0, 0, 0, 4], sizes = [2, 1, 16, 16], strides = [1, 1, 1, 1]} : vector<2x1x16x22xf32> to vector<2x1x16x16xf32>
    %c32_294 = arith.constant 32 : index
    %640 = memref.load %arg1[%c32_294] : memref<98xf32, #tpu.memory_space<smem>>
    %c81 = arith.constant 81 : index
    %641 = memref.load %arg1[%c81] : memref<98xf32, #tpu.memory_space<smem>>
    %642 = vector.extract_strided_slice %639 {offsets = [0, 0, 0, 0], sizes = [1, 1, 16, 16], strides = [1, 1, 1, 1]} : vector<2x1x16x16xf32> to vector<1x1x16x16xf32>
    %643 = vector.shape_cast %642 : vector<1x1x16x16xf32> to vector<1x16x16xf32>
    %644 = vector.broadcast %640 : f32 to vector<1x16x16xf32>
    %645 = arith.mulf %644, %643 : vector<1x16x16xf32>
    %646 = arith.addf %638, %645 : vector<1x16x16xf32>
    %647 = vector.extract_strided_slice %639 {offsets = [1, 0, 0, 0], sizes = [1, 1, 16, 16], strides = [1, 1, 1, 1]} : vector<2x1x16x16xf32> to vector<1x1x16x16xf32>
    %648 = vector.shape_cast %647 : vector<1x1x16x16xf32> to vector<1x16x16xf32>
    %649 = vector.broadcast %641 : f32 to vector<1x16x16xf32>
    %650 = arith.mulf %649, %648 : vector<1x16x16xf32>
    %651 = arith.addf %646, %650 : vector<1x16x16xf32>
    %652 = vector.extract_strided_slice %586 {offsets = [0, 0, 0, 5], sizes = [2, 1, 16, 16], strides = [1, 1, 1, 1]} : vector<2x1x16x22xf32> to vector<2x1x16x16xf32>
    %c33 = arith.constant 33 : index
    %653 = memref.load %arg1[%c33] : memref<98xf32, #tpu.memory_space<smem>>
    %c82 = arith.constant 82 : index
    %654 = memref.load %arg1[%c82] : memref<98xf32, #tpu.memory_space<smem>>
    %655 = vector.extract_strided_slice %652 {offsets = [0, 0, 0, 0], sizes = [1, 1, 16, 16], strides = [1, 1, 1, 1]} : vector<2x1x16x16xf32> to vector<1x1x16x16xf32>
    %656 = vector.shape_cast %655 : vector<1x1x16x16xf32> to vector<1x16x16xf32>
    %657 = vector.broadcast %653 : f32 to vector<1x16x16xf32>
    %658 = arith.mulf %657, %656 : vector<1x16x16xf32>
    %659 = arith.addf %651, %658 : vector<1x16x16xf32>
    %660 = vector.extract_strided_slice %652 {offsets = [1, 0, 0, 0], sizes = [1, 1, 16, 16], strides = [1, 1, 1, 1]} : vector<2x1x16x16xf32> to vector<1x1x16x16xf32>
    %661 = vector.shape_cast %660 : vector<1x1x16x16xf32> to vector<1x16x16xf32>
    %662 = vector.broadcast %654 : f32 to vector<1x16x16xf32>
    %663 = arith.mulf %662, %661 : vector<1x16x16xf32>
    %664 = arith.addf %659, %663 : vector<1x16x16xf32>
    %665 = vector.extract_strided_slice %586 {offsets = [0, 0, 0, 6], sizes = [2, 1, 16, 16], strides = [1, 1, 1, 1]} : vector<2x1x16x22xf32> to vector<2x1x16x16xf32>
    %c34 = arith.constant 34 : index
    %666 = memref.load %arg1[%c34] : memref<98xf32, #tpu.memory_space<smem>>
    %c83 = arith.constant 83 : index
    %667 = memref.load %arg1[%c83] : memref<98xf32, #tpu.memory_space<smem>>
    %668 = vector.extract_strided_slice %665 {offsets = [0, 0, 0, 0], sizes = [1, 1, 16, 16], strides = [1, 1, 1, 1]} : vector<2x1x16x16xf32> to vector<1x1x16x16xf32>
    %669 = vector.shape_cast %668 : vector<1x1x16x16xf32> to vector<1x16x16xf32>
    %670 = vector.broadcast %666 : f32 to vector<1x16x16xf32>
    %671 = arith.mulf %670, %669 : vector<1x16x16xf32>
    %672 = arith.addf %664, %671 : vector<1x16x16xf32>
    %673 = vector.extract_strided_slice %665 {offsets = [1, 0, 0, 0], sizes = [1, 1, 16, 16], strides = [1, 1, 1, 1]} : vector<2x1x16x16xf32> to vector<1x1x16x16xf32>
    %674 = vector.shape_cast %673 : vector<1x1x16x16xf32> to vector<1x16x16xf32>
    %675 = vector.broadcast %667 : f32 to vector<1x16x16xf32>
    %676 = arith.mulf %675, %674 : vector<1x16x16xf32>
    %677 = arith.addf %672, %676 : vector<1x16x16xf32>
    %c0_295 = arith.constant 0 : index
    %c0_296 = arith.constant 0 : index
    %c5_297 = arith.constant 5 : index
    %c0_298 = arith.constant 0 : index
    %678 = vector.load %arg11[%c0_295, %c0_296, %c5_297, %c0_298] : memref<2x1x22x22xf32, #tpu.memory_space<vmem>>, vector<2x1x16x22xf32>
    %679 = vector.extract_strided_slice %678 {offsets = [0, 0, 0, 0], sizes = [2, 1, 16, 16], strides = [1, 1, 1, 1]} : vector<2x1x16x22xf32> to vector<2x1x16x16xf32>
    %c35 = arith.constant 35 : index
    %680 = memref.load %arg1[%c35] : memref<98xf32, #tpu.memory_space<smem>>
    %c84 = arith.constant 84 : index
    %681 = memref.load %arg1[%c84] : memref<98xf32, #tpu.memory_space<smem>>
    %682 = vector.extract_strided_slice %679 {offsets = [0, 0, 0, 0], sizes = [1, 1, 16, 16], strides = [1, 1, 1, 1]} : vector<2x1x16x16xf32> to vector<1x1x16x16xf32>
    %683 = vector.shape_cast %682 : vector<1x1x16x16xf32> to vector<1x16x16xf32>
    %684 = vector.broadcast %680 : f32 to vector<1x16x16xf32>
    %685 = arith.mulf %684, %683 : vector<1x16x16xf32>
    %686 = arith.addf %677, %685 : vector<1x16x16xf32>
    %687 = vector.extract_strided_slice %679 {offsets = [1, 0, 0, 0], sizes = [1, 1, 16, 16], strides = [1, 1, 1, 1]} : vector<2x1x16x16xf32> to vector<1x1x16x16xf32>
    %688 = vector.shape_cast %687 : vector<1x1x16x16xf32> to vector<1x16x16xf32>
    %689 = vector.broadcast %681 : f32 to vector<1x16x16xf32>
    %690 = arith.mulf %689, %688 : vector<1x16x16xf32>
    %691 = arith.addf %686, %690 : vector<1x16x16xf32>
    %692 = vector.extract_strided_slice %678 {offsets = [0, 0, 0, 1], sizes = [2, 1, 16, 16], strides = [1, 1, 1, 1]} : vector<2x1x16x22xf32> to vector<2x1x16x16xf32>
    %c36 = arith.constant 36 : index
    %693 = memref.load %arg1[%c36] : memref<98xf32, #tpu.memory_space<smem>>
    %c85 = arith.constant 85 : index
    %694 = memref.load %arg1[%c85] : memref<98xf32, #tpu.memory_space<smem>>
    %695 = vector.extract_strided_slice %692 {offsets = [0, 0, 0, 0], sizes = [1, 1, 16, 16], strides = [1, 1, 1, 1]} : vector<2x1x16x16xf32> to vector<1x1x16x16xf32>
    %696 = vector.shape_cast %695 : vector<1x1x16x16xf32> to vector<1x16x16xf32>
    %697 = vector.broadcast %693 : f32 to vector<1x16x16xf32>
    %698 = arith.mulf %697, %696 : vector<1x16x16xf32>
    %699 = arith.addf %691, %698 : vector<1x16x16xf32>
    %700 = vector.extract_strided_slice %692 {offsets = [1, 0, 0, 0], sizes = [1, 1, 16, 16], strides = [1, 1, 1, 1]} : vector<2x1x16x16xf32> to vector<1x1x16x16xf32>
    %701 = vector.shape_cast %700 : vector<1x1x16x16xf32> to vector<1x16x16xf32>
    %702 = vector.broadcast %694 : f32 to vector<1x16x16xf32>
    %703 = arith.mulf %702, %701 : vector<1x16x16xf32>
    %704 = arith.addf %699, %703 : vector<1x16x16xf32>
    %705 = vector.extract_strided_slice %678 {offsets = [0, 0, 0, 2], sizes = [2, 1, 16, 16], strides = [1, 1, 1, 1]} : vector<2x1x16x22xf32> to vector<2x1x16x16xf32>
    %c37 = arith.constant 37 : index
    %706 = memref.load %arg1[%c37] : memref<98xf32, #tpu.memory_space<smem>>
    %c86 = arith.constant 86 : index
    %707 = memref.load %arg1[%c86] : memref<98xf32, #tpu.memory_space<smem>>
    %708 = vector.extract_strided_slice %705 {offsets = [0, 0, 0, 0], sizes = [1, 1, 16, 16], strides = [1, 1, 1, 1]} : vector<2x1x16x16xf32> to vector<1x1x16x16xf32>
    %709 = vector.shape_cast %708 : vector<1x1x16x16xf32> to vector<1x16x16xf32>
    %710 = vector.broadcast %706 : f32 to vector<1x16x16xf32>
    %711 = arith.mulf %710, %709 : vector<1x16x16xf32>
    %712 = arith.addf %704, %711 : vector<1x16x16xf32>
    %713 = vector.extract_strided_slice %705 {offsets = [1, 0, 0, 0], sizes = [1, 1, 16, 16], strides = [1, 1, 1, 1]} : vector<2x1x16x16xf32> to vector<1x1x16x16xf32>
    %714 = vector.shape_cast %713 : vector<1x1x16x16xf32> to vector<1x16x16xf32>
    %715 = vector.broadcast %707 : f32 to vector<1x16x16xf32>
    %716 = arith.mulf %715, %714 : vector<1x16x16xf32>
    %717 = arith.addf %712, %716 : vector<1x16x16xf32>
    %718 = vector.extract_strided_slice %678 {offsets = [0, 0, 0, 3], sizes = [2, 1, 16, 16], strides = [1, 1, 1, 1]} : vector<2x1x16x22xf32> to vector<2x1x16x16xf32>
    %c38 = arith.constant 38 : index
    %719 = memref.load %arg1[%c38] : memref<98xf32, #tpu.memory_space<smem>>
    %c87 = arith.constant 87 : index
    %720 = memref.load %arg1[%c87] : memref<98xf32, #tpu.memory_space<smem>>
    %721 = vector.extract_strided_slice %718 {offsets = [0, 0, 0, 0], sizes = [1, 1, 16, 16], strides = [1, 1, 1, 1]} : vector<2x1x16x16xf32> to vector<1x1x16x16xf32>
    %722 = vector.shape_cast %721 : vector<1x1x16x16xf32> to vector<1x16x16xf32>
    %723 = vector.broadcast %719 : f32 to vector<1x16x16xf32>
    %724 = arith.mulf %723, %722 : vector<1x16x16xf32>
    %725 = arith.addf %717, %724 : vector<1x16x16xf32>
    %726 = vector.extract_strided_slice %718 {offsets = [1, 0, 0, 0], sizes = [1, 1, 16, 16], strides = [1, 1, 1, 1]} : vector<2x1x16x16xf32> to vector<1x1x16x16xf32>
    %727 = vector.shape_cast %726 : vector<1x1x16x16xf32> to vector<1x16x16xf32>
    %728 = vector.broadcast %720 : f32 to vector<1x16x16xf32>
    %729 = arith.mulf %728, %727 : vector<1x16x16xf32>
    %730 = arith.addf %725, %729 : vector<1x16x16xf32>
    %731 = vector.extract_strided_slice %678 {offsets = [0, 0, 0, 4], sizes = [2, 1, 16, 16], strides = [1, 1, 1, 1]} : vector<2x1x16x22xf32> to vector<2x1x16x16xf32>
    %c39 = arith.constant 39 : index
    %732 = memref.load %arg1[%c39] : memref<98xf32, #tpu.memory_space<smem>>
    %c88 = arith.constant 88 : index
    %733 = memref.load %arg1[%c88] : memref<98xf32, #tpu.memory_space<smem>>
    %734 = vector.extract_strided_slice %731 {offsets = [0, 0, 0, 0], sizes = [1, 1, 16, 16], strides = [1, 1, 1, 1]} : vector<2x1x16x16xf32> to vector<1x1x16x16xf32>
    %735 = vector.shape_cast %734 : vector<1x1x16x16xf32> to vector<1x16x16xf32>
    %736 = vector.broadcast %732 : f32 to vector<1x16x16xf32>
    %737 = arith.mulf %736, %735 : vector<1x16x16xf32>
    %738 = arith.addf %730, %737 : vector<1x16x16xf32>
    %739 = vector.extract_strided_slice %731 {offsets = [1, 0, 0, 0], sizes = [1, 1, 16, 16], strides = [1, 1, 1, 1]} : vector<2x1x16x16xf32> to vector<1x1x16x16xf32>
    %740 = vector.shape_cast %739 : vector<1x1x16x16xf32> to vector<1x16x16xf32>
    %741 = vector.broadcast %733 : f32 to vector<1x16x16xf32>
    %742 = arith.mulf %741, %740 : vector<1x16x16xf32>
    %743 = arith.addf %738, %742 : vector<1x16x16xf32>
    %744 = vector.extract_strided_slice %678 {offsets = [0, 0, 0, 5], sizes = [2, 1, 16, 16], strides = [1, 1, 1, 1]} : vector<2x1x16x22xf32> to vector<2x1x16x16xf32>
    %c40 = arith.constant 40 : index
    %745 = memref.load %arg1[%c40] : memref<98xf32, #tpu.memory_space<smem>>
    %c89 = arith.constant 89 : index
    %746 = memref.load %arg1[%c89] : memref<98xf32, #tpu.memory_space<smem>>
    %747 = vector.extract_strided_slice %744 {offsets = [0, 0, 0, 0], sizes = [1, 1, 16, 16], strides = [1, 1, 1, 1]} : vector<2x1x16x16xf32> to vector<1x1x16x16xf32>
    %748 = vector.shape_cast %747 : vector<1x1x16x16xf32> to vector<1x16x16xf32>
    %749 = vector.broadcast %745 : f32 to vector<1x16x16xf32>
    %750 = arith.mulf %749, %748 : vector<1x16x16xf32>
    %751 = arith.addf %743, %750 : vector<1x16x16xf32>
    %752 = vector.extract_strided_slice %744 {offsets = [1, 0, 0, 0], sizes = [1, 1, 16, 16], strides = [1, 1, 1, 1]} : vector<2x1x16x16xf32> to vector<1x1x16x16xf32>
    %753 = vector.shape_cast %752 : vector<1x1x16x16xf32> to vector<1x16x16xf32>
    %754 = vector.broadcast %746 : f32 to vector<1x16x16xf32>
    %755 = arith.mulf %754, %753 : vector<1x16x16xf32>
    %756 = arith.addf %751, %755 : vector<1x16x16xf32>
    %757 = vector.extract_strided_slice %678 {offsets = [0, 0, 0, 6], sizes = [2, 1, 16, 16], strides = [1, 1, 1, 1]} : vector<2x1x16x22xf32> to vector<2x1x16x16xf32>
    %c41 = arith.constant 41 : index
    %758 = memref.load %arg1[%c41] : memref<98xf32, #tpu.memory_space<smem>>
    %c90 = arith.constant 90 : index
    %759 = memref.load %arg1[%c90] : memref<98xf32, #tpu.memory_space<smem>>
    %760 = vector.extract_strided_slice %757 {offsets = [0, 0, 0, 0], sizes = [1, 1, 16, 16], strides = [1, 1, 1, 1]} : vector<2x1x16x16xf32> to vector<1x1x16x16xf32>
    %761 = vector.shape_cast %760 : vector<1x1x16x16xf32> to vector<1x16x16xf32>
    %762 = vector.broadcast %758 : f32 to vector<1x16x16xf32>
    %763 = arith.mulf %762, %761 : vector<1x16x16xf32>
    %764 = arith.addf %756, %763 : vector<1x16x16xf32>
    %765 = vector.extract_strided_slice %757 {offsets = [1, 0, 0, 0], sizes = [1, 1, 16, 16], strides = [1, 1, 1, 1]} : vector<2x1x16x16xf32> to vector<1x1x16x16xf32>
    %766 = vector.shape_cast %765 : vector<1x1x16x16xf32> to vector<1x16x16xf32>
    %767 = vector.broadcast %759 : f32 to vector<1x16x16xf32>
    %768 = arith.mulf %767, %766 : vector<1x16x16xf32>
    %769 = arith.addf %764, %768 : vector<1x16x16xf32>
    %c0_299 = arith.constant 0 : index
    %c0_300 = arith.constant 0 : index
    %c6_301 = arith.constant 6 : index
    %c0_302 = arith.constant 0 : index
    %770 = vector.load %arg11[%c0_299, %c0_300, %c6_301, %c0_302] : memref<2x1x22x22xf32, #tpu.memory_space<vmem>>, vector<2x1x16x22xf32>
    %771 = vector.extract_strided_slice %770 {offsets = [0, 0, 0, 0], sizes = [2, 1, 16, 16], strides = [1, 1, 1, 1]} : vector<2x1x16x22xf32> to vector<2x1x16x16xf32>
    %c42 = arith.constant 42 : index
    %772 = memref.load %arg1[%c42] : memref<98xf32, #tpu.memory_space<smem>>
    %c91 = arith.constant 91 : index
    %773 = memref.load %arg1[%c91] : memref<98xf32, #tpu.memory_space<smem>>
    %774 = vector.extract_strided_slice %771 {offsets = [0, 0, 0, 0], sizes = [1, 1, 16, 16], strides = [1, 1, 1, 1]} : vector<2x1x16x16xf32> to vector<1x1x16x16xf32>
    %775 = vector.shape_cast %774 : vector<1x1x16x16xf32> to vector<1x16x16xf32>
    %776 = vector.broadcast %772 : f32 to vector<1x16x16xf32>
    %777 = arith.mulf %776, %775 : vector<1x16x16xf32>
    %778 = arith.addf %769, %777 : vector<1x16x16xf32>
    %779 = vector.extract_strided_slice %771 {offsets = [1, 0, 0, 0], sizes = [1, 1, 16, 16], strides = [1, 1, 1, 1]} : vector<2x1x16x16xf32> to vector<1x1x16x16xf32>
    %780 = vector.shape_cast %779 : vector<1x1x16x16xf32> to vector<1x16x16xf32>
    %781 = vector.broadcast %773 : f32 to vector<1x16x16xf32>
    %782 = arith.mulf %781, %780 : vector<1x16x16xf32>
    %783 = arith.addf %778, %782 : vector<1x16x16xf32>
    %784 = vector.extract_strided_slice %770 {offsets = [0, 0, 0, 1], sizes = [2, 1, 16, 16], strides = [1, 1, 1, 1]} : vector<2x1x16x22xf32> to vector<2x1x16x16xf32>
    %c43 = arith.constant 43 : index
    %785 = memref.load %arg1[%c43] : memref<98xf32, #tpu.memory_space<smem>>
    %c92 = arith.constant 92 : index
    %786 = memref.load %arg1[%c92] : memref<98xf32, #tpu.memory_space<smem>>
    %787 = vector.extract_strided_slice %784 {offsets = [0, 0, 0, 0], sizes = [1, 1, 16, 16], strides = [1, 1, 1, 1]} : vector<2x1x16x16xf32> to vector<1x1x16x16xf32>
    %788 = vector.shape_cast %787 : vector<1x1x16x16xf32> to vector<1x16x16xf32>
    %789 = vector.broadcast %785 : f32 to vector<1x16x16xf32>
    %790 = arith.mulf %789, %788 : vector<1x16x16xf32>
    %791 = arith.addf %783, %790 : vector<1x16x16xf32>
    %792 = vector.extract_strided_slice %784 {offsets = [1, 0, 0, 0], sizes = [1, 1, 16, 16], strides = [1, 1, 1, 1]} : vector<2x1x16x16xf32> to vector<1x1x16x16xf32>
    %793 = vector.shape_cast %792 : vector<1x1x16x16xf32> to vector<1x16x16xf32>
    %794 = vector.broadcast %786 : f32 to vector<1x16x16xf32>
    %795 = arith.mulf %794, %793 : vector<1x16x16xf32>
    %796 = arith.addf %791, %795 : vector<1x16x16xf32>
    %797 = vector.extract_strided_slice %770 {offsets = [0, 0, 0, 2], sizes = [2, 1, 16, 16], strides = [1, 1, 1, 1]} : vector<2x1x16x22xf32> to vector<2x1x16x16xf32>
    %c44 = arith.constant 44 : index
    %798 = memref.load %arg1[%c44] : memref<98xf32, #tpu.memory_space<smem>>
    %c93 = arith.constant 93 : index
    %799 = memref.load %arg1[%c93] : memref<98xf32, #tpu.memory_space<smem>>
    %800 = vector.extract_strided_slice %797 {offsets = [0, 0, 0, 0], sizes = [1, 1, 16, 16], strides = [1, 1, 1, 1]} : vector<2x1x16x16xf32> to vector<1x1x16x16xf32>
    %801 = vector.shape_cast %800 : vector<1x1x16x16xf32> to vector<1x16x16xf32>
    %802 = vector.broadcast %798 : f32 to vector<1x16x16xf32>
    %803 = arith.mulf %802, %801 : vector<1x16x16xf32>
    %804 = arith.addf %796, %803 : vector<1x16x16xf32>
    %805 = vector.extract_strided_slice %797 {offsets = [1, 0, 0, 0], sizes = [1, 1, 16, 16], strides = [1, 1, 1, 1]} : vector<2x1x16x16xf32> to vector<1x1x16x16xf32>
    %806 = vector.shape_cast %805 : vector<1x1x16x16xf32> to vector<1x16x16xf32>
    %807 = vector.broadcast %799 : f32 to vector<1x16x16xf32>
    %808 = arith.mulf %807, %806 : vector<1x16x16xf32>
    %809 = arith.addf %804, %808 : vector<1x16x16xf32>
    %810 = vector.extract_strided_slice %770 {offsets = [0, 0, 0, 3], sizes = [2, 1, 16, 16], strides = [1, 1, 1, 1]} : vector<2x1x16x22xf32> to vector<2x1x16x16xf32>
    %c45 = arith.constant 45 : index
    %811 = memref.load %arg1[%c45] : memref<98xf32, #tpu.memory_space<smem>>
    %c94 = arith.constant 94 : index
    %812 = memref.load %arg1[%c94] : memref<98xf32, #tpu.memory_space<smem>>
    %813 = vector.extract_strided_slice %810 {offsets = [0, 0, 0, 0], sizes = [1, 1, 16, 16], strides = [1, 1, 1, 1]} : vector<2x1x16x16xf32> to vector<1x1x16x16xf32>
    %814 = vector.shape_cast %813 : vector<1x1x16x16xf32> to vector<1x16x16xf32>
    %815 = vector.broadcast %811 : f32 to vector<1x16x16xf32>
    %816 = arith.mulf %815, %814 : vector<1x16x16xf32>
    %817 = arith.addf %809, %816 : vector<1x16x16xf32>
    %818 = vector.extract_strided_slice %810 {offsets = [1, 0, 0, 0], sizes = [1, 1, 16, 16], strides = [1, 1, 1, 1]} : vector<2x1x16x16xf32> to vector<1x1x16x16xf32>
    %819 = vector.shape_cast %818 : vector<1x1x16x16xf32> to vector<1x16x16xf32>
    %820 = vector.broadcast %812 : f32 to vector<1x16x16xf32>
    %821 = arith.mulf %820, %819 : vector<1x16x16xf32>
    %822 = arith.addf %817, %821 : vector<1x16x16xf32>
    %823 = vector.extract_strided_slice %770 {offsets = [0, 0, 0, 4], sizes = [2, 1, 16, 16], strides = [1, 1, 1, 1]} : vector<2x1x16x22xf32> to vector<2x1x16x16xf32>
    %c46 = arith.constant 46 : index
    %824 = memref.load %arg1[%c46] : memref<98xf32, #tpu.memory_space<smem>>
    %c95 = arith.constant 95 : index
    %825 = memref.load %arg1[%c95] : memref<98xf32, #tpu.memory_space<smem>>
    %826 = vector.extract_strided_slice %823 {offsets = [0, 0, 0, 0], sizes = [1, 1, 16, 16], strides = [1, 1, 1, 1]} : vector<2x1x16x16xf32> to vector<1x1x16x16xf32>
    %827 = vector.shape_cast %826 : vector<1x1x16x16xf32> to vector<1x16x16xf32>
    %828 = vector.broadcast %824 : f32 to vector<1x16x16xf32>
    %829 = arith.mulf %828, %827 : vector<1x16x16xf32>
    %830 = arith.addf %822, %829 : vector<1x16x16xf32>
    %831 = vector.extract_strided_slice %823 {offsets = [1, 0, 0, 0], sizes = [1, 1, 16, 16], strides = [1, 1, 1, 1]} : vector<2x1x16x16xf32> to vector<1x1x16x16xf32>
    %832 = vector.shape_cast %831 : vector<1x1x16x16xf32> to vector<1x16x16xf32>
    %833 = vector.broadcast %825 : f32 to vector<1x16x16xf32>
    %834 = arith.mulf %833, %832 : vector<1x16x16xf32>
    %835 = arith.addf %830, %834 : vector<1x16x16xf32>
    %836 = vector.extract_strided_slice %770 {offsets = [0, 0, 0, 5], sizes = [2, 1, 16, 16], strides = [1, 1, 1, 1]} : vector<2x1x16x22xf32> to vector<2x1x16x16xf32>
    %c47 = arith.constant 47 : index
    %837 = memref.load %arg1[%c47] : memref<98xf32, #tpu.memory_space<smem>>
    %c96_303 = arith.constant 96 : index
    %838 = memref.load %arg1[%c96_303] : memref<98xf32, #tpu.memory_space<smem>>
    %839 = vector.extract_strided_slice %836 {offsets = [0, 0, 0, 0], sizes = [1, 1, 16, 16], strides = [1, 1, 1, 1]} : vector<2x1x16x16xf32> to vector<1x1x16x16xf32>
    %840 = vector.shape_cast %839 : vector<1x1x16x16xf32> to vector<1x16x16xf32>
    %841 = vector.broadcast %837 : f32 to vector<1x16x16xf32>
    %842 = arith.mulf %841, %840 : vector<1x16x16xf32>
    %843 = arith.addf %835, %842 : vector<1x16x16xf32>
    %844 = vector.extract_strided_slice %836 {offsets = [1, 0, 0, 0], sizes = [1, 1, 16, 16], strides = [1, 1, 1, 1]} : vector<2x1x16x16xf32> to vector<1x1x16x16xf32>
    %845 = vector.shape_cast %844 : vector<1x1x16x16xf32> to vector<1x16x16xf32>
    %846 = vector.broadcast %838 : f32 to vector<1x16x16xf32>
    %847 = arith.mulf %846, %845 : vector<1x16x16xf32>
    %848 = arith.addf %843, %847 : vector<1x16x16xf32>
    %849 = vector.extract_strided_slice %770 {offsets = [0, 0, 0, 6], sizes = [2, 1, 16, 16], strides = [1, 1, 1, 1]} : vector<2x1x16x22xf32> to vector<2x1x16x16xf32>
    %c48_304 = arith.constant 48 : index
    %850 = memref.load %arg1[%c48_304] : memref<98xf32, #tpu.memory_space<smem>>
    %c97 = arith.constant 97 : index
    %851 = memref.load %arg1[%c97] : memref<98xf32, #tpu.memory_space<smem>>
    %852 = vector.extract_strided_slice %849 {offsets = [0, 0, 0, 0], sizes = [1, 1, 16, 16], strides = [1, 1, 1, 1]} : vector<2x1x16x16xf32> to vector<1x1x16x16xf32>
    %853 = vector.shape_cast %852 : vector<1x1x16x16xf32> to vector<1x16x16xf32>
    %854 = vector.broadcast %850 : f32 to vector<1x16x16xf32>
    %855 = arith.mulf %854, %853 : vector<1x16x16xf32>
    %856 = arith.addf %848, %855 : vector<1x16x16xf32>
    %857 = vector.extract_strided_slice %849 {offsets = [1, 0, 0, 0], sizes = [1, 1, 16, 16], strides = [1, 1, 1, 1]} : vector<2x1x16x16xf32> to vector<1x1x16x16xf32>
    %858 = vector.shape_cast %857 : vector<1x1x16x16xf32> to vector<1x16x16xf32>
    %859 = vector.broadcast %851 : f32 to vector<1x16x16xf32>
    %860 = arith.mulf %859, %858 : vector<1x16x16xf32>
    %861 = arith.addf %856, %860 : vector<1x16x16xf32>
    %862 = arith.negf %861 : vector<1x16x16xf32>
    %863 = math.exp %862 : vector<1x16x16xf32>
    %cst_305 = arith.constant 1.000000e+00 : f32
    %864 = vector.broadcast %cst_305 : f32 to vector<1x16x16xf32>
    %865 = arith.addf %864, %863 : vector<1x16x16xf32>
    %866 = arith.divf %864, %865 : vector<1x16x16xf32>
    %c0_306 = arith.constant 0 : index
    %c0_307 = arith.constant 0 : index
    %c0_308 = arith.constant 0 : index
    %867 = vector.load %arg12[%c0_306, %c0_307, %c0_308] : memref<1x16x16xf32, #tpu.memory_space<vmem>>, vector<1x16x16xf32>
    tpu.vector_store %arg12[%c0_306, %c0_307, %c0_308], %866 {strides = array<i32>} : memref<1x16x16xf32, #tpu.memory_space<vmem>>, vector<1x16x16xf32>,
    %c0_309 = arith.constant 0 : index
    %c0_310 = arith.constant 0 : index
    %c0_311 = arith.constant 0 : index
    %868 = vector.load %arg12[%c0_309, %c0_310, %c0_311] : memref<1x16x16xf32, #tpu.memory_space<vmem>>, vector<1x1x16xf32>
    %869 = vector.shape_cast %868 : vector<1x1x16xf32> to vector<1x16xf32>
    %c0_312 = arith.constant 0 : index
    %c0_313 = arith.constant 0 : index
    %c0_314 = arith.constant 0 : index
    %870 = vector.load %arg13[%c0_312, %c0_313, %c0_314] : memref<1x1x256xf32, #tpu.memory_space<vmem>>, vector<1x1x16xf32>
    %871 = vector.shape_cast %870 : vector<1x1x16xf32> to vector<1x16xf32>
    %872 = vector.shape_cast %869 : vector<1x16xf32> to vector<1x1x16xf32>
    tpu.vector_store %arg13[%c0_312, %c0_313, %c0_314], %872 {strides = array<i32>} : memref<1x1x256xf32, #tpu.memory_space<vmem>>, vector<1x1x16xf32>,
    %c0_315 = arith.constant 0 : index
    %c1_316 = arith.constant 1 : index
    %c0_317 = arith.constant 0 : index
    %873 = vector.load %arg12[%c0_315, %c1_316, %c0_317] : memref<1x16x16xf32, #tpu.memory_space<vmem>>, vector<1x1x16xf32>
    %874 = vector.shape_cast %873 : vector<1x1x16xf32> to vector<1x16xf32>
    %c0_318 = arith.constant 0 : index
    %c0_319 = arith.constant 0 : index
    %c16_320 = arith.constant 16 : index
    %875 = vector.load %arg13[%c0_318, %c0_319, %c16_320] : memref<1x1x256xf32, #tpu.memory_space<vmem>>, vector<1x1x16xf32>
    %876 = vector.shape_cast %875 : vector<1x1x16xf32> to vector<1x16xf32>
    %877 = vector.shape_cast %874 : vector<1x16xf32> to vector<1x1x16xf32>
    tpu.vector_store %arg13[%c0_318, %c0_319, %c16_320], %877 {strides = array<i32>} : memref<1x1x256xf32, #tpu.memory_space<vmem>>, vector<1x1x16xf32>,
    %c0_321 = arith.constant 0 : index
    %c2_322 = arith.constant 2 : index
    %c0_323 = arith.constant 0 : index
    %878 = vector.load %arg12[%c0_321, %c2_322, %c0_323] : memref<1x16x16xf32, #tpu.memory_space<vmem>>, vector<1x1x16xf32>
    %879 = vector.shape_cast %878 : vector<1x1x16xf32> to vector<1x16xf32>
    %c0_324 = arith.constant 0 : index
    %c0_325 = arith.constant 0 : index
    %c32_326 = arith.constant 32 : index
    %880 = vector.load %arg13[%c0_324, %c0_325, %c32_326] : memref<1x1x256xf32, #tpu.memory_space<vmem>>, vector<1x1x16xf32>
    %881 = vector.shape_cast %880 : vector<1x1x16xf32> to vector<1x16xf32>
    %882 = vector.shape_cast %879 : vector<1x16xf32> to vector<1x1x16xf32>
    tpu.vector_store %arg13[%c0_324, %c0_325, %c32_326], %882 {strides = array<i32>} : memref<1x1x256xf32, #tpu.memory_space<vmem>>, vector<1x1x16xf32>,
    %c0_327 = arith.constant 0 : index
    %c3_328 = arith.constant 3 : index
    %c0_329 = arith.constant 0 : index
    %883 = vector.load %arg12[%c0_327, %c3_328, %c0_329] : memref<1x16x16xf32, #tpu.memory_space<vmem>>, vector<1x1x16xf32>
    %884 = vector.shape_cast %883 : vector<1x1x16xf32> to vector<1x16xf32>
    %c0_330 = arith.constant 0 : index
    %c0_331 = arith.constant 0 : index
    %c48_332 = arith.constant 48 : index
    %885 = vector.load %arg13[%c0_330, %c0_331, %c48_332] : memref<1x1x256xf32, #tpu.memory_space<vmem>>, vector<1x1x16xf32>
    %886 = vector.shape_cast %885 : vector<1x1x16xf32> to vector<1x16xf32>
    %887 = vector.shape_cast %884 : vector<1x16xf32> to vector<1x1x16xf32>
    tpu.vector_store %arg13[%c0_330, %c0_331, %c48_332], %887 {strides = array<i32>} : memref<1x1x256xf32, #tpu.memory_space<vmem>>, vector<1x1x16xf32>,
    %c0_333 = arith.constant 0 : index
    %c4_334 = arith.constant 4 : index
    %c0_335 = arith.constant 0 : index
    %888 = vector.load %arg12[%c0_333, %c4_334, %c0_335] : memref<1x16x16xf32, #tpu.memory_space<vmem>>, vector<1x1x16xf32>
    %889 = vector.shape_cast %888 : vector<1x1x16xf32> to vector<1x16xf32>
    %c0_336 = arith.constant 0 : index
    %c0_337 = arith.constant 0 : index
    %c64_338 = arith.constant 64 : index
    %890 = vector.load %arg13[%c0_336, %c0_337, %c64_338] : memref<1x1x256xf32, #tpu.memory_space<vmem>>, vector<1x1x16xf32>
    %891 = vector.shape_cast %890 : vector<1x1x16xf32> to vector<1x16xf32>
    %892 = vector.shape_cast %889 : vector<1x16xf32> to vector<1x1x16xf32>
    tpu.vector_store %arg13[%c0_336, %c0_337, %c64_338], %892 {strides = array<i32>} : memref<1x1x256xf32, #tpu.memory_space<vmem>>, vector<1x1x16xf32>,
    %c0_339 = arith.constant 0 : index
    %c5_340 = arith.constant 5 : index
    %c0_341 = arith.constant 0 : index
    %893 = vector.load %arg12[%c0_339, %c5_340, %c0_341] : memref<1x16x16xf32, #tpu.memory_space<vmem>>, vector<1x1x16xf32>
    %894 = vector.shape_cast %893 : vector<1x1x16xf32> to vector<1x16xf32>
    %c0_342 = arith.constant 0 : index
    %c0_343 = arith.constant 0 : index
    %c80_344 = arith.constant 80 : index
    %895 = vector.load %arg13[%c0_342, %c0_343, %c80_344] : memref<1x1x256xf32, #tpu.memory_space<vmem>>, vector<1x1x16xf32>
    %896 = vector.shape_cast %895 : vector<1x1x16xf32> to vector<1x16xf32>
    %897 = vector.shape_cast %894 : vector<1x16xf32> to vector<1x1x16xf32>
    tpu.vector_store %arg13[%c0_342, %c0_343, %c80_344], %897 {strides = array<i32>} : memref<1x1x256xf32, #tpu.memory_space<vmem>>, vector<1x1x16xf32>,
    %c0_345 = arith.constant 0 : index
    %c6_346 = arith.constant 6 : index
    %c0_347 = arith.constant 0 : index
    %898 = vector.load %arg12[%c0_345, %c6_346, %c0_347] : memref<1x16x16xf32, #tpu.memory_space<vmem>>, vector<1x1x16xf32>
    %899 = vector.shape_cast %898 : vector<1x1x16xf32> to vector<1x16xf32>
    %c0_348 = arith.constant 0 : index
    %c0_349 = arith.constant 0 : index
    %c96_350 = arith.constant 96 : index
    %900 = vector.load %arg13[%c0_348, %c0_349, %c96_350] : memref<1x1x256xf32, #tpu.memory_space<vmem>>, vector<1x1x16xf32>
    %901 = vector.shape_cast %900 : vector<1x1x16xf32> to vector<1x16xf32>
    %902 = vector.shape_cast %899 : vector<1x16xf32> to vector<1x1x16xf32>
    tpu.vector_store %arg13[%c0_348, %c0_349, %c96_350], %902 {strides = array<i32>} : memref<1x1x256xf32, #tpu.memory_space<vmem>>, vector<1x1x16xf32>,
    %c0_351 = arith.constant 0 : index
    %c7_352 = arith.constant 7 : index
    %c0_353 = arith.constant 0 : index
    %903 = vector.load %arg12[%c0_351, %c7_352, %c0_353] : memref<1x16x16xf32, #tpu.memory_space<vmem>>, vector<1x1x16xf32>
    %904 = vector.shape_cast %903 : vector<1x1x16xf32> to vector<1x16xf32>
    %c0_354 = arith.constant 0 : index
    %c0_355 = arith.constant 0 : index
    %c112_356 = arith.constant 112 : index
    %905 = vector.load %arg13[%c0_354, %c0_355, %c112_356] : memref<1x1x256xf32, #tpu.memory_space<vmem>>, vector<1x1x16xf32>
    %906 = vector.shape_cast %905 : vector<1x1x16xf32> to vector<1x16xf32>
    %907 = vector.shape_cast %904 : vector<1x16xf32> to vector<1x1x16xf32>
    tpu.vector_store %arg13[%c0_354, %c0_355, %c112_356], %907 {strides = array<i32>} : memref<1x1x256xf32, #tpu.memory_space<vmem>>, vector<1x1x16xf32>,
    %c0_357 = arith.constant 0 : index
    %c8_358 = arith.constant 8 : index
    %c0_359 = arith.constant 0 : index
    %908 = vector.load %arg12[%c0_357, %c8_358, %c0_359] : memref<1x16x16xf32, #tpu.memory_space<vmem>>, vector<1x1x16xf32>
    %909 = vector.shape_cast %908 : vector<1x1x16xf32> to vector<1x16xf32>
    %c0_360 = arith.constant 0 : index
    %c0_361 = arith.constant 0 : index
    %c128_362 = arith.constant 128 : index
    %910 = vector.load %arg13[%c0_360, %c0_361, %c128_362] : memref<1x1x256xf32, #tpu.memory_space<vmem>>, vector<1x1x16xf32>
    %911 = vector.shape_cast %910 : vector<1x1x16xf32> to vector<1x16xf32>
    %912 = vector.shape_cast %909 : vector<1x16xf32> to vector<1x1x16xf32>
    tpu.vector_store %arg13[%c0_360, %c0_361, %c128_362], %912 {strides = array<i32>} : memref<1x1x256xf32, #tpu.memory_space<vmem>>, vector<1x1x16xf32>,
    %c0_363 = arith.constant 0 : index
    %c9_364 = arith.constant 9 : index
    %c0_365 = arith.constant 0 : index
    %913 = vector.load %arg12[%c0_363, %c9_364, %c0_365] : memref<1x16x16xf32, #tpu.memory_space<vmem>>, vector<1x1x16xf32>
    %914 = vector.shape_cast %913 : vector<1x1x16xf32> to vector<1x16xf32>
    %c0_366 = arith.constant 0 : index
    %c0_367 = arith.constant 0 : index
    %c144_368 = arith.constant 144 : index
    %915 = vector.load %arg13[%c0_366, %c0_367, %c144_368] : memref<1x1x256xf32, #tpu.memory_space<vmem>>, vector<1x1x16xf32>
    %916 = vector.shape_cast %915 : vector<1x1x16xf32> to vector<1x16xf32>
    %917 = vector.shape_cast %914 : vector<1x16xf32> to vector<1x1x16xf32>
    tpu.vector_store %arg13[%c0_366, %c0_367, %c144_368], %917 {strides = array<i32>} : memref<1x1x256xf32, #tpu.memory_space<vmem>>, vector<1x1x16xf32>,
    %c0_369 = arith.constant 0 : index
    %c10_370 = arith.constant 10 : index
    %c0_371 = arith.constant 0 : index
    %918 = vector.load %arg12[%c0_369, %c10_370, %c0_371] : memref<1x16x16xf32, #tpu.memory_space<vmem>>, vector<1x1x16xf32>
    %919 = vector.shape_cast %918 : vector<1x1x16xf32> to vector<1x16xf32>
    %c0_372 = arith.constant 0 : index
    %c0_373 = arith.constant 0 : index
    %c160_374 = arith.constant 160 : index
    %920 = vector.load %arg13[%c0_372, %c0_373, %c160_374] : memref<1x1x256xf32, #tpu.memory_space<vmem>>, vector<1x1x16xf32>
    %921 = vector.shape_cast %920 : vector<1x1x16xf32> to vector<1x16xf32>
    %922 = vector.shape_cast %919 : vector<1x16xf32> to vector<1x1x16xf32>
    tpu.vector_store %arg13[%c0_372, %c0_373, %c160_374], %922 {strides = array<i32>} : memref<1x1x256xf32, #tpu.memory_space<vmem>>, vector<1x1x16xf32>,
    %c0_375 = arith.constant 0 : index
    %c11_376 = arith.constant 11 : index
    %c0_377 = arith.constant 0 : index
    %923 = vector.load %arg12[%c0_375, %c11_376, %c0_377] : memref<1x16x16xf32, #tpu.memory_space<vmem>>, vector<1x1x16xf32>
    %924 = vector.shape_cast %923 : vector<1x1x16xf32> to vector<1x16xf32>
    %c0_378 = arith.constant 0 : index
    %c0_379 = arith.constant 0 : index
    %c176_380 = arith.constant 176 : index
    %925 = vector.load %arg13[%c0_378, %c0_379, %c176_380] : memref<1x1x256xf32, #tpu.memory_space<vmem>>, vector<1x1x16xf32>
    %926 = vector.shape_cast %925 : vector<1x1x16xf32> to vector<1x16xf32>
    %927 = vector.shape_cast %924 : vector<1x16xf32> to vector<1x1x16xf32>
    tpu.vector_store %arg13[%c0_378, %c0_379, %c176_380], %927 {strides = array<i32>} : memref<1x1x256xf32, #tpu.memory_space<vmem>>, vector<1x1x16xf32>,
    %c0_381 = arith.constant 0 : index
    %c12_382 = arith.constant 12 : index
    %c0_383 = arith.constant 0 : index
    %928 = vector.load %arg12[%c0_381, %c12_382, %c0_383] : memref<1x16x16xf32, #tpu.memory_space<vmem>>, vector<1x1x16xf32>
    %929 = vector.shape_cast %928 : vector<1x1x16xf32> to vector<1x16xf32>
    %c0_384 = arith.constant 0 : index
    %c0_385 = arith.constant 0 : index
    %c192_386 = arith.constant 192 : index
    %930 = vector.load %arg13[%c0_384, %c0_385, %c192_386] : memref<1x1x256xf32, #tpu.memory_space<vmem>>, vector<1x1x16xf32>
    %931 = vector.shape_cast %930 : vector<1x1x16xf32> to vector<1x16xf32>
    %932 = vector.shape_cast %929 : vector<1x16xf32> to vector<1x1x16xf32>
    tpu.vector_store %arg13[%c0_384, %c0_385, %c192_386], %932 {strides = array<i32>} : memref<1x1x256xf32, #tpu.memory_space<vmem>>, vector<1x1x16xf32>,
    %c0_387 = arith.constant 0 : index
    %c13_388 = arith.constant 13 : index
    %c0_389 = arith.constant 0 : index
    %933 = vector.load %arg12[%c0_387, %c13_388, %c0_389] : memref<1x16x16xf32, #tpu.memory_space<vmem>>, vector<1x1x16xf32>
    %934 = vector.shape_cast %933 : vector<1x1x16xf32> to vector<1x16xf32>
    %c0_390 = arith.constant 0 : index
    %c0_391 = arith.constant 0 : index
    %c208_392 = arith.constant 208 : index
    %935 = vector.load %arg13[%c0_390, %c0_391, %c208_392] : memref<1x1x256xf32, #tpu.memory_space<vmem>>, vector<1x1x16xf32>
    %936 = vector.shape_cast %935 : vector<1x1x16xf32> to vector<1x16xf32>
    %937 = vector.shape_cast %934 : vector<1x16xf32> to vector<1x1x16xf32>
    tpu.vector_store %arg13[%c0_390, %c0_391, %c208_392], %937 {strides = array<i32>} : memref<1x1x256xf32, #tpu.memory_space<vmem>>, vector<1x1x16xf32>,
    %c0_393 = arith.constant 0 : index
    %c14_394 = arith.constant 14 : index
    %c0_395 = arith.constant 0 : index
    %938 = vector.load %arg12[%c0_393, %c14_394, %c0_395] : memref<1x16x16xf32, #tpu.memory_space<vmem>>, vector<1x1x16xf32>
    %939 = vector.shape_cast %938 : vector<1x1x16xf32> to vector<1x16xf32>
    %c0_396 = arith.constant 0 : index
    %c0_397 = arith.constant 0 : index
    %c224_398 = arith.constant 224 : index
    %940 = vector.load %arg13[%c0_396, %c0_397, %c224_398] : memref<1x1x256xf32, #tpu.memory_space<vmem>>, vector<1x1x16xf32>
    %941 = vector.shape_cast %940 : vector<1x1x16xf32> to vector<1x16xf32>
    %942 = vector.shape_cast %939 : vector<1x16xf32> to vector<1x1x16xf32>
    tpu.vector_store %arg13[%c0_396, %c0_397, %c224_398], %942 {strides = array<i32>} : memref<1x1x256xf32, #tpu.memory_space<vmem>>, vector<1x1x16xf32>,
    %c0_399 = arith.constant 0 : index
    %c15_400 = arith.constant 15 : index
    %c0_401 = arith.constant 0 : index
    %943 = vector.load %arg12[%c0_399, %c15_400, %c0_401] : memref<1x16x16xf32, #tpu.memory_space<vmem>>, vector<1x1x16xf32>
    %944 = vector.shape_cast %943 : vector<1x1x16xf32> to vector<1x16xf32>
    %c0_402 = arith.constant 0 : index
    %c0_403 = arith.constant 0 : index
    %c240_404 = arith.constant 240 : index
    %945 = vector.load %arg13[%c0_402, %c0_403, %c240_404] : memref<1x1x256xf32, #tpu.memory_space<vmem>>, vector<1x1x16xf32>
    %946 = vector.shape_cast %945 : vector<1x1x16xf32> to vector<1x16xf32>
    %947 = vector.shape_cast %944 : vector<1x16xf32> to vector<1x1x16xf32>
    tpu.vector_store %arg13[%c0_402, %c0_403, %c240_404], %947 {strides = array<i32>} : memref<1x1x256xf32, #tpu.memory_space<vmem>>, vector<1x1x16xf32>,
    %c0_405 = arith.constant 0 : index
    %c0_406 = arith.constant 0 : index
    %c0_407 = arith.constant 0 : index
    %948 = vector.load %arg13[%c0_405, %c0_406, %c0_407] : memref<1x1x256xf32, #tpu.memory_space<vmem>>, vector<1x1x256xf32>
    %c0_408 = arith.constant 0 : index
    %c0_409 = arith.constant 0 : index
    %c0_410 = arith.constant 0 : index
    %949 = vector.load %arg7[%c0_408, %c0_409, %c0_410] : memref<1x32x256xf32, #tpu.memory_space<vmem>>, vector<1x32x256xf32>
    %c0_411 = arith.constant 0 : index
    %c0_412 = arith.constant 0 : index
    %c0_413 = arith.constant 0 : index
    %950 = vector.load %arg9[%c0_411, %c0_412, %c0_413] : memref<1x32x1xf32, #tpu.memory_space<vmem>>, vector<1x32x1xf32>
    %951 = vector.broadcast %950 : vector<1x32x1xf32> to vector<1x32x256xf32>
    %952 = arith.mulf %949, %951 : vector<1x32x256xf32>
    %953 = vector.broadcast %948 : vector<1x1x256xf32> to vector<1x32x256xf32>
    %954 = arith.mulf %952, %953 : vector<1x32x256xf32>
    %c0_414 = arith.constant 0 : index
    %c0_415 = arith.constant 0 : index
    %c0_416 = arith.constant 0 : index
    %955 = vector.load %arg8[%c0_414, %c0_415, %c0_416] : memref<1x32x256xf32, #tpu.memory_space<vmem>>, vector<1x32x256xf32>
    tpu.vector_store %arg8[%c0_414, %c0_415, %c0_416], %954 {strides = array<i32>} : memref<1x32x256xf32, #tpu.memory_space<vmem>>, vector<1x32x256xf32>,
    return
  }
  func.func @transform_0(%arg0: i32) -> i32 {
    %c0_i32 = arith.constant 0 : i32
    %c0_i32_0 = arith.constant 0 : i32
    return %c0_i32 : i32
  }
  func.func @transform_1(%arg0: i32) -> i32 {
    %c0_i32 = arith.constant 0 : i32
    %c0_i32_0 = arith.constant 0 : i32
    return %c0_i32 : i32
  }
  func.func @transform_2(%arg0: i32) -> (i32, i32) {
    %c0_i32 = arith.constant 0 : i32
    %c0_i32_0 = arith.constant 0 : i32
    %c0_i32_1 = arith.constant 0 : i32
    return %c0_i32, %c0_i32_0 : i32, i32
  }
  func.func @transform_3(%arg0: i32) -> (i32, i32) {
    %c0_i32 = arith.constant 0 : i32
    %c0_i32_0 = arith.constant 0 : i32
    %c0_i32_1 = arith.constant 0 : i32
    return %c0_i32, %c0_i32_0 : i32, i32
  }
  func.func @transform_4(%arg0: i32) -> (i32, i32) {
    %c0_i32 = arith.constant 0 : i32
    %c0_i32_0 = arith.constant 0 : i32
    %c0_i32_1 = arith.constant 0 : i32
    return %c0_i32, %c0_i32_0 : i32, i32
  }
  func.func @transform_5(%arg0: i32) -> (i32, i32) {
    %c0_i32 = arith.constant 0 : i32
    %c0_i32_0 = arith.constant 0 : i32
    %c0_i32_1 = arith.constant 0 : i32
    return %c0_i32, %c0_i32_0 : i32, i32
  }
  func.func @transform_6(%arg0: i32) -> (i32, i32, i32) {
    %c0_i32 = arith.constant 0 : i32
    %c0_i32_0 = arith.constant 0 : i32
    %c0_i32_1 = arith.constant 0 : i32
    return %arg0, %c0_i32, %c0_i32_0 : i32, i32, i32
  }
  func.func @transform_7(%arg0: i32) -> (i32, i32, i32) {
    %c0_i32 = arith.constant 0 : i32
    %c0_i32_0 = arith.constant 0 : i32
    %c0_i32_1 = arith.constant 0 : i32
    return %arg0, %c0_i32, %c0_i32_0 : i32, i32, i32
  }
}

</mosaic_0001>

<llo_original>
// kernel: tpu_custom_call.1
$region0: #{tpu_custom_call.1}
  #allocation0 [shape = 'u32[]', space=smem, size = 0x4, offset = 0x4, fixed_abs, tag = 'smem constant byte address 0x4 - core index']
  #allocation1 [shape = 'u32[72,128]{1,0:T(1,128)}', space=vmem, size = 0x9000, scoped, tag = 'internal scratch']
  #allocation2 [shape = 'f32[1,32,1]{2,1,0:T(8,128)}', space=vmem, size = 0x4000, scoped, tag = 'scratch operand']
  #allocation3 [shape = 'f32[2,1,256]{2,1,0:T(1,128)}', space=vmem, size = 0x800, scoped, tag = 'scratch operand']
  #allocation4 [shape = 'f32[2,1,22,22]{3,2,1,0:T(8,128)}', space=vmem, size = 0x6000, scoped, tag = 'scratch operand']
  #allocation5 [shape = 'f32[1,16,16]{2,1,0:T(8,128)}', space=vmem, size = 0x2000, scoped, tag = 'scratch operand']
  #allocation6 [shape = 'f32[1,1,256]{2,1,0:T(1,128)}', space=vmem, size = 0x400, scoped, tag = 'scratch operand']
  #allocation7 [shape = 'f32[1]{0:T(128)S(6)}', space=smem, size = 0x200, scoped, tag = 'scoped memory for tpu_custom_call.1']
  %s0 = inlined_call_operand.vmem [shape: f32[98], index: 0, kind: input, shape index: {}]
  %s1 = inlined_call_operand.<no memory space> [shape: f32[1], index: 1, kind: input, shape index: {}]
  %s2 = inlined_call_operand.vmem [shape: f32[32,2], index: 2, kind: input, shape index: {}]
  %s3 = inlined_call_operand.vmem [shape: f32[1,2], index: 3, kind: input, shape index: {}]
  %s4 = inlined_call_operand.vmem [shape: f32[32,2], index: 4, kind: input, shape index: {}]
  %s5 = inlined_call_operand.vmem [shape: f32[32,1], index: 5, kind: input, shape index: {}]
  %s6 = inlined_call_operand.hbm [shape: f32[2,32,256], index: 6, kind: input, shape index: {}]
  %s7 = inlined_call_operand.hbm [shape: f32[2,32,256], index: 7, kind: output, shape index: {}]
  %s8 = sld [smem:[#allocation0]]
  $region69: #{tpu_custom_call.1} parent=0
    _
  %s10 = ssub.s32 1, %s8
  %s11 = scalar_select 0, %s10, %s8
  %12 = sst [smem:[#allocation7]] %s1
  $region1: #{tpu_custom_call.1} parent=0
    #allocation8 [shape = 'u8[512]{0}', space=smem, size = 0x200, scoped, tag = 'input window, operand 0, single buffered']
    #allocation9 [shape = 's32[2]{0}', space=sflag, size = 0x8, scoped, tag = 'scoped memory for tpu_custom_call.1']
    #allocation10 [shape = 's32[2]{0}', space=sflag, size = 0x8, scoped, tag = 'scoped memory for tpu_custom_call.1']
    #allocation11 [shape = 's32[2]{0}', space=sflag, size = 0x8, scoped, tag = 'scoped memory for tpu_custom_call.1']
    #allocation12 [shape = 'u8[65536]{0}', space=vmem, size = 0x10000, scoped, tag = 'input window, operand 6']
    #allocation13 [shape = 'u8[65536]{0}', space=vmem, size = 0x10000, scoped, tag = 'output window, operand 0']
    %13 = vsyncpa [#allocation11], 0
    %14 = vsyncpa [#allocation9], 0
    %s15 = scalar_lea.sflag [#allocation9], 1
    %16 = vsyncpa %s15, 0
    %17 = vsyncpa [#allocation10], 0
    %s18 = scalar_lea.sflag [#allocation10], 1
    %19 = vsyncpa %s18, 0
    loop: start=0, step=1, limit=4
    $region2: #{tpu_custom_call.1} parent=1 // loop_pre_header
      _
    $region3: #{tpu_custom_call.1} parent=1 // loop_header
      %s21 = sphi 0, %s25
      %p22 = scmp.ge.s32.totalorder %s21, 4
      %s29 = sphi 0, %s29
      %s31 = sphi 0, %s29
      %s32 = sphi 0, %s31
      %s46 = sphi 0, %s32
      %s50 = sphi 0, %s50
      %s52 = sphi 0, %s50
      %s53 = sphi 0, %s52
      %s67 = sphi 0, %s53
      %s71 = sphi 0, %s71
      %s73 = sphi 0, %s71
      %s74 = sphi 0, %s73
      %s88 = sphi 0, %s74
      %s92 = sphi 0, %s92
      %s94 = sphi 0, %s92
      %s95 = sphi 0, %s94
      %s109 = sphi 0, %s95
      %s113 = sphi 0, %s113
      %s115 = sphi 0, %s113
      %s116 = sphi 0, %s115
      %s130 = sphi 0, %s116
      %s134 = sphi 0, %s134
      %s136 = sphi 0, %s134
      %s137 = sphi 0, %s136
      %s151 = sphi 0, %s137
      %s157 = sphi 0, %s159
      %s160 = sphi 0, %s157
      %s161 = sphi 0, %s160
      %s177 = sphi 0, %s161
      %s183 = sphi 0, %s185
      %s186 = sphi 0, %s183
      %s187 = sphi 0, %s186
      %s203 = sphi 0, %s187
    $region4: #{tpu_custom_call.1} parent=1 // loop_header_branch
      %24 = sbr.rel (%p22) target = $region8
    $region5: #{tpu_custom_call.1} parent=1 // loop_body
      %s26 = ssub.s32 %s21, 1
      %s27 = ssub.s32 %s21, 2
      %s28 = sadd.s32 %s21, 1
      %s30 = sadd.s32 %s29, 1
      %p33 = scmp.eq.s32.totalorder %s21, 1
      %p34 = scmp.ne.s32.totalorder %s29, %s31
      %p35 = scmp.eq.s32.totalorder %s21, 0
      %p36 = por %p34, %p35
      %p37 = scmp.ne.s32.totalorder %s29, %s31
      %p38 = scmp.eq.s32.totalorder %s26, 1
      %p39 = por %p37, %p38
      %p40 = scmp.ne.s32.totalorder %s31, %s32
      %p41 = scmp.eq.s32.totalorder %s26, 0
      %p42 = por %p40, %p41
      %p43 = scmp.ne.s32.totalorder %s31, %s32
      %p44 = scmp.eq.s32.totalorder %s27, 1
      %p45 = por %p43, %p44
      %p47 = scmp.ne.s32.totalorder %s32, %s46
      %p48 = scmp.eq.s32.totalorder %s27, 0
      %p49 = por %p47, %p48
      %s51 = sadd.s32 %s50, 1
      %p54 = scmp.eq.s32.totalorder %s21, 1
      %p55 = scmp.ne.s32.totalorder %s50, %s52
      %p56 = scmp.eq.s32.totalorder %s21, 0
      %p57 = por %p55, %p56
      %p58 = scmp.ne.s32.totalorder %s50, %s52
      %p59 = scmp.eq.s32.totalorder %s26, 1
      %p60 = por %p58, %p59
      %p61 = scmp.ne.s32.totalorder %s52, %s53
      %p62 = scmp.eq.s32.totalorder %s26, 0
      %p63 = por %p61, %p62
      %p64 = scmp.ne.s32.totalorder %s52, %s53
      %p65 = scmp.eq.s32.totalorder %s27, 1
      %p66 = por %p64, %p65
      %p68 = scmp.ne.s32.totalorder %s53, %s67
      %p69 = scmp.eq.s32.totalorder %s27, 0
      %p70 = por %p68, %p69
      %s72 = sadd.s32 %s71, 1
      %p75 = scmp.eq.s32.totalorder %s21, 1
      %p76 = scmp.ne.s32.totalorder %s71, %s73
      %p77 = scmp.eq.s32.totalorder %s21, 0
      %p78 = por %p76, %p77
      %p79 = scmp.ne.s32.totalorder %s71, %s73
      %p80 = scmp.eq.s32.totalorder %s26, 1
      %p81 = por %p79, %p80
      %p82 = scmp.ne.s32.totalorder %s73, %s74
      %p83 = scmp.eq.s32.totalorder %s26, 0
      %p84 = por %p82, %p83
      %p85 = scmp.ne.s32.totalorder %s73, %s74
      %p86 = scmp.eq.s32.totalorder %s27, 1
      %p87 = por %p85, %p86
      %p89 = scmp.ne.s32.totalorder %s74, %s88
      %p90 = scmp.eq.s32.totalorder %s27, 0
      %p91 = por %p89, %p90
      %s93 = sadd.s32 %s92, 1
      %p96 = scmp.eq.s32.totalorder %s21, 1
      %p97 = scmp.ne.s32.totalorder %s92, %s94
      %p98 = scmp.eq.s32.totalorder %s21, 0
      %p99 = por %p97, %p98
      %p100 = scmp.ne.s32.totalorder %s92, %s94
      %p101 = scmp.eq.s32.totalorder %s26, 1
      %p102 = por %p100, %p101
      %p103 = scmp.ne.s32.totalorder %s94, %s95
      %p104 = scmp.eq.s32.totalorder %s26, 0
      %p105 = por %p103, %p104
      %p106 = scmp.ne.s32.totalorder %s94, %s95
      %p107 = scmp.eq.s32.totalorder %s27, 1
      %p108 = por %p106, %p107
      %p110 = scmp.ne.s32.totalorder %s95, %s109
      %p111 = scmp.eq.s32.totalorder %s27, 0
      %p112 = por %p110, %p111
      %s114 = sadd.s32 %s113, 1
      %p117 = scmp.eq.s32.totalorder %s21, 1
      %p118 = scmp.ne.s32.totalorder %s113, %s115
      %p119 = scmp.eq.s32.totalorder %s21, 0
      %p120 = por %p118, %p119
      %p121 = scmp.ne.s32.totalorder %s113, %s115
      %p122 = scmp.eq.s32.totalorder %s26, 1
      %p123 = por %p121, %p122
      %p124 = scmp.ne.s32.totalorder %s115, %s116
      %p125 = scmp.eq.s32.totalorder %s26, 0
      %p126 = por %p124, %p125
      %p127 = scmp.ne.s32.totalorder %s115, %s116
      %p128 = scmp.eq.s32.totalorder %s27, 1
      %p129 = por %p127, %p128
      %p131 = scmp.ne.s32.totalorder %s116, %s130
      %p132 = scmp.eq.s32.totalorder %s27, 0
      %p133 = por %p131, %p132
      %s135 = sadd.s32 %s134, 1
      %p138 = scmp.eq.s32.totalorder %s21, 1
      %p139 = scmp.ne.s32.totalorder %s134, %s136
      %p140 = scmp.eq.s32.totalorder %s21, 0
      %p141 = por %p139, %p140
      %p142 = scmp.ne.s32.totalorder %s134, %s136
      %p143 = scmp.eq.s32.totalorder %s26, 1
      %p144 = por %p142, %p143
      %p145 = scmp.ne.s32.totalorder %s136, %s137
      %p146 = scmp.eq.s32.totalorder %s26, 0
      %p147 = por %p145, %p146
      %p148 = scmp.ne.s32.totalorder %s136, %s137
      %p149 = scmp.eq.s32.totalorder %s27, 1
      %p150 = por %p148, %p149
      %p152 = scmp.ne.s32.totalorder %s137, %s151
      %p153 = scmp.eq.s32.totalorder %s27, 0
      %p154 = por %p152, %p153
      %s155 = ssub.s32 %s21, %s28
      %p156 = scmp.eq.s32.totalorder %s155, 0
      %s158 = sadd.s32 %s157, 1
      %s159 = scalar_select %p156, %s157, %s158
      %p162 = pneg %p156
      %p163 = scmp.eq.s32.totalorder %s21, 1
      %p164 = por %p162, %p163
      %p165 = scmp.ne.s32.totalorder %s157, %s160
      %p166 = scmp.eq.s32.totalorder %s21, 0
      %p167 = por %p165, %p166
      %p168 = scmp.ne.s32.totalorder %s157, %s160
      %p169 = scmp.eq.s32.totalorder %s26, 1
      %p170 = por %p168, %p169
      %p171 = scmp.ne.s32.totalorder %s160, %s161
      %p172 = scmp.eq.s32.totalorder %s26, 0
      %p173 = por %p171, %p172
      %p174 = scmp.ne.s32.totalorder %s160, %s161
      %p175 = scmp.eq.s32.totalorder %s27, 1
      %p176 = por %p174, %p175
      %p178 = scmp.ne.s32.totalorder %s161, %s177
      %p179 = scmp.eq.s32.totalorder %s27, 0
      %p180 = por %p178, %p179
      %s181 = ssub.s32 %s21, %s28
      %p182 = scmp.eq.s32.totalorder %s181, 0
      %s184 = sadd.s32 %s183, 1
      %s185 = scalar_select %p182, %s183, %s184
      %p188 = pneg %p182
      %p189 = scmp.eq.s32.totalorder %s21, 1
      %p190 = por %p188, %p189
      %p191 = scmp.ne.s32.totalorder %s183, %s186
      %p192 = scmp.eq.s32.totalorder %s21, 0
      %p193 = por %p191, %p192
      %p194 = scmp.ne.s32.totalorder %s183, %s186
      %p195 = scmp.eq.s32.totalorder %s26, 1
      %p196 = por %p194, %p195
      %p197 = scmp.ne.s32.totalorder %s186, %s187
      %p198 = scmp.eq.s32.totalorder %s26, 0
      %p199 = por %p197, %p198
      %p200 = scmp.ne.s32.totalorder %s186, %s187
      %p201 = scmp.eq.s32.totalorder %s27, 1
      %p202 = por %p200, %p201
      %p204 = scmp.ne.s32.totalorder %s187, %s203
      %p205 = scmp.eq.s32.totalorder %s27, 0
      %p206 = por %p204, %p205
      %p207 = scmp.le.s32.totalorder 1, %s21
      %p208 = scmp.lt.s32.totalorder %s21, 3
      %p209 = pnand %p207, %p208
      %p210 = pneg %p209
      // Predicated region
      $region9: #{tpu_custom_call.1} parent=5 // pred_check
        _
      $region10: #{tpu_custom_call.1} parent=5 // pred_check_branch
        %212 = sbr.rel (%p209) target = $region12
      $region11: #{tpu_custom_call.1} parent=5 // pred_region
        %s213 = ssub.s32 %s21, 1
        // Predicated region
        $region13: #{tpu_custom_call.1} parent=11 // pred_check
          %p214 = pneg %p42
        $region14: #{tpu_custom_call.1} parent=11 // pred_check_branch
          %216 = sbr.rel (%p214) target = $region16
        $region15: #{tpu_custom_call.1} parent=11 // pred_region
          %218 = vsyncadd [#allocation11], 0
          %s220 = sshll.u32 %s0, 4
          %s221 = int_to_ptr.vmem [resolvable:$true] %s220
          %223 = dma.vmem_to_smem %s221, 16, [#allocation8], [#allocation11]
        $region16: #{tpu_custom_call.1} parent=11 // pred_fallthru
          _
        // Predicated region
        $region17: #{tpu_custom_call.1} parent=11 // pred_check
          %p224 = pneg %p63
        $region18: #{tpu_custom_call.1} parent=11 // pred_check_branch
          %226 = sbr.rel (%p224) target = $region20
        $region19: #{tpu_custom_call.1} parent=11 // pred_region
          _
        $region20: #{tpu_custom_call.1} parent=11 // pred_fallthru
          _
        // Predicated region
        $region21: #{tpu_custom_call.1} parent=11 // pred_check
          %p227 = pneg %p84
        $region22: #{tpu_custom_call.1} parent=11 // pred_check_branch
          %229 = sbr.rel (%p227) target = $region24
        $region23: #{tpu_custom_call.1} parent=11 // pred_region
          _
        $region24: #{tpu_custom_call.1} parent=11 // pred_fallthru
          _
        // Predicated region
        $region25: #{tpu_custom_call.1} parent=11 // pred_check
          %p230 = pneg %p105
        $region26: #{tpu_custom_call.1} parent=11 // pred_check_branch
          %232 = sbr.rel (%p230) target = $region28
        $region27: #{tpu_custom_call.1} parent=11 // pred_region
          _
        $region28: #{tpu_custom_call.1} parent=11 // pred_fallthru
          _
        // Predicated region
        $region29: #{tpu_custom_call.1} parent=11 // pred_check
          %p233 = pneg %p126
        $region30: #{tpu_custom_call.1} parent=11 // pred_check_branch
          %235 = sbr.rel (%p233) target = $region32
        $region31: #{tpu_custom_call.1} parent=11 // pred_region
          _
        $region32: #{tpu_custom_call.1} parent=11 // pred_fallthru
          _
        // Predicated region
        $region33: #{tpu_custom_call.1} parent=11 // pred_check
          %p236 = pneg %p147
        $region34: #{tpu_custom_call.1} parent=11 // pred_check_branch
          %238 = sbr.rel (%p236) target = $region36
        $region35: #{tpu_custom_call.1} parent=11 // pred_region
          _
        $region36: #{tpu_custom_call.1} parent=11 // pred_fallthru
          _
      $region12: #{tpu_custom_call.1} parent=5 // pred_fallthru
        _
      %p239 = scmp.lt.s32.totalorder %s21, 2
      // Predicated region
      $region37: #{tpu_custom_call.1} parent=5 // pred_check
        %p240 = pneg %p239
      $region38: #{tpu_custom_call.1} parent=5 // pred_check_branch
        %242 = sbr.rel (%p240) target = $region40
      $region39: #{tpu_custom_call.1} parent=5 // pred_region
        // Predicated region
        $region41: #{tpu_custom_call.1} parent=39 // pred_check
          %p243 = pneg %p167
        $region42: #{tpu_custom_call.1} parent=39 // pred_check_branch
          %245 = sbr.rel (%p243) target = $region44
        $region43: #{tpu_custom_call.1} parent=39 // pred_region
          %s246 = sand.u32 %s157, 1
          %s247 = scalar_lea.sflag [#allocation9], %s246
          %s248 = sand.u32 %s157, 1
          %s249 = smul.addr %s248, 64
          %s250 = scalar_lea.vmem [#allocation12], %s249
          %252 = vsyncadd %s247, 0
          %s253 = smul.addr %s21, 8
          %s254 = smul.addr %s253, 8
          %s255 = scalar_lea.hbm %s6, %s254
          %s256 = sshll.u32 %s255, 4
          %s257 = int_to_ptr.hbm [resolvable:$true] %s256
          %s258 = sshll.u32 %s250, 4
          %s259 = int_to_ptr.vmem [resolvable:$true] %s258
          %264 = dma.hbm_to_vmem [thread:$0]  %s257, 1024, %s259, %s247, 256, 256, 16
        $region44: #{tpu_custom_call.1} parent=39 // pred_fallthru
          _
      $region40: #{tpu_custom_call.1} parent=5 // pred_fallthru
        _
      %p265 = scmp.le.s32.totalorder 1, %s21
      %p266 = scmp.lt.s32.totalorder %s21, 3
      %p267 = pnand %p265, %p266
      %p268 = pneg %p267
      // Predicated region
      $region45: #{tpu_custom_call.1} parent=5 // pred_check
        _
      $region46: #{tpu_custom_call.1} parent=5 // pred_check_branch
        %270 = sbr.rel (%p267) target = $region48
      $region47: #{tpu_custom_call.1} parent=5 // pred_region
        %s271 = ssub.s32 %s21, 1
        // Predicated region
        $region49: #{tpu_custom_call.1} parent=47 // pred_check
          %p272 = pneg %p42
        $region50: #{tpu_custom_call.1} parent=47 // pred_check_branch
          %274 = sbr.rel (%p272) target = $region52
        $region51: #{tpu_custom_call.1} parent=47 // pred_region
          %276 = dma.done [#allocation11], 16
        $region52: #{tpu_custom_call.1} parent=47 // pred_fallthru
          _
        %s277 = sand.u32 %s160, 1
        %s278 = scalar_lea.sflag [#allocation9], %s277
        %s279 = sand.u32 %s160, 1
        %s280 = smul.addr %s279, 64
        %s281 = scalar_lea.vmem [#allocation12], %s280
        // Predicated region
        $region53: #{tpu_custom_call.1} parent=47 // pred_check
          %p282 = pneg %p173
        $region54: #{tpu_custom_call.1} parent=47 // pred_check_branch
          %284 = sbr.rel (%p282) target = $region56
        $region55: #{tpu_custom_call.1} parent=47 // pred_region
          %286 = dma.done %s278, 1024
        $region56: #{tpu_custom_call.1} parent=47 // pred_fallthru
          _
        %287 = sfence
        %p288 = pneg %p42
        %p289 = pneg %p39
        %p290 = pneg %p63
        %p291 = pneg %p60
        %p292 = pneg %p84
        %p293 = pneg %p81
        %p294 = pneg %p105
        %p295 = pneg %p102
        %p296 = pneg %p126
        %p297 = pneg %p123
        %p298 = pneg %p147
        %p299 = pneg %p144
        %s300 = sand.u32 %s160, 1
        %s301 = scalar_lea.sflag [#allocation9], %s300
        %s302 = sand.u32 %s160, 1
        %s303 = smul.addr %s302, 64
        %s304 = scalar_lea.vmem [#allocation12], %s303
        %p305 = pneg %p173
        %p306 = pneg %p170
        %p307 = pneg %p199
        %p308 = pneg %p196
        %s309 = sand.u32 %s186, 1
        %s310 = scalar_lea.sflag [#allocation10], %s309
        %s311 = sand.u32 %s186, 1
        %s312 = smul.addr %s311, 64
        %s313 = scalar_lea.vmem [#allocation13], %s312
        %vm314 = vcmask 174080
        %315 = vst.msk [vmem:[#allocation4] sm:$0x7] %vm314, 0.0
        %316 = vst.msk [vmem:[#allocation4 + $0x18] sm:$0x7] %vm314, 0.0
        %317 = vst.msk [vmem:[#allocation4 + $0x13] sm:$0x7] %vm314, 0.0
        %318 = vst.msk [vmem:[#allocation4 + $0x2b] sm:$0x7] %vm314, 0.0
        %vm319 = vcmask 23552
        %320 = vst.msk [vmem:[#allocation4] sm:$0xff] %vm319, 0.0
        %321 = vst.msk [vmem:[#allocation4 + $0x8] sm:$0xff] %vm319, 0.0
        %vm322 = vcmask 21504
        %323 = vst.msk [vmem:[#allocation4 + $0x10] sm:$0x3f] %vm322, 0.0
        %324 = vst.msk [vmem:[#allocation4 + $0x18] sm:$0xff] %vm319, 0.0
        %325 = vst.msk [vmem:[#allocation4 + $0x20] sm:$0xff] %vm319, 0.0
        %326 = vst.msk [vmem:[#allocation4 + $0x28] sm:$0x3f] %vm322, 0.0
        %vm327 = vcmask 179352
        %328 = vst.msk [vmem:[#allocation4] sm:$0xff] %vm327, 0.0
        %329 = vst.msk [vmem:[#allocation4 + $0x8] sm:$0xff] %vm327, 0.0
        %vm330 = vcmask 177304
        %331 = vst.msk [vmem:[#allocation4 + $0x10] sm:$0x3f] %vm330, 0.0
        %332 = vst.msk [vmem:[#allocation4 + $0x18] sm:$0xff] %vm327, 0.0
        %333 = vst.msk [vmem:[#allocation4 + $0x20] sm:$0xff] %vm327, 0.0
        %334 = vst.msk [vmem:[#allocation4 + $0x28] sm:$0x3f] %vm330, 0.0
        %v335 = vld [vmem:[%s281] sm:$0xff]
        %v336 = vld [vmem:[%s281 + $0x8] sm:$0xff]
        %v337 = vld [vmem:[%s281 + $0x10] sm:$0xff]
        %v338 = vld [vmem:[%s281 + $0x18] sm:$0xff]
        %v339 = vld [vmem:[%s281 + $0x20] sm:$0xff]
        %v340 = vld [vmem:[%s281 + $0x28] sm:$0xff]
        %v341 = vld [vmem:[%s281 + $0x30] sm:$0xff]
        %v342 = vld [vmem:[%s281 + $0x38] sm:$0xff]
        %v343 = vadd.f32 %v335, %v336
        %344 = vadd.xlane.f32.xlu0 %v343
        %v345 = vpop.xlane.xlu0 %344
        %v346 = vadd.f32 %v337, %v338
        %347 = vadd.xlane.f32.xlu0 %v346
        %v348 = vpop.xlane.xlu0 %347
        %v349 = vadd.f32 %v339, %v340
        %350 = vadd.xlane.f32.xlu0 %v349
        %v351 = vpop.xlane.xlu0 %350
        %v352 = vadd.f32 %v341, %v342
        %353 = vadd.xlane.f32.xlu0 %v352
        %v354 = vpop.xlane.xlu0 %353
        %vm355 = vcmask 7168
        %356 = vst.msk [vmem:[#allocation2] sm:$0xff] %vm355, %v345
        %357 = vst.msk [vmem:[#allocation2 + $0x8] sm:$0xff] %vm355, %v348
        %358 = vst.msk [vmem:[#allocation2 + $0x10] sm:$0xff] %vm355, %v351
        %359 = vst.msk [vmem:[#allocation2 + $0x18] sm:$0xff] %vm355, %v354
        %v360 = vld [vmem:[%s2] sm:$0xff]
        %v361 = vld [vmem:[%s2 + $0x8] sm:$0xff]
        %v362 = vld [vmem:[%s2 + $0x10] sm:$0xff]
        %v363 = vld [vmem:[%s2 + $0x18] sm:$0xff]
        %v364 = vld [vmem:[%s3] sm:$0x1]
        %v365 = vld [vmem:[%s4] sm:$0xff]
        %v366 = vld [vmem:[%s4 + $0x8] sm:$0xff]
        %v367 = vld [vmem:[%s4 + $0x10] sm:$0xff]
        %v368 = vld [vmem:[%s4 + $0x18] sm:$0xff]
        %v369 = vld [vmem:[%s5] sm:$0xff]
        %v370 = vld [vmem:[%s5 + $0x8] sm:$0xff]
        %v371 = vld [vmem:[%s5 + $0x10] sm:$0xff]
        %v372 = vld [vmem:[%s5 + $0x18] sm:$0xff]
        %v373 = vld [vmem:[#allocation2] sm:$0xff]
        %v374 = vld [vmem:[#allocation2 + $0x8] sm:$0xff]
        %v375 = vld [vmem:[#allocation2 + $0x10] sm:$0xff]
        %v376 = vld [vmem:[#allocation2 + $0x18] sm:$0xff]
        %v377 = vmul.f32 %v373, 0.00390625
        %v378 = vmul.f32 %v374, 0.00390625
        %v379 = vmul.f32 %v375, 0.00390625
        %v380 = vmul.f32 %v376, 0.00390625
        %382 = vset.pattern.permute.xlu0 0
        %383 = vperm.xlu0 %382, %v377
        %v384 = vpop.permute.xlu0 %383
        %387 = vset.pattern.permute.xlu0 0
        %388 = vperm.xlu0 %387, %v378
        %v389 = vpop.permute.xlu0 %388
        %392 = vset.pattern.permute.xlu0 0
        %393 = vperm.xlu0 %392, %v379
        %v394 = vpop.permute.xlu0 %393
        %397 = vset.pattern.permute.xlu0 0
        %398 = vperm.xlu0 %397, %v380
        %v399 = vpop.permute.xlu0 %398
        %v401 = vmul.f32 %v360, %v384
        %v402 = vmul.f32 %v361, %v389
        %v403 = vmul.f32 %v362, %v394
        %v404 = vmul.f32 %v363, %v399
        %vm405 = vcmask 15360
        %v406 = vsel %vm405, %v401, 0.0
        %v407 = vsel %vm405, %v402, 0.0
        %v408 = vadd.f32 %v406, %v407
        %v409 = vsel %vm405, %v403, 0.0
        %v410 = vadd.f32 %v408, %v409
        %v411 = vsel %vm405, %v404, 0.0
        %v412 = vadd.f32 %v410, %v411
        %v413 = vrot.slane %v412, 4
        %v414 = vadd.f32 %v412, %v413
        %v415 = vrot.slane %v414, 2
        %v416 = vadd.f32 %v414, %v415
        %v417 = vrot.slane %v416, 1
        %v418 = vadd.f32 %v416, %v417
        %v419 = vadd.f32 %v418, %v364
        %v420 = vmax.f32 %v419, 0.0
        %v421 = vperm.slane %v420, 0
        %v422 = vmul.f32 %v365, %v421
        %v423 = vmul.f32 %v366, %v421
        %v424 = vmul.f32 %v367, %v421
        %v425 = vmul.f32 %v368, %v421
        %v426 = vsel %vm405, %v422, 0.0
        %427 = vadd.xlane.f32.xlu0 %v426
        %v428 = vpop.xlane.xlu0 %427
        %v429 = vsel %vm405, %v423, 0.0
        %430 = vadd.xlane.f32.xlu0 %v429
        %v431 = vpop.xlane.xlu0 %430
        %v432 = vsel %vm405, %v424, 0.0
        %433 = vadd.xlane.f32.xlu0 %v432
        %v434 = vpop.xlane.xlu0 %433
        %v435 = vsel %vm405, %v425, 0.0
        %436 = vadd.xlane.f32.xlu0 %v435
        %v437 = vpop.xlane.xlu0 %436
        %v438 = vadd.f32 %v428, %v369
        %v439 = vadd.f32 %v431, %v370
        %v440 = vadd.f32 %v434, %v371
        %v441 = vadd.f32 %v437, %v372
        %v442 = vxor.u32 %v438, 2147483648
        %v443 = vxor.u32 %v439, 2147483648
        %v444 = vxor.u32 %v440, 2147483648
        %v445 = vxor.u32 %v441, 2147483648
        %v446 = vmul.f32 %v442, 1.442695
        %v447 = vpow.pop %v446
        %v448 = vmul.f32 %v443, 1.442695
        %v449 = vpow.pop %v448
        %v450 = vmul.f32 %v444, 1.442695
        %v451 = vpow.pop %v450
        %v452 = vmul.f32 %v445, 1.442695
        %v453 = vpow.pop %v452
        %v454 = vadd.f32 %v447, 1.0
        %v455 = vadd.f32 %v449, 1.0
        %v456 = vadd.f32 %v451, 1.0
        %v457 = vadd.f32 %v453, 1.0
        %v458 = vrcp.pop %v454
        %v459 = vmul.f32 %v454, %v458
        %v460 = vsub.f32 1.0, %v459
        %v461 = vmul.f32 %v458, %v460
        %v462 = vadd.f32 %v458, %v461
        %vm463 = vweird.f32 %v454
        %vm464 = vweird.f32 %v458
        %vm465 = vmor %vm463, %vm464
        %v466 = vsel %vm465, %v458, %v462
        %v467 = vand.u32 2147483647, %v454
        %vm468 = vcmp.eq.f32.partialorder %v467, 8.507059e+37
        %v469 = vand.u32 %v454, 2147483648
        %v470 = vor.u32 1.1754944e-38, %v469
        %v471 = vsel %vm468, %v470, %v466
        %v472 = vmul.f32 1.0, %v471
        %v473 = vrcp.pop %v455
        %v474 = vmul.f32 %v455, %v473
        %v475 = vsub.f32 1.0, %v474
        %v476 = vmul.f32 %v473, %v475
        %v477 = vadd.f32 %v473, %v476
        %vm478 = vweird.f32 %v455
        %vm479 = vweird.f32 %v473
        %vm480 = vmor %vm478, %vm479
        %v481 = vsel %vm480, %v473, %v477
        %v482 = vand.u32 2147483647, %v455
        %vm483 = vcmp.eq.f32.partialorder %v482, 8.507059e+37
        %v484 = vand.u32 %v455, 2147483648
        %v485 = vor.u32 1.1754944e-38, %v484
        %v486 = vsel %vm483, %v485, %v481
        %v487 = vmul.f32 1.0, %v486
        %v488 = vrcp.pop %v456
        %v489 = vmul.f32 %v456, %v488
        %v490 = vsub.f32 1.0, %v489
        %v491 = vmul.f32 %v488, %v490
        %v492 = vadd.f32 %v488, %v491
        %vm493 = vweird.f32 %v456
        %vm494 = vweird.f32 %v488
        %vm495 = vmor %vm493, %vm494
        %v496 = vsel %vm495, %v488, %v492
        %v497 = vand.u32 2147483647, %v456
        %vm498 = vcmp.eq.f32.partialorder %v497, 8.507059e+37
        %v499 = vand.u32 %v456, 2147483648
        %v500 = vor.u32 1.1754944e-38, %v499
        %v501 = vsel %vm498, %v500, %v496
        %v502 = vmul.f32 1.0, %v501
        %v503 = vrcp.pop %v457
        %v504 = vmul.f32 %v457, %v503
        %v505 = vsub.f32 1.0, %v504
        %v506 = vmul.f32 %v503, %v505
        %v507 = vadd.f32 %v503, %v506
        %vm508 = vweird.f32 %v457
        %vm509 = vweird.f32 %v503
        %vm510 = vmor %vm508, %vm509
        %v511 = vsel %vm510, %v503, %v507
        %v512 = vand.u32 2147483647, %v457
        %vm513 = vcmp.eq.f32.partialorder %v512, 8.507059e+37
        %v514 = vand.u32 %v457, 2147483648
        %v515 = vor.u32 1.1754944e-38, %v514
        %v516 = vsel %vm513, %v515, %v511
        %v517 = vmul.f32 1.0, %v516
        %518 = vst.msk [vmem:[#allocation2] sm:$0xff] %vm355, %v472
        %519 = vst.msk [vmem:[#allocation2 + $0x8] sm:$0xff] %vm355, %v487
        %520 = vst.msk [vmem:[#allocation2 + $0x10] sm:$0xff] %vm355, %v502
        %521 = vst.msk [vmem:[#allocation2 + $0x18] sm:$0xff] %vm355, %v517
        %v522 = vld [vmem:[%s281] sm:$0xff]
        %v523 = vld [vmem:[%s281 + $0x8] sm:$0xff]
        %v524 = vld [vmem:[%s281 + $0x10] sm:$0xff]
        %v525 = vld [vmem:[%s281 + $0x18] sm:$0xff]
        %v526 = vld [vmem:[%s281 + $0x20] sm:$0xff]
        %v527 = vld [vmem:[%s281 + $0x28] sm:$0xff]
        %v528 = vld [vmem:[%s281 + $0x30] sm:$0xff]
        %v529 = vld [vmem:[%s281 + $0x38] sm:$0xff]
        %v530 = vld [vmem:[#allocation2] sm:$0xff]
        %v531 = vld [vmem:[#allocation2 + $0x8] sm:$0xff]
        %v532 = vld [vmem:[#allocation2 + $0x10] sm:$0xff]
        %v533 = vld [vmem:[#allocation2 + $0x18] sm:$0xff]
        %535 = vset.pattern.permute.xlu0 0
        %536 = vperm.xlu0 %535, %v530
        %v537 = vpop.permute.xlu0 %536
        %540 = vset.pattern.permute.xlu0 0
        %541 = vperm.xlu0 %540, %v531
        %v542 = vpop.permute.xlu0 %541
        %545 = vset.pattern.permute.xlu0 0
        %546 = vperm.xlu0 %545, %v532
        %v547 = vpop.permute.xlu0 %546
        %550 = vset.pattern.permute.xlu0 0
        %551 = vperm.xlu0 %550, %v533
        %v552 = vpop.permute.xlu0 %551
        %v554 = vmul.f32 %v522, %v537
        %v555 = vmul.f32 %v523, %v537
        %v556 = vmul.f32 %v524, %v542
        %v557 = vmul.f32 %v525, %v542
        %v558 = vmul.f32 %v526, %v547
        %v559 = vmul.f32 %v527, %v547
        %v560 = vmul.f32 %v528, %v552
        %v561 = vmul.f32 %v529, %v552
        %v562 = vadd.f32 %v554, %v556
        %v563 = vadd.f32 %v562, %v558
        %v564 = vadd.f32 %v563, %v560
        %v565 = vrot.slane %v564, 4
        %v566 = vadd.f32 %v564, %v565
        %v567 = vrot.slane %v566, 2
        %v568 = vadd.f32 %v566, %v567
        %v569 = vrot.slane %v568, 1
        %v570 = vadd.f32 %v568, %v569
        %v571 = vadd.f32 %v555, %v557
        %v572 = vadd.f32 %v571, %v559
        %v573 = vadd.f32 %v572, %v561
        %v574 = vrot.slane %v573, 4
        %v575 = vadd.f32 %v573, %v574
        %v576 = vrot.slane %v575, 2
        %v577 = vadd.f32 %v575, %v576
        %v578 = vrot.slane %v577, 1
        %v579 = vadd.f32 %v577, %v578
        %v580 = vmax.f32 %v554, %v558
        %v581 = vmax.f32 %v556, %v560
        %v582 = vmax.f32 %v580, %v581
        %v583 = vrot.slane %v582, 4
        %v584 = vmax.f32 %v582, %v583
        %v585 = vrot.slane %v584, 2
        %v586 = vmax.f32 %v584, %v585
        %v587 = vrot.slane %v586, 1
        %v588 = vmax.f32 %v586, %v587
        %v589 = vmax.f32 %v555, %v559
        %v590 = vmax.f32 %v557, %v561
        %v591 = vmax.f32 %v589, %v590
        %v592 = vrot.slane %v591, 4
        %v593 = vmax.f32 %v591, %v592
        %v594 = vrot.slane %v593, 2
        %v595 = vmax.f32 %v593, %v594
        %v596 = vrot.slane %v595, 1
        %v597 = vmax.f32 %v595, %v596
        %v598 = vmul.f32 %v570, 0.03125
        %v599 = vmul.f32 %v579, 0.03125
        %v602 = vrot.slane %v599, 7
        %vm603 = vcmask 1040384
        %v604 = vsel %vm603, %v598, %v602
        %v606 = vlaneseq
        %vm607 = vcmp.ge.s32.totalorder %v606, 0
        %vm608 = vcmp.lt.s32.totalorder %v606, 256
        %vm609 = vmand %vm607, %vm608
        %610 = vst.msk [vmem:[#allocation3] sm:$0x3] %vm609, %v604
        %v613 = vrot.slane %v597, 7
        %v614 = vsel %vm603, %v588, %v613
        %s616 = scalar_lea.vmem [#allocation3], 2
        %617 = vst.msk [vmem:[%s616] sm:$0x3] %vm609, %v614
        %v618 = vld [vmem:[#allocation3] sm:$0x1]
        %v620 = vperm.slane %v618, 0
        %621 = vrot.lane.b32.xlu0 %v620, 3
        %v622 = vpop.permute.xlu0 %621
        %vm624 = vcmask 147480
        %625 = vst.msk [vmem:[#allocation4 + $0x3] sm:$0x1] %vm624, %v622
        %v626 = vld [vmem:[%s616] sm:$0x1]
        %v628 = vperm.slane %v626, 0
        %629 = vrot.lane.b32.xlu0 %v628, 3
        %v630 = vpop.permute.xlu0 %629
        %s632 = scalar_lea.vmem [#allocation4], 24
        %633 = vst.msk [vmem:[%s632 + $0x3] sm:$0x1] %vm624, %v630
        %v634 = vld [vmem:[#allocation3] sm:$0x1]
        %v636 = vperm.slane %v634, 0
        %637 = vrot.lane.b32.xlu0 %v636, 115
        %v638 = vpop.permute.xlu0 %637
        %640 = vst.msk [vmem:[#allocation4 + $0x4] sm:$0x1] %vm624, %v638
        %v641 = vld [vmem:[%s616] sm:$0x1]
        %v643 = vperm.slane %v641, 0
        %644 = vrot.lane.b32.xlu0 %v643, 115
        %v645 = vpop.permute.xlu0 %644
        %647 = vst.msk [vmem:[%s632 + $0x4] sm:$0x1] %vm624, %v645
        %v648 = vld [vmem:[#allocation3] sm:$0x1]
        %v650 = vperm.slane %v648, 0
        %651 = vrot.lane.b32.xlu0 %v650, 99
        %v652 = vpop.permute.xlu0 %651
        %654 = vst.msk [vmem:[#allocation4 + $0x5] sm:$0x1] %vm624, %v652
        %v655 = vld [vmem:[%s616] sm:$0x1]
        %v657 = vperm.slane %v655, 0
        %658 = vrot.lane.b32.xlu0 %v657, 99
        %v659 = vpop.permute.xlu0 %658
        %661 = vst.msk [vmem:[%s632 + $0x5] sm:$0x1] %vm624, %v659
        %v662 = vld [vmem:[#allocation3] sm:$0x1]
        %v664 = vperm.slane %v662, 0
        %665 = vrot.lane.b32.xlu0 %v664, 83
        %v666 = vpop.permute.xlu0 %665
        %668 = vst.msk [vmem:[#allocation4 + $0x6] sm:$0x1] %vm624, %v666
        %v669 = vld [vmem:[%s616] sm:$0x1]
        %v671 = vperm.slane %v669, 0
        %672 = vrot.lane.b32.xlu0 %v671, 83
        %v673 = vpop.permute.xlu0 %672
        %675 = vst.msk [vmem:[%s632 + $0x6] sm:$0x1] %vm624, %v673
        %v676 = vld [vmem:[#allocation3] sm:$0x1]
        %v678 = vperm.slane %v676, 0
        %679 = vrot.lane.b32.xlu0 %v678, 67
        %v680 = vpop.permute.xlu0 %679
        %682 = vst.msk [vmem:[#allocation4 + $0x7] sm:$0x1] %vm624, %v680
        %v683 = vld [vmem:[%s616] sm:$0x1]
        %v685 = vperm.slane %v683, 0
        %686 = vrot.lane.b32.xlu0 %v685, 67
        %v687 = vpop.permute.xlu0 %686
        %689 = vst.msk [vmem:[%s632 + $0x7] sm:$0x1] %vm624, %v687
        %v690 = vld [vmem:[#allocation3] sm:$0x1]
        %v692 = vperm.slane %v690, 0
        %693 = vrot.lane.b32.xlu0 %v692, 51
        %v694 = vpop.permute.xlu0 %693
        %696 = vst.msk [vmem:[#allocation4 + $0x8] sm:$0x1] %vm624, %v694
        %v697 = vld [vmem:[%s616] sm:$0x1]
        %v699 = vperm.slane %v697, 0
        %700 = vrot.lane.b32.xlu0 %v699, 51
        %v701 = vpop.permute.xlu0 %700
        %703 = vst.msk [vmem:[%s632 + $0x8] sm:$0x1] %vm624, %v701
        %v704 = vld [vmem:[#allocation3] sm:$0x1]
        %v706 = vperm.slane %v704, 0
        %707 = vrot.lane.b32.xlu0 %v706, 35
        %v708 = vpop.permute.xlu0 %707
        %710 = vst.msk [vmem:[#allocation4 + $0x9] sm:$0x1] %vm624, %v708
        %v711 = vld [vmem:[%s616] sm:$0x1]
        %v713 = vperm.slane %v711, 0
        %714 = vrot.lane.b32.xlu0 %v713, 35
        %v715 = vpop.permute.xlu0 %714
        %717 = vst.msk [vmem:[%s632 + $0x9] sm:$0x1] %vm624, %v715
        %v718 = vld [vmem:[#allocation3] sm:$0x1]
        %v720 = vperm.slane %v718, 0
        %721 = vrot.lane.b32.xlu0 %v720, 19
        %v722 = vpop.permute.xlu0 %721
        %724 = vst.msk [vmem:[#allocation4 + $0xa] sm:$0x1] %vm624, %v722
        %v725 = vld [vmem:[%s616] sm:$0x1]
        %v727 = vperm.slane %v725, 0
        %728 = vrot.lane.b32.xlu0 %v727, 19
        %v729 = vpop.permute.xlu0 %728
        %731 = vst.msk [vmem:[%s632 + $0xa] sm:$0x1] %vm624, %v729
        %v732 = vld [vmem:[#allocation3 + $0x1] sm:$0x1]
        %v734 = vperm.slane %v732, 0
        %735 = vrot.lane.b32.xlu0 %v734, 3
        %v736 = vpop.permute.xlu0 %735
        %738 = vst.msk [vmem:[#allocation4 + $0xb] sm:$0x1] %vm624, %v736
        %v739 = vld [vmem:[%s616 + $0x1] sm:$0x1]
        %v741 = vperm.slane %v739, 0
        %742 = vrot.lane.b32.xlu0 %v741, 3
        %v743 = vpop.permute.xlu0 %742
        %745 = vst.msk [vmem:[%s632 + $0xb] sm:$0x1] %vm624, %v743
        %v746 = vld [vmem:[#allocation3 + $0x1] sm:$0x1]
        %v748 = vperm.slane %v746, 0
        %749 = vrot.lane.b32.xlu0 %v748, 115
        %v750 = vpop.permute.xlu0 %749
        %752 = vst.msk [vmem:[#allocation4 + $0xc] sm:$0x1] %vm624, %v750
        %v753 = vld [vmem:[%s616 + $0x1] sm:$0x1]
        %v755 = vperm.slane %v753, 0
        %756 = vrot.lane.b32.xlu0 %v755, 115
        %v757 = vpop.permute.xlu0 %756
        %759 = vst.msk [vmem:[%s632 + $0xc] sm:$0x1] %vm624, %v757
        %v760 = vld [vmem:[#allocation3 + $0x1] sm:$0x1]
        %v762 = vperm.slane %v760, 0
        %763 = vrot.lane.b32.xlu0 %v762, 99
        %v764 = vpop.permute.xlu0 %763
        %766 = vst.msk [vmem:[#allocation4 + $0xd] sm:$0x1] %vm624, %v764
        %v767 = vld [vmem:[%s616 + $0x1] sm:$0x1]
        %v769 = vperm.slane %v767, 0
        %770 = vrot.lane.b32.xlu0 %v769, 99
        %v771 = vpop.permute.xlu0 %770
        %773 = vst.msk [vmem:[%s632 + $0xd] sm:$0x1] %vm624, %v771
        %v774 = vld [vmem:[#allocation3 + $0x1] sm:$0x1]
        %v776 = vperm.slane %v774, 0
        %777 = vrot.lane.b32.xlu0 %v776, 83
        %v778 = vpop.permute.xlu0 %777
        %780 = vst.msk [vmem:[#allocation4 + $0xe] sm:$0x1] %vm624, %v778
        %v781 = vld [vmem:[%s616 + $0x1] sm:$0x1]
        %v783 = vperm.slane %v781, 0
        %784 = vrot.lane.b32.xlu0 %v783, 83
        %v785 = vpop.permute.xlu0 %784
        %787 = vst.msk [vmem:[%s632 + $0xe] sm:$0x1] %vm624, %v785
        %v788 = vld [vmem:[#allocation3 + $0x1] sm:$0x1]
        %v790 = vperm.slane %v788, 0
        %791 = vrot.lane.b32.xlu0 %v790, 67
        %v792 = vpop.permute.xlu0 %791
        %794 = vst.msk [vmem:[#allocation4 + $0xf] sm:$0x1] %vm624, %v792
        %v795 = vld [vmem:[%s616 + $0x1] sm:$0x1]
        %v797 = vperm.slane %v795, 0
        %798 = vrot.lane.b32.xlu0 %v797, 67
        %v799 = vpop.permute.xlu0 %798
        %801 = vst.msk [vmem:[%s632 + $0xf] sm:$0x1] %vm624, %v799
        %v802 = vld [vmem:[#allocation3 + $0x1] sm:$0x1]
        %v804 = vperm.slane %v802, 0
        %805 = vrot.lane.b32.xlu0 %v804, 51
        %v806 = vpop.permute.xlu0 %805
        %808 = vst.msk [vmem:[#allocation4 + $0x10] sm:$0x1] %vm624, %v806
        %v809 = vld [vmem:[%s616 + $0x1] sm:$0x1]
        %v811 = vperm.slane %v809, 0
        %812 = vrot.lane.b32.xlu0 %v811, 51
        %v813 = vpop.permute.xlu0 %812
        %815 = vst.msk [vmem:[%s632 + $0x10] sm:$0x1] %vm624, %v813
        %v816 = vld [vmem:[#allocation3 + $0x1] sm:$0x1]
        %v818 = vperm.slane %v816, 0
        %819 = vrot.lane.b32.xlu0 %v818, 35
        %v820 = vpop.permute.xlu0 %819
        %822 = vst.msk [vmem:[#allocation4 + $0x11] sm:$0x1] %vm624, %v820
        %v823 = vld [vmem:[%s616 + $0x1] sm:$0x1]
        %v825 = vperm.slane %v823, 0
        %826 = vrot.lane.b32.xlu0 %v825, 35
        %v827 = vpop.permute.xlu0 %826
        %829 = vst.msk [vmem:[%s632 + $0x11] sm:$0x1] %vm624, %v827
        %v830 = vld [vmem:[#allocation3 + $0x1] sm:$0x1]
        %v832 = vperm.slane %v830, 0
        %833 = vrot.lane.b32.xlu0 %v832, 19
        %v834 = vpop.permute.xlu0 %833
        %836 = vst.msk [vmem:[#allocation4 + $0x12] sm:$0x1] %vm624, %v834
        %v837 = vld [vmem:[%s616 + $0x1] sm:$0x1]
        %v839 = vperm.slane %v837, 0
        %840 = vrot.lane.b32.xlu0 %v839, 19
        %v841 = vpop.permute.xlu0 %840
        %843 = vst.msk [vmem:[%s632 + $0x12] sm:$0x1] %vm624, %v841
        %s844 = sld [smem:[#allocation7]]
        %v845 = vstv %s844
        %v846 = vadd.f32 %v845, 0.0
        %v847 = vld [vmem:[#allocation4] sm:$0xff]
        %v848 = vld [vmem:[#allocation4 + $0x8] sm:$0xff]
        %v849 = vld [vmem:[#allocation4 + $0x18] sm:$0xff]
        %v850 = vld [vmem:[#allocation4 + $0x20] sm:$0xff]
        %s851 = sld [smem:[#allocation8]]
        %s852 = sld [smem:[#allocation8 + $0x31]]
        %v853 = vstv %s851
        %v854 = vmul.f32 %v853, %v847
        %v855 = vmul.f32 %v853, %v848
        %v856 = vadd.f32 %v846, %v854
        %v857 = vadd.f32 %v846, %v855
        %v858 = vstv %s852
        %v859 = vmul.f32 %v858, %v849
        %v860 = vmul.f32 %v858, %v850
        %v861 = vadd.f32 %v856, %v859
        %v862 = vadd.f32 %v857, %v860
        %s863 = sld [smem:[#allocation8 + $0x1]]
        %s864 = sld [smem:[#allocation8 + $0x32]]
        %v865 = vstv %s863
        %v866 = vmul.f32 %v865, %v847
        %v867 = vmul.f32 %v865, %v848
        %870 = vrot.lane.b32.xlu0 %v866, 127
        %v871 = vpop.permute.xlu0 %870
        %872 = vrot.lane.b32.xlu0 %v867, 127
        %v873 = vpop.permute.xlu0 %872
        %v876 = vadd.f32 %v861, %v871
        %v877 = vadd.f32 %v862, %v873
        %v878 = vstv %s864
        %v879 = vmul.f32 %v878, %v849
        %v880 = vmul.f32 %v878, %v850
        %883 = vrot.lane.b32.xlu0 %v879, 127
        %v884 = vpop.permute.xlu0 %883
        %885 = vrot.lane.b32.xlu0 %v880, 127
        %v886 = vpop.permute.xlu0 %885
        %v889 = vadd.f32 %v876, %v884
        %v890 = vadd.f32 %v877, %v886
        %s891 = sld [smem:[#allocation8 + $0x2]]
        %s892 = sld [smem:[#allocation8 + $0x33]]
        %v893 = vstv %s891
        %v894 = vmul.f32 %v893, %v847
        %v895 = vmul.f32 %v893, %v848
        %898 = vrot.lane.b32.xlu0 %v894, 126
        %v899 = vpop.permute.xlu0 %898
        %900 = vrot.lane.b32.xlu0 %v895, 126
        %v901 = vpop.permute.xlu0 %900
        %v904 = vadd.f32 %v889, %v899
        %v905 = vadd.f32 %v890, %v901
        %v906 = vstv %s892
        %v907 = vmul.f32 %v906, %v849
        %v908 = vmul.f32 %v906, %v850
        %911 = vrot.lane.b32.xlu0 %v907, 126
        %v912 = vpop.permute.xlu0 %911
        %913 = vrot.lane.b32.xlu0 %v908, 126
        %v914 = vpop.permute.xlu0 %913
        %v917 = vadd.f32 %v904, %v912
        %v918 = vadd.f32 %v905, %v914
        %s919 = sld [smem:[#allocation8 + $0x3]]
        %s920 = sld [smem:[#allocation8 + $0x34]]
        %v921 = vstv %s919
        %v922 = vmul.f32 %v921, %v847
        %v923 = vmul.f32 %v921, %v848
        %926 = vrot.lane.b32.xlu0 %v922, 125
        %v927 = vpop.permute.xlu0 %926
        %928 = vrot.lane.b32.xlu0 %v923, 125
        %v929 = vpop.permute.xlu0 %928
        %v932 = vadd.f32 %v917, %v927
        %v933 = vadd.f32 %v918, %v929
        %v934 = vstv %s920
        %v935 = vmul.f32 %v934, %v849
        %v936 = vmul.f32 %v934, %v850
        %939 = vrot.lane.b32.xlu0 %v935, 125
        %v940 = vpop.permute.xlu0 %939
        %941 = vrot.lane.b32.xlu0 %v936, 125
        %v942 = vpop.permute.xlu0 %941
        %v945 = vadd.f32 %v932, %v940
        %v946 = vadd.f32 %v933, %v942
        %s947 = sld [smem:[#allocation8 + $0x4]]
        %s948 = sld [smem:[#allocation8 + $0x35]]
        %v949 = vstv %s947
        %v950 = vmul.f32 %v949, %v847
        %v951 = vmul.f32 %v949, %v848
        %954 = vrot.lane.b32.xlu0 %v950, 124
        %v955 = vpop.permute.xlu0 %954
        %956 = vrot.lane.b32.xlu0 %v951, 124
        %v957 = vpop.permute.xlu0 %956
        %v960 = vadd.f32 %v945, %v955
        %v961 = vadd.f32 %v946, %v957
        %v962 = vstv %s948
        %v963 = vmul.f32 %v962, %v849
        %v964 = vmul.f32 %v962, %v850
        %967 = vrot.lane.b32.xlu0 %v963, 124
        %v968 = vpop.permute.xlu0 %967
        %969 = vrot.lane.b32.xlu0 %v964, 124
        %v970 = vpop.permute.xlu0 %969
        %v973 = vadd.f32 %v960, %v968
        %v974 = vadd.f32 %v961, %v970
        %s975 = sld [smem:[#allocation8 + $0x5]]
        %s976 = sld [smem:[#allocation8 + $0x36]]
        %v977 = vstv %s975
        %v978 = vmul.f32 %v977, %v847
        %v979 = vmul.f32 %v977, %v848
        %982 = vrot.lane.b32.xlu0 %v978, 123
        %v983 = vpop.permute.xlu0 %982
        %984 = vrot.lane.b32.xlu0 %v979, 123
        %v985 = vpop.permute.xlu0 %984
        %v988 = vadd.f32 %v973, %v983
        %v989 = vadd.f32 %v974, %v985
        %v990 = vstv %s976
        %v991 = vmul.f32 %v990, %v849
        %v992 = vmul.f32 %v990, %v850
        %995 = vrot.lane.b32.xlu0 %v991, 123
        %v996 = vpop.permute.xlu0 %995
        %997 = vrot.lane.b32.xlu0 %v992, 123
        %v998 = vpop.permute.xlu0 %997
        %v1001 = vadd.f32 %v988, %v996
        %v1002 = vadd.f32 %v989, %v998
        %s1003 = sld [smem:[#allocation8 + $0x6]]
        %s1004 = sld [smem:[#allocation8 + $0x37]]
        %v1005 = vstv %s1003
        %v1006 = vmul.f32 %v1005, %v847
        %v1007 = vmul.f32 %v1005, %v848
        %1010 = vrot.lane.b32.xlu0 %v1006, 122
        %v1011 = vpop.permute.xlu0 %1010
        %1012 = vrot.lane.b32.xlu0 %v1007, 122
        %v1013 = vpop.permute.xlu0 %1012
        %v1016 = vadd.f32 %v1001, %v1011
        %v1017 = vadd.f32 %v1002, %v1013
        %v1018 = vstv %s1004
        %v1019 = vmul.f32 %v1018, %v849
        %v1020 = vmul.f32 %v1018, %v850
        %1023 = vrot.lane.b32.xlu0 %v1019, 122
        %v1024 = vpop.permute.xlu0 %1023
        %1025 = vrot.lane.b32.xlu0 %v1020, 122
        %v1026 = vpop.permute.xlu0 %1025
        %v1029 = vadd.f32 %v1016, %v1024
        %v1030 = vadd.f32 %v1017, %v1026
        %v1031 = vld [vmem:[#allocation4 + $0x1] sm:$0xff]
        %v1032 = vld [vmem:[#allocation4 + $0x9] sm:$0xff]
        %v1033 = vld [vmem:[#allocation4 + $0x19] sm:$0xff]
        %v1034 = vld [vmem:[#allocation4 + $0x21] sm:$0xff]
        %s1035 = sld [smem:[#allocation8 + $0x7]]
        %s1036 = sld [smem:[#allocation8 + $0x38]]
        %v1037 = vstv %s1035
        %v1038 = vmul.f32 %v1037, %v1031
        %v1039 = vmul.f32 %v1037, %v1032
        %v1040 = vadd.f32 %v1029, %v1038
        %v1041 = vadd.f32 %v1030, %v1039
        %v1042 = vstv %s1036
        %v1043 = vmul.f32 %v1042, %v1033
        %v1044 = vmul.f32 %v1042, %v1034
        %v1045 = vadd.f32 %v1040, %v1043
        %v1046 = vadd.f32 %v1041, %v1044
        %s1047 = sld [smem:[#allocation8 + $0x8]]
        %s1048 = sld [smem:[#allocation8 + $0x39]]
        %v1049 = vstv %s1047
        %v1050 = vmul.f32 %v1049, %v1031
        %v1051 = vmul.f32 %v1049, %v1032
        %1054 = vrot.lane.b32.xlu0 %v1050, 127
        %v1055 = vpop.permute.xlu0 %1054
        %1056 = vrot.lane.b32.xlu0 %v1051, 127
        %v1057 = vpop.permute.xlu0 %1056
        %v1060 = vadd.f32 %v1045, %v1055
        %v1061 = vadd.f32 %v1046, %v1057
        %v1062 = vstv %s1048
        %v1063 = vmul.f32 %v1062, %v1033
        %v1064 = vmul.f32 %v1062, %v1034
        %1067 = vrot.lane.b32.xlu0 %v1063, 127
        %v1068 = vpop.permute.xlu0 %1067
        %1069 = vrot.lane.b32.xlu0 %v1064, 127
        %v1070 = vpop.permute.xlu0 %1069
        %v1073 = vadd.f32 %v1060, %v1068
        %v1074 = vadd.f32 %v1061, %v1070
        %s1075 = sld [smem:[#allocation8 + $0x9]]
        %s1076 = sld [smem:[#allocation8 + $0x3a]]
        %v1077 = vstv %s1075
        %v1078 = vmul.f32 %v1077, %v1031
        %v1079 = vmul.f32 %v1077, %v1032
        %1082 = vrot.lane.b32.xlu0 %v1078, 126
        %v1083 = vpop.permute.xlu0 %1082
        %1084 = vrot.lane.b32.xlu0 %v1079, 126
        %v1085 = vpop.permute.xlu0 %1084
        %v1088 = vadd.f32 %v1073, %v1083
        %v1089 = vadd.f32 %v1074, %v1085
        %v1090 = vstv %s1076
        %v1091 = vmul.f32 %v1090, %v1033
        %v1092 = vmul.f32 %v1090, %v1034
        %1095 = vrot.lane.b32.xlu0 %v1091, 126
        %v1096 = vpop.permute.xlu0 %1095
        %1097 = vrot.lane.b32.xlu0 %v1092, 126
        %v1098 = vpop.permute.xlu0 %1097
        %v1101 = vadd.f32 %v1088, %v1096
        %v1102 = vadd.f32 %v1089, %v1098
        %s1103 = sld [smem:[#allocation8 + $0xa]]
        %s1104 = sld [smem:[#allocation8 + $0x3b]]
        %v1105 = vstv %s1103
        %v1106 = vmul.f32 %v1105, %v1031
        %v1107 = vmul.f32 %v1105, %v1032
        %1110 = vrot.lane.b32.xlu0 %v1106, 125
        %v1111 = vpop.permute.xlu0 %1110
        %1112 = vrot.lane.b32.xlu0 %v1107, 125
        %v1113 = vpop.permute.xlu0 %1112
        %v1116 = vadd.f32 %v1101, %v1111
        %v1117 = vadd.f32 %v1102, %v1113
        %v1118 = vstv %s1104
        %v1119 = vmul.f32 %v1118, %v1033
        %v1120 = vmul.f32 %v1118, %v1034
        %1123 = vrot.lane.b32.xlu0 %v1119, 125
        %v1124 = vpop.permute.xlu0 %1123
        %1125 = vrot.lane.b32.xlu0 %v1120, 125
        %v1126 = vpop.permute.xlu0 %1125
        %v1129 = vadd.f32 %v1116, %v1124
        %v1130 = vadd.f32 %v1117, %v1126
        %s1131 = sld [smem:[#allocation8 + $0xb]]
        %s1132 = sld [smem:[#allocation8 + $0x3c]]
        %v1133 = vstv %s1131
        %v1134 = vmul.f32 %v1133, %v1031
        %v1135 = vmul.f32 %v1133, %v1032
        %1138 = vrot.lane.b32.xlu0 %v1134, 124
        %v1139 = vpop.permute.xlu0 %1138
        %1140 = vrot.lane.b32.xlu0 %v1135, 124
        %v1141 = vpop.permute.xlu0 %1140
        %v1144 = vadd.f32 %v1129, %v1139
        %v1145 = vadd.f32 %v1130, %v1141
        %v1146 = vstv %s1132
        %v1147 = vmul.f32 %v1146, %v1033
        %v1148 = vmul.f32 %v1146, %v1034
        %1151 = vrot.lane.b32.xlu0 %v1147, 124
        %v1152 = vpop.permute.xlu0 %1151
        %1153 = vrot.lane.b32.xlu0 %v1148, 124
        %v1154 = vpop.permute.xlu0 %1153
        %v1157 = vadd.f32 %v1144, %v1152
        %v1158 = vadd.f32 %v1145, %v1154
        %s1159 = sld [smem:[#allocation8 + $0xc]]
        %s1160 = sld [smem:[#allocation8 + $0x3d]]
        %v1161 = vstv %s1159
        %v1162 = vmul.f32 %v1161, %v1031
        %v1163 = vmul.f32 %v1161, %v1032
        %1166 = vrot.lane.b32.xlu0 %v1162, 123
        %v1167 = vpop.permute.xlu0 %1166
        %1168 = vrot.lane.b32.xlu0 %v1163, 123
        %v1169 = vpop.permute.xlu0 %1168
        %v1172 = vadd.f32 %v1157, %v1167
        %v1173 = vadd.f32 %v1158, %v1169
        %v1174 = vstv %s1160
        %v1175 = vmul.f32 %v1174, %v1033
        %v1176 = vmul.f32 %v1174, %v1034
        %1179 = vrot.lane.b32.xlu0 %v1175, 123
        %v1180 = vpop.permute.xlu0 %1179
        %1181 = vrot.lane.b32.xlu0 %v1176, 123
        %v1182 = vpop.permute.xlu0 %1181
        %v1185 = vadd.f32 %v1172, %v1180
        %v1186 = vadd.f32 %v1173, %v1182
        %s1187 = sld [smem:[#allocation8 + $0xd]]
        %s1188 = sld [smem:[#allocation8 + $0x3e]]
        %v1189 = vstv %s1187
        %v1190 = vmul.f32 %v1189, %v1031
        %v1191 = vmul.f32 %v1189, %v1032
        %1194 = vrot.lane.b32.xlu0 %v1190, 122
        %v1195 = vpop.permute.xlu0 %1194
        %1196 = vrot.lane.b32.xlu0 %v1191, 122
        %v1197 = vpop.permute.xlu0 %1196
        %v1200 = vadd.f32 %v1185, %v1195
        %v1201 = vadd.f32 %v1186, %v1197
        %v1202 = vstv %s1188
        %v1203 = vmul.f32 %v1202, %v1033
        %v1204 = vmul.f32 %v1202, %v1034
        %1207 = vrot.lane.b32.xlu0 %v1203, 122
        %v1208 = vpop.permute.xlu0 %1207
        %1209 = vrot.lane.b32.xlu0 %v1204, 122
        %v1210 = vpop.permute.xlu0 %1209
        %v1213 = vadd.f32 %v1200, %v1208
        %v1214 = vadd.f32 %v1201, %v1210
        %v1215 = vld [vmem:[#allocation4 + $0x2] sm:$0xff]
        %v1216 = vld [vmem:[#allocation4 + $0xa] sm:$0xff]
        %v1217 = vld [vmem:[#allocation4 + $0x1a] sm:$0xff]
        %v1218 = vld [vmem:[#allocation4 + $0x22] sm:$0xff]
        %s1219 = sld [smem:[#allocation8 + $0xe]]
        %s1220 = sld [smem:[#allocation8 + $0x3f]]
        %v1221 = vstv %s1219
        %v1222 = vmul.f32 %v1221, %v1215
        %v1223 = vmul.f32 %v1221, %v1216
        %v1224 = vadd.f32 %v1213, %v1222
        %v1225 = vadd.f32 %v1214, %v1223
        %v1226 = vstv %s1220
        %v1227 = vmul.f32 %v1226, %v1217
        %v1228 = vmul.f32 %v1226, %v1218
        %v1229 = vadd.f32 %v1224, %v1227
        %v1230 = vadd.f32 %v1225, %v1228
        %s1231 = sld [smem:[#allocation8 + $0xf]]
        %s1232 = sld [smem:[#allocation8 + $0x40]]
        %v1233 = vstv %s1231
        %v1234 = vmul.f32 %v1233, %v1215
        %v1235 = vmul.f32 %v1233, %v1216
        %1238 = vrot.lane.b32.xlu0 %v1234, 127
        %v1239 = vpop.permute.xlu0 %1238
        %1240 = vrot.lane.b32.xlu0 %v1235, 127
        %v1241 = vpop.permute.xlu0 %1240
        %v1244 = vadd.f32 %v1229, %v1239
        %v1245 = vadd.f32 %v1230, %v1241
        %v1246 = vstv %s1232
        %v1247 = vmul.f32 %v1246, %v1217
        %v1248 = vmul.f32 %v1246, %v1218
        %1251 = vrot.lane.b32.xlu0 %v1247, 127
        %v1252 = vpop.permute.xlu0 %1251
        %1253 = vrot.lane.b32.xlu0 %v1248, 127
        %v1254 = vpop.permute.xlu0 %1253
        %v1257 = vadd.f32 %v1244, %v1252
        %v1258 = vadd.f32 %v1245, %v1254
        %s1259 = sld [smem:[#allocation8 + $0x10]]
        %s1260 = sld [smem:[#allocation8 + $0x41]]
        %v1261 = vstv %s1259
        %v1262 = vmul.f32 %v1261, %v1215
        %v1263 = vmul.f32 %v1261, %v1216
        %1266 = vrot.lane.b32.xlu0 %v1262, 126
        %v1267 = vpop.permute.xlu0 %1266
        %1268 = vrot.lane.b32.xlu0 %v1263, 126
        %v1269 = vpop.permute.xlu0 %1268
        %v1272 = vadd.f32 %v1257, %v1267
        %v1273 = vadd.f32 %v1258, %v1269
        %v1274 = vstv %s1260
        %v1275 = vmul.f32 %v1274, %v1217
        %v1276 = vmul.f32 %v1274, %v1218
        %1279 = vrot.lane.b32.xlu0 %v1275, 126
        %v1280 = vpop.permute.xlu0 %1279
        %1281 = vrot.lane.b32.xlu0 %v1276, 126
        %v1282 = vpop.permute.xlu0 %1281
        %v1285 = vadd.f32 %v1272, %v1280
        %v1286 = vadd.f32 %v1273, %v1282
        %s1287 = sld [smem:[#allocation8 + $0x11]]
        %s1288 = sld [smem:[#allocation8 + $0x42]]
        %v1289 = vstv %s1287
        %v1290 = vmul.f32 %v1289, %v1215
        %v1291 = vmul.f32 %v1289, %v1216
        %1294 = vrot.lane.b32.xlu0 %v1290, 125
        %v1295 = vpop.permute.xlu0 %1294
        %1296 = vrot.lane.b32.xlu0 %v1291, 125
        %v1297 = vpop.permute.xlu0 %1296
        %v1300 = vadd.f32 %v1285, %v1295
        %v1301 = vadd.f32 %v1286, %v1297
        %v1302 = vstv %s1288
        %v1303 = vmul.f32 %v1302, %v1217
        %v1304 = vmul.f32 %v1302, %v1218
        %1307 = vrot.lane.b32.xlu0 %v1303, 125
        %v1308 = vpop.permute.xlu0 %1307
        %1309 = vrot.lane.b32.xlu0 %v1304, 125
        %v1310 = vpop.permute.xlu0 %1309
        %v1313 = vadd.f32 %v1300, %v1308
        %v1314 = vadd.f32 %v1301, %v1310
        %s1315 = sld [smem:[#allocation8 + $0x12]]
        %s1316 = sld [smem:[#allocation8 + $0x43]]
        %v1317 = vstv %s1315
        %v1318 = vmul.f32 %v1317, %v1215
        %v1319 = vmul.f32 %v1317, %v1216
        %1322 = vrot.lane.b32.xlu0 %v1318, 124
        %v1323 = vpop.permute.xlu0 %1322
        %1324 = vrot.lane.b32.xlu0 %v1319, 124
        %v1325 = vpop.permute.xlu0 %1324
        %v1328 = vadd.f32 %v1313, %v1323
        %v1329 = vadd.f32 %v1314, %v1325
        %v1330 = vstv %s1316
        %v1331 = vmul.f32 %v1330, %v1217
        %v1332 = vmul.f32 %v1330, %v1218
        %1335 = vrot.lane.b32.xlu0 %v1331, 124
        %v1336 = vpop.permute.xlu0 %1335
        %1337 = vrot.lane.b32.xlu0 %v1332, 124
        %v1338 = vpop.permute.xlu0 %1337
        %v1341 = vadd.f32 %v1328, %v1336
        %v1342 = vadd.f32 %v1329, %v1338
        %s1343 = sld [smem:[#allocation8 + $0x13]]
        %s1344 = sld [smem:[#allocation8 + $0x44]]
        %v1345 = vstv %s1343
        %v1346 = vmul.f32 %v1345, %v1215
        %v1347 = vmul.f32 %v1345, %v1216
        %1350 = vrot.lane.b32.xlu0 %v1346, 123
        %v1351 = vpop.permute.xlu0 %1350
        %1352 = vrot.lane.b32.xlu0 %v1347, 123
        %v1353 = vpop.permute.xlu0 %1352
        %v1356 = vadd.f32 %v1341, %v1351
        %v1357 = vadd.f32 %v1342, %v1353
        %v1358 = vstv %s1344
        %v1359 = vmul.f32 %v1358, %v1217
        %v1360 = vmul.f32 %v1358, %v1218
        %1363 = vrot.lane.b32.xlu0 %v1359, 123
        %v1364 = vpop.permute.xlu0 %1363
        %1365 = vrot.lane.b32.xlu0 %v1360, 123
        %v1366 = vpop.permute.xlu0 %1365
        %v1369 = vadd.f32 %v1356, %v1364
        %v1370 = vadd.f32 %v1357, %v1366
        %s1371 = sld [smem:[#allocation8 + $0x14]]
        %s1372 = sld [smem:[#allocation8 + $0x45]]
        %v1373 = vstv %s1371
        %v1374 = vmul.f32 %v1373, %v1215
        %v1375 = vmul.f32 %v1373, %v1216
        %1378 = vrot.lane.b32.xlu0 %v1374, 122
        %v1379 = vpop.permute.xlu0 %1378
        %1380 = vrot.lane.b32.xlu0 %v1375, 122
        %v1381 = vpop.permute.xlu0 %1380
        %v1384 = vadd.f32 %v1369, %v1379
        %v1385 = vadd.f32 %v1370, %v1381
        %v1386 = vstv %s1372
        %v1387 = vmul.f32 %v1386, %v1217
        %v1388 = vmul.f32 %v1386, %v1218
        %1391 = vrot.lane.b32.xlu0 %v1387, 122
        %v1392 = vpop.permute.xlu0 %1391
        %1393 = vrot.lane.b32.xlu0 %v1388, 122
        %v1394 = vpop.permute.xlu0 %1393
        %v1397 = vadd.f32 %v1384, %v1392
        %v1398 = vadd.f32 %v1385, %v1394
        %v1399 = vld [vmem:[#allocation4 + $0x3] sm:$0xff]
        %v1400 = vld [vmem:[#allocation4 + $0xb] sm:$0xff]
        %v1401 = vld [vmem:[#allocation4 + $0x1b] sm:$0xff]
        %v1402 = vld [vmem:[#allocation4 + $0x23] sm:$0xff]
        %s1403 = sld [smem:[#allocation8 + $0x15]]
        %s1404 = sld [smem:[#allocation8 + $0x46]]
        %v1405 = vstv %s1403
        %v1406 = vmul.f32 %v1405, %v1399
        %v1407 = vmul.f32 %v1405, %v1400
        %v1408 = vadd.f32 %v1397, %v1406
        %v1409 = vadd.f32 %v1398, %v1407
        %v1410 = vstv %s1404
        %v1411 = vmul.f32 %v1410, %v1401
        %v1412 = vmul.f32 %v1410, %v1402
        %v1413 = vadd.f32 %v1408, %v1411
        %v1414 = vadd.f32 %v1409, %v1412
        %s1415 = sld [smem:[#allocation8 + $0x16]]
        %s1416 = sld [smem:[#allocation8 + $0x47]]
        %v1417 = vstv %s1415
        %v1418 = vmul.f32 %v1417, %v1399
        %v1419 = vmul.f32 %v1417, %v1400
        %1422 = vrot.lane.b32.xlu0 %v1418, 127
        %v1423 = vpop.permute.xlu0 %1422
        %1424 = vrot.lane.b32.xlu0 %v1419, 127
        %v1425 = vpop.permute.xlu0 %1424
        %v1428 = vadd.f32 %v1413, %v1423
        %v1429 = vadd.f32 %v1414, %v1425
        %v1430 = vstv %s1416
        %v1431 = vmul.f32 %v1430, %v1401
        %v1432 = vmul.f32 %v1430, %v1402
        %1435 = vrot.lane.b32.xlu0 %v1431, 127
        %v1436 = vpop.permute.xlu0 %1435
        %1437 = vrot.lane.b32.xlu0 %v1432, 127
        %v1438 = vpop.permute.xlu0 %1437
        %v1441 = vadd.f32 %v1428, %v1436
        %v1442 = vadd.f32 %v1429, %v1438
        %s1443 = sld [smem:[#allocation8 + $0x17]]
        %s1444 = sld [smem:[#allocation8 + $0x48]]
        %v1445 = vstv %s1443
        %v1446 = vmul.f32 %v1445, %v1399
        %v1447 = vmul.f32 %v1445, %v1400
        %1450 = vrot.lane.b32.xlu0 %v1446, 126
        %v1451 = vpop.permute.xlu0 %1450
        %1452 = vrot.lane.b32.xlu0 %v1447, 126
        %v1453 = vpop.permute.xlu0 %1452
        %v1456 = vadd.f32 %v1441, %v1451
        %v1457 = vadd.f32 %v1442, %v1453
        %v1458 = vstv %s1444
        %v1459 = vmul.f32 %v1458, %v1401
        %v1460 = vmul.f32 %v1458, %v1402
        %1463 = vrot.lane.b32.xlu0 %v1459, 126
        %v1464 = vpop.permute.xlu0 %1463
        %1465 = vrot.lane.b32.xlu0 %v1460, 126
        %v1466 = vpop.permute.xlu0 %1465
        %v1469 = vadd.f32 %v1456, %v1464
        %v1470 = vadd.f32 %v1457, %v1466
        %s1471 = sld [smem:[#allocation8 + $0x18]]
        %s1472 = sld [smem:[#allocation8 + $0x49]]
        %v1473 = vstv %s1471
        %v1474 = vmul.f32 %v1473, %v1399
        %v1475 = vmul.f32 %v1473, %v1400
        %1478 = vrot.lane.b32.xlu0 %v1474, 125
        %v1479 = vpop.permute.xlu0 %1478
        %1480 = vrot.lane.b32.xlu0 %v1475, 125
        %v1481 = vpop.permute.xlu0 %1480
        %v1484 = vadd.f32 %v1469, %v1479
        %v1485 = vadd.f32 %v1470, %v1481
        %v1486 = vstv %s1472
        %v1487 = vmul.f32 %v1486, %v1401
        %v1488 = vmul.f32 %v1486, %v1402
        %1491 = vrot.lane.b32.xlu0 %v1487, 125
        %v1492 = vpop.permute.xlu0 %1491
        %1493 = vrot.lane.b32.xlu0 %v1488, 125
        %v1494 = vpop.permute.xlu0 %1493
        %v1497 = vadd.f32 %v1484, %v1492
        %v1498 = vadd.f32 %v1485, %v1494
        %s1499 = sld [smem:[#allocation8 + $0x19]]
        %s1500 = sld [smem:[#allocation8 + $0x4a]]
        %v1501 = vstv %s1499
        %v1502 = vmul.f32 %v1501, %v1399
        %v1503 = vmul.f32 %v1501, %v1400
        %1506 = vrot.lane.b32.xlu0 %v1502, 124
        %v1507 = vpop.permute.xlu0 %1506
        %1508 = vrot.lane.b32.xlu0 %v1503, 124
        %v1509 = vpop.permute.xlu0 %1508
        %v1512 = vadd.f32 %v1497, %v1507
        %v1513 = vadd.f32 %v1498, %v1509
        %v1514 = vstv %s1500
        %v1515 = vmul.f32 %v1514, %v1401
        %v1516 = vmul.f32 %v1514, %v1402
        %1519 = vrot.lane.b32.xlu0 %v1515, 124
        %v1520 = vpop.permute.xlu0 %1519
        %1521 = vrot.lane.b32.xlu0 %v1516, 124
        %v1522 = vpop.permute.xlu0 %1521
        %v1525 = vadd.f32 %v1512, %v1520
        %v1526 = vadd.f32 %v1513, %v1522
        %s1527 = sld [smem:[#allocation8 + $0x1a]]
        %s1528 = sld [smem:[#allocation8 + $0x4b]]
        %v1529 = vstv %s1527
        %v1530 = vmul.f32 %v1529, %v1399
        %v1531 = vmul.f32 %v1529, %v1400
        %1534 = vrot.lane.b32.xlu0 %v1530, 123
        %v1535 = vpop.permute.xlu0 %1534
        %1536 = vrot.lane.b32.xlu0 %v1531, 123
        %v1537 = vpop.permute.xlu0 %1536
        %v1540 = vadd.f32 %v1525, %v1535
        %v1541 = vadd.f32 %v1526, %v1537
        %v1542 = vstv %s1528
        %v1543 = vmul.f32 %v1542, %v1401
        %v1544 = vmul.f32 %v1542, %v1402
        %1547 = vrot.lane.b32.xlu0 %v1543, 123
        %v1548 = vpop.permute.xlu0 %1547
        %1549 = vrot.lane.b32.xlu0 %v1544, 123
        %v1550 = vpop.permute.xlu0 %1549
        %v1553 = vadd.f32 %v1540, %v1548
        %v1554 = vadd.f32 %v1541, %v1550
        %s1555 = sld [smem:[#allocation8 + $0x1b]]
        %s1556 = sld [smem:[#allocation8 + $0x4c]]
        %v1557 = vstv %s1555
        %v1558 = vmul.f32 %v1557, %v1399
        %v1559 = vmul.f32 %v1557, %v1400
        %1562 = vrot.lane.b32.xlu0 %v1558, 122
        %v1563 = vpop.permute.xlu0 %1562
        %1564 = vrot.lane.b32.xlu0 %v1559, 122
        %v1565 = vpop.permute.xlu0 %1564
        %v1568 = vadd.f32 %v1553, %v1563
        %v1569 = vadd.f32 %v1554, %v1565
        %v1570 = vstv %s1556
        %v1571 = vmul.f32 %v1570, %v1401
        %v1572 = vmul.f32 %v1570, %v1402
        %1575 = vrot.lane.b32.xlu0 %v1571, 122
        %v1576 = vpop.permute.xlu0 %1575
        %1577 = vrot.lane.b32.xlu0 %v1572, 122
        %v1578 = vpop.permute.xlu0 %1577
        %v1581 = vadd.f32 %v1568, %v1576
        %v1582 = vadd.f32 %v1569, %v1578
        %v1583 = vld [vmem:[#allocation4 + $0x4] sm:$0xff]
        %v1584 = vld [vmem:[#allocation4 + $0xc] sm:$0xff]
        %v1585 = vld [vmem:[#allocation4 + $0x1c] sm:$0xff]
        %v1586 = vld [vmem:[#allocation4 + $0x24] sm:$0xff]
        %s1587 = sld [smem:[#allocation8 + $0x1c]]
        %s1588 = sld [smem:[#allocation8 + $0x4d]]
        %v1589 = vstv %s1587
        %v1590 = vmul.f32 %v1589, %v1583
        %v1591 = vmul.f32 %v1589, %v1584
        %v1592 = vadd.f32 %v1581, %v1590
        %v1593 = vadd.f32 %v1582, %v1591
        %v1594 = vstv %s1588
        %v1595 = vmul.f32 %v1594, %v1585
        %v1596 = vmul.f32 %v1594, %v1586
        %v1597 = vadd.f32 %v1592, %v1595
        %v1598 = vadd.f32 %v1593, %v1596
        %s1599 = sld [smem:[#allocation8 + $0x1d]]
        %s1600 = sld [smem:[#allocation8 + $0x4e]]
        %v1601 = vstv %s1599
        %v1602 = vmul.f32 %v1601, %v1583
        %v1603 = vmul.f32 %v1601, %v1584
        %1606 = vrot.lane.b32.xlu0 %v1602, 127
        %v1607 = vpop.permute.xlu0 %1606
        %1608 = vrot.lane.b32.xlu0 %v1603, 127
        %v1609 = vpop.permute.xlu0 %1608
        %v1612 = vadd.f32 %v1597, %v1607
        %v1613 = vadd.f32 %v1598, %v1609
        %v1614 = vstv %s1600
        %v1615 = vmul.f32 %v1614, %v1585
        %v1616 = vmul.f32 %v1614, %v1586
        %1619 = vrot.lane.b32.xlu0 %v1615, 127
        %v1620 = vpop.permute.xlu0 %1619
        %1621 = vrot.lane.b32.xlu0 %v1616, 127
        %v1622 = vpop.permute.xlu0 %1621
        %v1625 = vadd.f32 %v1612, %v1620
        %v1626 = vadd.f32 %v1613, %v1622
        %s1627 = sld [smem:[#allocation8 + $0x1e]]
        %s1628 = sld [smem:[#allocation8 + $0x4f]]
        %v1629 = vstv %s1627
        %v1630 = vmul.f32 %v1629, %v1583
        %v1631 = vmul.f32 %v1629, %v1584
        %1634 = vrot.lane.b32.xlu0 %v1630, 126
        %v1635 = vpop.permute.xlu0 %1634
        %1636 = vrot.lane.b32.xlu0 %v1631, 126
        %v1637 = vpop.permute.xlu0 %1636
        %v1640 = vadd.f32 %v1625, %v1635
        %v1641 = vadd.f32 %v1626, %v1637
        %v1642 = vstv %s1628
        %v1643 = vmul.f32 %v1642, %v1585
        %v1644 = vmul.f32 %v1642, %v1586
        %1647 = vrot.lane.b32.xlu0 %v1643, 126
        %v1648 = vpop.permute.xlu0 %1647
        %1649 = vrot.lane.b32.xlu0 %v1644, 126
        %v1650 = vpop.permute.xlu0 %1649
        %v1653 = vadd.f32 %v1640, %v1648
        %v1654 = vadd.f32 %v1641, %v1650
        %s1655 = sld [smem:[#allocation8 + $0x1f]]
        %s1656 = sld [smem:[#allocation8 + $0x50]]
        %v1657 = vstv %s1655
        %v1658 = vmul.f32 %v1657, %v1583
        %v1659 = vmul.f32 %v1657, %v1584
        %1662 = vrot.lane.b32.xlu0 %v1658, 125
        %v1663 = vpop.permute.xlu0 %1662
        %1664 = vrot.lane.b32.xlu0 %v1659, 125
        %v1665 = vpop.permute.xlu0 %1664
        %v1668 = vadd.f32 %v1653, %v1663
        %v1669 = vadd.f32 %v1654, %v1665
        %v1670 = vstv %s1656
        %v1671 = vmul.f32 %v1670, %v1585
        %v1672 = vmul.f32 %v1670, %v1586
        %1675 = vrot.lane.b32.xlu0 %v1671, 125
        %v1676 = vpop.permute.xlu0 %1675
        %1677 = vrot.lane.b32.xlu0 %v1672, 125
        %v1678 = vpop.permute.xlu0 %1677
        %v1681 = vadd.f32 %v1668, %v1676
        %v1682 = vadd.f32 %v1669, %v1678
        %s1683 = sld [smem:[#allocation8 + $0x20]]
        %s1684 = sld [smem:[#allocation8 + $0x51]]
        %v1685 = vstv %s1683
        %v1686 = vmul.f32 %v1685, %v1583
        %v1687 = vmul.f32 %v1685, %v1584
        %1690 = vrot.lane.b32.xlu0 %v1686, 124
        %v1691 = vpop.permute.xlu0 %1690
        %1692 = vrot.lane.b32.xlu0 %v1687, 124
        %v1693 = vpop.permute.xlu0 %1692
        %v1696 = vadd.f32 %v1681, %v1691
        %v1697 = vadd.f32 %v1682, %v1693
        %v1698 = vstv %s1684
        %v1699 = vmul.f32 %v1698, %v1585
        %v1700 = vmul.f32 %v1698, %v1586
        %1703 = vrot.lane.b32.xlu0 %v1699, 124
        %v1704 = vpop.permute.xlu0 %1703
        %1705 = vrot.lane.b32.xlu0 %v1700, 124
        %v1706 = vpop.permute.xlu0 %1705
        %v1709 = vadd.f32 %v1696, %v1704
        %v1710 = vadd.f32 %v1697, %v1706
        %s1711 = sld [smem:[#allocation8 + $0x21]]
        %s1712 = sld [smem:[#allocation8 + $0x52]]
        %v1713 = vstv %s1711
        %v1714 = vmul.f32 %v1713, %v1583
        %v1715 = vmul.f32 %v1713, %v1584
        %1718 = vrot.lane.b32.xlu0 %v1714, 123
        %v1719 = vpop.permute.xlu0 %1718
        %1720 = vrot.lane.b32.xlu0 %v1715, 123
        %v1721 = vpop.permute.xlu0 %1720
        %v1724 = vadd.f32 %v1709, %v1719
        %v1725 = vadd.f32 %v1710, %v1721
        %v1726 = vstv %s1712
        %v1727 = vmul.f32 %v1726, %v1585
        %v1728 = vmul.f32 %v1726, %v1586
        %1731 = vrot.lane.b32.xlu0 %v1727, 123
        %v1732 = vpop.permute.xlu0 %1731
        %1733 = vrot.lane.b32.xlu0 %v1728, 123
        %v1734 = vpop.permute.xlu0 %1733
        %v1737 = vadd.f32 %v1724, %v1732
        %v1738 = vadd.f32 %v1725, %v1734
        %s1739 = sld [smem:[#allocation8 + $0x22]]
        %s1740 = sld [smem:[#allocation8 + $0x53]]
        %v1741 = vstv %s1739
        %v1742 = vmul.f32 %v1741, %v1583
        %v1743 = vmul.f32 %v1741, %v1584
        %1746 = vrot.lane.b32.xlu0 %v1742, 122
        %v1747 = vpop.permute.xlu0 %1746
        %1748 = vrot.lane.b32.xlu0 %v1743, 122
        %v1749 = vpop.permute.xlu0 %1748
        %v1752 = vadd.f32 %v1737, %v1747
        %v1753 = vadd.f32 %v1738, %v1749
        %v1754 = vstv %s1740
        %v1755 = vmul.f32 %v1754, %v1585
        %v1756 = vmul.f32 %v1754, %v1586
        %1759 = vrot.lane.b32.xlu0 %v1755, 122
        %v1760 = vpop.permute.xlu0 %1759
        %1761 = vrot.lane.b32.xlu0 %v1756, 122
        %v1762 = vpop.permute.xlu0 %1761
        %v1765 = vadd.f32 %v1752, %v1760
        %v1766 = vadd.f32 %v1753, %v1762
        %v1767 = vld [vmem:[#allocation4 + $0x5] sm:$0xff]
        %v1768 = vld [vmem:[#allocation4 + $0xd] sm:$0xff]
        %v1769 = vld [vmem:[#allocation4 + $0x1d] sm:$0xff]
        %v1770 = vld [vmem:[#allocation4 + $0x25] sm:$0xff]
        %s1771 = sld [smem:[#allocation8 + $0x23]]
        %s1772 = sld [smem:[#allocation8 + $0x54]]
        %v1773 = vstv %s1771
        %v1774 = vmul.f32 %v1773, %v1767
        %v1775 = vmul.f32 %v1773, %v1768
        %v1776 = vadd.f32 %v1765, %v1774
        %v1777 = vadd.f32 %v1766, %v1775
        %v1778 = vstv %s1772
        %v1779 = vmul.f32 %v1778, %v1769
        %v1780 = vmul.f32 %v1778, %v1770
        %v1781 = vadd.f32 %v1776, %v1779
        %v1782 = vadd.f32 %v1777, %v1780
        %s1783 = sld [smem:[#allocation8 + $0x24]]
        %s1784 = sld [smem:[#allocation8 + $0x55]]
        %v1785 = vstv %s1783
        %v1786 = vmul.f32 %v1785, %v1767
        %v1787 = vmul.f32 %v1785, %v1768
        %1790 = vrot.lane.b32.xlu0 %v1786, 127
        %v1791 = vpop.permute.xlu0 %1790
        %1792 = vrot.lane.b32.xlu0 %v1787, 127
        %v1793 = vpop.permute.xlu0 %1792
        %v1796 = vadd.f32 %v1781, %v1791
        %v1797 = vadd.f32 %v1782, %v1793
        %v1798 = vstv %s1784
        %v1799 = vmul.f32 %v1798, %v1769
        %v1800 = vmul.f32 %v1798, %v1770
        %1803 = vrot.lane.b32.xlu0 %v1799, 127
        %v1804 = vpop.permute.xlu0 %1803
        %1805 = vrot.lane.b32.xlu0 %v1800, 127
        %v1806 = vpop.permute.xlu0 %1805
        %v1809 = vadd.f32 %v1796, %v1804
        %v1810 = vadd.f32 %v1797, %v1806
        %s1811 = sld [smem:[#allocation8 + $0x25]]
        %s1812 = sld [smem:[#allocation8 + $0x56]]
        %v1813 = vstv %s1811
        %v1814 = vmul.f32 %v1813, %v1767
        %v1815 = vmul.f32 %v1813, %v1768
        %1818 = vrot.lane.b32.xlu0 %v1814, 126
        %v1819 = vpop.permute.xlu0 %1818
        %1820 = vrot.lane.b32.xlu0 %v1815, 126
        %v1821 = vpop.permute.xlu0 %1820
        %v1824 = vadd.f32 %v1809, %v1819
        %v1825 = vadd.f32 %v1810, %v1821
        %v1826 = vstv %s1812
        %v1827 = vmul.f32 %v1826, %v1769
        %v1828 = vmul.f32 %v1826, %v1770
        %1831 = vrot.lane.b32.xlu0 %v1827, 126
        %v1832 = vpop.permute.xlu0 %1831
        %1833 = vrot.lane.b32.xlu0 %v1828, 126
        %v1834 = vpop.permute.xlu0 %1833
        %v1837 = vadd.f32 %v1824, %v1832
        %v1838 = vadd.f32 %v1825, %v1834
        %s1839 = sld [smem:[#allocation8 + $0x26]]
        %s1840 = sld [smem:[#allocation8 + $0x57]]
        %v1841 = vstv %s1839
        %v1842 = vmul.f32 %v1841, %v1767
        %v1843 = vmul.f32 %v1841, %v1768
        %1846 = vrot.lane.b32.xlu0 %v1842, 125
        %v1847 = vpop.permute.xlu0 %1846
        %1848 = vrot.lane.b32.xlu0 %v1843, 125
        %v1849 = vpop.permute.xlu0 %1848
        %v1852 = vadd.f32 %v1837, %v1847
        %v1853 = vadd.f32 %v1838, %v1849
        %v1854 = vstv %s1840
        %v1855 = vmul.f32 %v1854, %v1769
        %v1856 = vmul.f32 %v1854, %v1770
        %1859 = vrot.lane.b32.xlu0 %v1855, 125
        %v1860 = vpop.permute.xlu0 %1859
        %1861 = vrot.lane.b32.xlu0 %v1856, 125
        %v1862 = vpop.permute.xlu0 %1861
        %v1865 = vadd.f32 %v1852, %v1860
        %v1866 = vadd.f32 %v1853, %v1862
        %s1867 = sld [smem:[#allocation8 + $0x27]]
        %s1868 = sld [smem:[#allocation8 + $0x58]]
        %v1869 = vstv %s1867
        %v1870 = vmul.f32 %v1869, %v1767
        %v1871 = vmul.f32 %v1869, %v1768
        %1874 = vrot.lane.b32.xlu0 %v1870, 124
        %v1875 = vpop.permute.xlu0 %1874
        %1876 = vrot.lane.b32.xlu0 %v1871, 124
        %v1877 = vpop.permute.xlu0 %1876
        %v1880 = vadd.f32 %v1865, %v1875
        %v1881 = vadd.f32 %v1866, %v1877
        %v1882 = vstv %s1868
        %v1883 = vmul.f32 %v1882, %v1769
        %v1884 = vmul.f32 %v1882, %v1770
        %1887 = vrot.lane.b32.xlu0 %v1883, 124
        %v1888 = vpop.permute.xlu0 %1887
        %1889 = vrot.lane.b32.xlu0 %v1884, 124
        %v1890 = vpop.permute.xlu0 %1889
        %v1893 = vadd.f32 %v1880, %v1888
        %v1894 = vadd.f32 %v1881, %v1890
        %s1895 = sld [smem:[#allocation8 + $0x28]]
        %s1896 = sld [smem:[#allocation8 + $0x59]]
        %v1897 = vstv %s1895
        %v1898 = vmul.f32 %v1897, %v1767
        %v1899 = vmul.f32 %v1897, %v1768
        %1902 = vrot.lane.b32.xlu0 %v1898, 123
        %v1903 = vpop.permute.xlu0 %1902
        %1904 = vrot.lane.b32.xlu0 %v1899, 123
        %v1905 = vpop.permute.xlu0 %1904
        %v1908 = vadd.f32 %v1893, %v1903
        %v1909 = vadd.f32 %v1894, %v1905
        %v1910 = vstv %s1896
        %v1911 = vmul.f32 %v1910, %v1769
        %v1912 = vmul.f32 %v1910, %v1770
        %1915 = vrot.lane.b32.xlu0 %v1911, 123
        %v1916 = vpop.permute.xlu0 %1915
        %1917 = vrot.lane.b32.xlu0 %v1912, 123
        %v1918 = vpop.permute.xlu0 %1917
        %v1921 = vadd.f32 %v1908, %v1916
        %v1922 = vadd.f32 %v1909, %v1918
        %s1923 = sld [smem:[#allocation8 + $0x29]]
        %s1924 = sld [smem:[#allocation8 + $0x5a]]
        %v1925 = vstv %s1923
        %v1926 = vmul.f32 %v1925, %v1767
        %v1927 = vmul.f32 %v1925, %v1768
        %1930 = vrot.lane.b32.xlu0 %v1926, 122
        %v1931 = vpop.permute.xlu0 %1930
        %1932 = vrot.lane.b32.xlu0 %v1927, 122
        %v1933 = vpop.permute.xlu0 %1932
        %v1936 = vadd.f32 %v1921, %v1931
        %v1937 = vadd.f32 %v1922, %v1933
        %v1938 = vstv %s1924
        %v1939 = vmul.f32 %v1938, %v1769
        %v1940 = vmul.f32 %v1938, %v1770
        %1943 = vrot.lane.b32.xlu0 %v1939, 122
        %v1944 = vpop.permute.xlu0 %1943
        %1945 = vrot.lane.b32.xlu0 %v1940, 122
        %v1946 = vpop.permute.xlu0 %1945
        %v1949 = vadd.f32 %v1936, %v1944
        %v1950 = vadd.f32 %v1937, %v1946
        %v1951 = vld [vmem:[#allocation4 + $0x6] sm:$0xff]
        %v1952 = vld [vmem:[#allocation4 + $0xe] sm:$0xff]
        %v1953 = vld [vmem:[#allocation4 + $0x1e] sm:$0xff]
        %v1954 = vld [vmem:[#allocation4 + $0x26] sm:$0xff]
        %s1955 = sld [smem:[#allocation8 + $0x2a]]
        %s1956 = sld [smem:[#allocation8 + $0x5b]]
        %v1957 = vstv %s1955
        %v1958 = vmul.f32 %v1957, %v1951
        %v1959 = vmul.f32 %v1957, %v1952
        %v1960 = vadd.f32 %v1949, %v1958
        %v1961 = vadd.f32 %v1950, %v1959
        %v1962 = vstv %s1956
        %v1963 = vmul.f32 %v1962, %v1953
        %v1964 = vmul.f32 %v1962, %v1954
        %v1965 = vadd.f32 %v1960, %v1963
        %v1966 = vadd.f32 %v1961, %v1964
        %s1967 = sld [smem:[#allocation8 + $0x2b]]
        %s1968 = sld [smem:[#allocation8 + $0x5c]]
        %v1969 = vstv %s1967
        %v1970 = vmul.f32 %v1969, %v1951
        %v1971 = vmul.f32 %v1969, %v1952
        %1974 = vrot.lane.b32.xlu0 %v1970, 127
        %v1975 = vpop.permute.xlu0 %1974
        %1976 = vrot.lane.b32.xlu0 %v1971, 127
        %v1977 = vpop.permute.xlu0 %1976
        %v1980 = vadd.f32 %v1965, %v1975
        %v1981 = vadd.f32 %v1966, %v1977
        %v1982 = vstv %s1968
        %v1983 = vmul.f32 %v1982, %v1953
        %v1984 = vmul.f32 %v1982, %v1954
        %1987 = vrot.lane.b32.xlu0 %v1983, 127
        %v1988 = vpop.permute.xlu0 %1987
        %1989 = vrot.lane.b32.xlu0 %v1984, 127
        %v1990 = vpop.permute.xlu0 %1989
        %v1993 = vadd.f32 %v1980, %v1988
        %v1994 = vadd.f32 %v1981, %v1990
        %s1995 = sld [smem:[#allocation8 + $0x2c]]
        %s1996 = sld [smem:[#allocation8 + $0x5d]]
        %v1997 = vstv %s1995
        %v1998 = vmul.f32 %v1997, %v1951
        %v1999 = vmul.f32 %v1997, %v1952
        %2002 = vrot.lane.b32.xlu0 %v1998, 126
        %v2003 = vpop.permute.xlu0 %2002
        %2004 = vrot.lane.b32.xlu0 %v1999, 126
        %v2005 = vpop.permute.xlu0 %2004
        %v2008 = vadd.f32 %v1993, %v2003
        %v2009 = vadd.f32 %v1994, %v2005
        %v2010 = vstv %s1996
        %v2011 = vmul.f32 %v2010, %v1953
        %v2012 = vmul.f32 %v2010, %v1954
        %2015 = vrot.lane.b32.xlu0 %v2011, 126
        %v2016 = vpop.permute.xlu0 %2015
        %2017 = vrot.lane.b32.xlu0 %v2012, 126
        %v2018 = vpop.permute.xlu0 %2017
        %v2021 = vadd.f32 %v2008, %v2016
        %v2022 = vadd.f32 %v2009, %v2018
        %s2023 = sld [smem:[#allocation8 + $0x2d]]
        %s2024 = sld [smem:[#allocation8 + $0x5e]]
        %v2025 = vstv %s2023
        %v2026 = vmul.f32 %v2025, %v1951
        %v2027 = vmul.f32 %v2025, %v1952
        %2030 = vrot.lane.b32.xlu0 %v2026, 125
        %v2031 = vpop.permute.xlu0 %2030
        %2032 = vrot.lane.b32.xlu0 %v2027, 125
        %v2033 = vpop.permute.xlu0 %2032
        %v2036 = vadd.f32 %v2021, %v2031
        %v2037 = vadd.f32 %v2022, %v2033
        %v2038 = vstv %s2024
        %v2039 = vmul.f32 %v2038, %v1953
        %v2040 = vmul.f32 %v2038, %v1954
        %2043 = vrot.lane.b32.xlu0 %v2039, 125
        %v2044 = vpop.permute.xlu0 %2043
        %2045 = vrot.lane.b32.xlu0 %v2040, 125
        %v2046 = vpop.permute.xlu0 %2045
        %v2049 = vadd.f32 %v2036, %v2044
        %v2050 = vadd.f32 %v2037, %v2046
        %s2051 = sld [smem:[#allocation8 + $0x2e]]
        %s2052 = sld [smem:[#allocation8 + $0x5f]]
        %v2053 = vstv %s2051
        %v2054 = vmul.f32 %v2053, %v1951
        %v2055 = vmul.f32 %v2053, %v1952
        %2058 = vrot.lane.b32.xlu0 %v2054, 124
        %v2059 = vpop.permute.xlu0 %2058
        %2060 = vrot.lane.b32.xlu0 %v2055, 124
        %v2061 = vpop.permute.xlu0 %2060
        %v2064 = vadd.f32 %v2049, %v2059
        %v2065 = vadd.f32 %v2050, %v2061
        %v2066 = vstv %s2052
        %v2067 = vmul.f32 %v2066, %v1953
        %v2068 = vmul.f32 %v2066, %v1954
        %2071 = vrot.lane.b32.xlu0 %v2067, 124
        %v2072 = vpop.permute.xlu0 %2071
        %2073 = vrot.lane.b32.xlu0 %v2068, 124
        %v2074 = vpop.permute.xlu0 %2073
        %v2077 = vadd.f32 %v2064, %v2072
        %v2078 = vadd.f32 %v2065, %v2074
        %s2079 = sld [smem:[#allocation8 + $0x2f]]
        %s2080 = sld [smem:[#allocation8 + $0x60]]
        %v2081 = vstv %s2079
        %v2082 = vmul.f32 %v2081, %v1951
        %v2083 = vmul.f32 %v2081, %v1952
        %2086 = vrot.lane.b32.xlu0 %v2082, 123
        %v2087 = vpop.permute.xlu0 %2086
        %2088 = vrot.lane.b32.xlu0 %v2083, 123
        %v2089 = vpop.permute.xlu0 %2088
        %v2092 = vadd.f32 %v2077, %v2087
        %v2093 = vadd.f32 %v2078, %v2089
        %v2094 = vstv %s2080
        %v2095 = vmul.f32 %v2094, %v1953
        %v2096 = vmul.f32 %v2094, %v1954
        %2099 = vrot.lane.b32.xlu0 %v2095, 123
        %v2100 = vpop.permute.xlu0 %2099
        %2101 = vrot.lane.b32.xlu0 %v2096, 123
        %v2102 = vpop.permute.xlu0 %2101
        %v2105 = vadd.f32 %v2092, %v2100
        %v2106 = vadd.f32 %v2093, %v2102
        %s2107 = sld [smem:[#allocation8 + $0x30]]
        %s2108 = sld [smem:[#allocation8 + $0x61]]
        %v2109 = vstv %s2107
        %v2110 = vmul.f32 %v2109, %v1951
        %v2111 = vmul.f32 %v2109, %v1952
        %2114 = vrot.lane.b32.xlu0 %v2110, 122
        %v2115 = vpop.permute.xlu0 %2114
        %2116 = vrot.lane.b32.xlu0 %v2111, 122
        %v2117 = vpop.permute.xlu0 %2116
        %v2120 = vadd.f32 %v2105, %v2115
        %v2121 = vadd.f32 %v2106, %v2117
        %v2122 = vstv %s2108
        %v2123 = vmul.f32 %v2122, %v1953
        %v2124 = vmul.f32 %v2122, %v1954
        %2127 = vrot.lane.b32.xlu0 %v2123, 122
        %v2128 = vpop.permute.xlu0 %2127
        %2129 = vrot.lane.b32.xlu0 %v2124, 122
        %v2130 = vpop.permute.xlu0 %2129
        %v2133 = vadd.f32 %v2120, %v2128
        %v2134 = vadd.f32 %v2121, %v2130
        %v2135 = vxor.u32 %v2133, 2147483648
        %v2136 = vxor.u32 %v2134, 2147483648
        %v2137 = vmul.f32 %v2135, 1.442695
        %v2138 = vpow.pop %v2137
        %v2139 = vmul.f32 %v2136, 1.442695
        %v2140 = vpow.pop %v2139
        %v2141 = vadd.f32 %v2138, 1.0
        %v2142 = vadd.f32 %v2140, 1.0
        %v2143 = vrcp.pop %v2141
        %v2144 = vmul.f32 %v2141, %v2143
        %v2145 = vsub.f32 1.0, %v2144
        %v2146 = vmul.f32 %v2143, %v2145
        %v2147 = vadd.f32 %v2143, %v2146
        %vm2148 = vweird.f32 %v2141
        %vm2149 = vweird.f32 %v2143
        %vm2150 = vmor %vm2148, %vm2149
        %v2151 = vsel %vm2150, %v2143, %v2147
        %v2152 = vand.u32 2147483647, %v2141
        %vm2153 = vcmp.eq.f32.partialorder %v2152, 8.507059e+37
        %v2154 = vand.u32 %v2141, 2147483648
        %v2155 = vor.u32 1.1754944e-38, %v2154
        %v2156 = vsel %vm2153, %v2155, %v2151
        %v2157 = vmul.f32 1.0, %v2156
        %v2158 = vrcp.pop %v2142
        %v2159 = vmul.f32 %v2142, %v2158
        %v2160 = vsub.f32 1.0, %v2159
        %v2161 = vmul.f32 %v2158, %v2160
        %v2162 = vadd.f32 %v2158, %v2161
        %vm2163 = vweird.f32 %v2142
        %vm2164 = vweird.f32 %v2158
        %vm2165 = vmor %vm2163, %vm2164
        %v2166 = vsel %vm2165, %v2158, %v2162
        %v2167 = vand.u32 2147483647, %v2142
        %vm2168 = vcmp.eq.f32.partialorder %v2167, 8.507059e+37
        %v2169 = vand.u32 %v2142, 2147483648
        %v2170 = vor.u32 1.1754944e-38, %v2169
        %v2171 = vsel %vm2168, %v2170, %v2166
        %v2172 = vmul.f32 1.0, %v2171
        %vm2173 = vcmask 130048
        %2174 = vst.msk [vmem:[#allocation5] sm:$0xff] %vm2173, %v2157
        %2175 = vst.msk [vmem:[#allocation5 + $0x8] sm:$0xff] %vm2173, %v2172
        %v2176 = vld [vmem:[#allocation5] sm:$0x1]
        %vm2177 = vcmp.lt.s32.totalorder %v606, 16
        %vm2178 = vmand %vm607, %vm2177
        %2179 = vst.msk [vmem:[#allocation6] sm:$0x1] %vm2178, %v2176
        %v2180 = vld [vmem:[#allocation5 + $0x1] sm:$0x1]
        %2182 = vrot.lane.b32.xlu0 %v2180, 16
        %v2183 = vpop.permute.xlu0 %2182
        %vm2185 = vcmp.ge.s32.totalorder %v606, 16
        %vm2186 = vcmp.lt.s32.totalorder %v606, 32
        %vm2187 = vmand %vm2185, %vm2186
        %2188 = vst.msk [vmem:[#allocation6] sm:$0x1] %vm2187, %v2183
        %v2189 = vld [vmem:[#allocation5 + $0x2] sm:$0x1]
        %2191 = vrot.lane.b32.xlu0 %v2189, 32
        %v2192 = vpop.permute.xlu0 %2191
        %vm2194 = vcmp.ge.s32.totalorder %v606, 32
        %vm2195 = vcmp.lt.s32.totalorder %v606, 48
        %vm2196 = vmand %vm2194, %vm2195
        %2197 = vst.msk [vmem:[#allocation6] sm:$0x1] %vm2196, %v2192
        %v2198 = vld [vmem:[#allocation5 + $0x3] sm:$0x1]
        %2200 = vrot.lane.b32.xlu0 %v2198, 48
        %v2201 = vpop.permute.xlu0 %2200
        %vm2203 = vcmp.ge.s32.totalorder %v606, 48
        %vm2204 = vcmp.lt.s32.totalorder %v606, 64
        %vm2205 = vmand %vm2203, %vm2204
        %2206 = vst.msk [vmem:[#allocation6] sm:$0x1] %vm2205, %v2201
        %v2207 = vld [vmem:[#allocation5 + $0x4] sm:$0x1]
        %2209 = vrot.lane.b32.xlu0 %v2207, 64
        %v2210 = vpop.permute.xlu0 %2209
        %vm2212 = vcmp.ge.s32.totalorder %v606, 64
        %vm2213 = vcmp.lt.s32.totalorder %v606, 80
        %vm2214 = vmand %vm2212, %vm2213
        %2215 = vst.msk [vmem:[#allocation6] sm:$0x1] %vm2214, %v2210
        %v2216 = vld [vmem:[#allocation5 + $0x5] sm:$0x1]
        %2218 = vrot.lane.b32.xlu0 %v2216, 80
        %v2219 = vpop.permute.xlu0 %2218
        %vm2221 = vcmp.ge.s32.totalorder %v606, 80
        %vm2222 = vcmp.lt.s32.totalorder %v606, 96
        %vm2223 = vmand %vm2221, %vm2222
        %2224 = vst.msk [vmem:[#allocation6] sm:$0x1] %vm2223, %v2219
        %v2225 = vld [vmem:[#allocation5 + $0x6] sm:$0x1]
        %2227 = vrot.lane.b32.xlu0 %v2225, 96
        %v2228 = vpop.permute.xlu0 %2227
        %vm2230 = vcmp.ge.s32.totalorder %v606, 96
        %vm2231 = vcmp.lt.s32.totalorder %v606, 112
        %vm2232 = vmand %vm2230, %vm2231
        %2233 = vst.msk [vmem:[#allocation6] sm:$0x1] %vm2232, %v2228
        %v2234 = vld [vmem:[#allocation5 + $0x7] sm:$0x1]
        %2236 = vrot.lane.b32.xlu0 %v2234, 112
        %v2237 = vpop.permute.xlu0 %2236
        %vm2239 = vcmp.ge.s32.totalorder %v606, 112
        %vm2240 = vcmp.lt.s32.totalorder %v606, 128
        %vm2241 = vmand %vm2239, %vm2240
        %2242 = vst.msk [vmem:[#allocation6] sm:$0x1] %vm2241, %v2237
        %v2243 = vld [vmem:[#allocation5 + $0x8] sm:$0x1]
        %2244 = vst.msk [vmem:[#allocation6 + $0x1] sm:$0x1] %vm2178, %v2243
        %v2245 = vld [vmem:[#allocation5 + $0x9] sm:$0x1]
        %2247 = vrot.lane.b32.xlu0 %v2245, 16
        %v2248 = vpop.permute.xlu0 %2247
        %2250 = vst.msk [vmem:[#allocation6 + $0x1] sm:$0x1] %vm2187, %v2248
        %v2251 = vld [vmem:[#allocation5 + $0xa] sm:$0x1]
        %2253 = vrot.lane.b32.xlu0 %v2251, 32
        %v2254 = vpop.permute.xlu0 %2253
        %2256 = vst.msk [vmem:[#allocation6 + $0x1] sm:$0x1] %vm2196, %v2254
        %v2257 = vld [vmem:[#allocation5 + $0xb] sm:$0x1]
        %2259 = vrot.lane.b32.xlu0 %v2257, 48
        %v2260 = vpop.permute.xlu0 %2259
        %2262 = vst.msk [vmem:[#allocation6 + $0x1] sm:$0x1] %vm2205, %v2260
        %v2263 = vld [vmem:[#allocation5 + $0xc] sm:$0x1]
        %2265 = vrot.lane.b32.xlu0 %v2263, 64
        %v2266 = vpop.permute.xlu0 %2265
        %2268 = vst.msk [vmem:[#allocation6 + $0x1] sm:$0x1] %vm2214, %v2266
        %v2269 = vld [vmem:[#allocation5 + $0xd] sm:$0x1]
        %2271 = vrot.lane.b32.xlu0 %v2269, 80
        %v2272 = vpop.permute.xlu0 %2271
        %2274 = vst.msk [vmem:[#allocation6 + $0x1] sm:$0x1] %vm2223, %v2272
        %v2275 = vld [vmem:[#allocation5 + $0xe] sm:$0x1]
        %2277 = vrot.lane.b32.xlu0 %v2275, 96
        %v2278 = vpop.permute.xlu0 %2277
        %2280 = vst.msk [vmem:[#allocation6 + $0x1] sm:$0x1] %vm2232, %v2278
        %v2281 = vld [vmem:[#allocation5 + $0xf] sm:$0x1]
        %2283 = vrot.lane.b32.xlu0 %v2281, 112
        %v2284 = vpop.permute.xlu0 %2283
        %2286 = vst.msk [vmem:[#allocation6 + $0x1] sm:$0x1] %vm2241, %v2284
        %v2287 = vld [vmem:[#allocation6] sm:$0x3]
        %v2288 = vld [vmem:[%s281] sm:$0xff]
        %v2289 = vld [vmem:[%s281 + $0x8] sm:$0xff]
        %v2290 = vld [vmem:[%s281 + $0x10] sm:$0xff]
        %v2291 = vld [vmem:[%s281 + $0x18] sm:$0xff]
        %v2292 = vld [vmem:[%s281 + $0x20] sm:$0xff]
        %v2293 = vld [vmem:[%s281 + $0x28] sm:$0xff]
        %v2294 = vld [vmem:[%s281 + $0x30] sm:$0xff]
        %v2295 = vld [vmem:[%s281 + $0x38] sm:$0xff]
        %v2296 = vld [vmem:[#allocation2] sm:$0xff]
        %v2297 = vld [vmem:[#allocation2 + $0x8] sm:$0xff]
        %v2298 = vld [vmem:[#allocation2 + $0x10] sm:$0xff]
        %v2299 = vld [vmem:[#allocation2 + $0x18] sm:$0xff]
        %2301 = vset.pattern.permute.xlu0 0
        %2302 = vperm.xlu0 %2301, %v2296
        %v2303 = vpop.permute.xlu0 %2302
        %2306 = vset.pattern.permute.xlu0 0
        %2307 = vperm.xlu0 %2306, %v2297
        %v2308 = vpop.permute.xlu0 %2307
        %2311 = vset.pattern.permute.xlu0 0
        %2312 = vperm.xlu0 %2311, %v2298
        %v2313 = vpop.permute.xlu0 %2312
        %2316 = vset.pattern.permute.xlu0 0
        %2317 = vperm.xlu0 %2316, %v2299
        %v2318 = vpop.permute.xlu0 %2317
        %v2320 = vmul.f32 %v2288, %v2303
        %v2321 = vmul.f32 %v2289, %v2303
        %v2322 = vmul.f32 %v2290, %v2308
        %v2323 = vmul.f32 %v2291, %v2308
        %v2324 = vmul.f32 %v2292, %v2313
        %v2325 = vmul.f32 %v2293, %v2313
        %v2326 = vmul.f32 %v2294, %v2318
        %v2327 = vmul.f32 %v2295, %v2318
        %v2329 = vperm.slane %v2287, 0
        %v2330 = vperm.slane %v2287, 1
        %v2333 = vmul.f32 %v2320, %v2329
        %v2334 = vmul.f32 %v2321, %v2330
        %v2335 = vmul.f32 %v2322, %v2329
        %v2336 = vmul.f32 %v2323, %v2330
        %v2337 = vmul.f32 %v2324, %v2329
        %v2338 = vmul.f32 %v2325, %v2330
        %v2339 = vmul.f32 %v2326, %v2329
        %v2340 = vmul.f32 %v2327, %v2330
        %2341 = vst [vmem:[%s313] sm:$0xff] %v2333
        %2342 = vst [vmem:[%s313 + $0x8] sm:$0xff] %v2334
        %2343 = vst [vmem:[%s313 + $0x10] sm:$0xff] %v2335
        %2344 = vst [vmem:[%s313 + $0x18] sm:$0xff] %v2336
        %2345 = vst [vmem:[%s313 + $0x20] sm:$0xff] %v2337
        %2346 = vst [vmem:[%s313 + $0x28] sm:$0xff] %v2338
        %2347 = vst [vmem:[%s313 + $0x30] sm:$0xff] %v2339
        %2348 = vst [vmem:[%s313 + $0x38] sm:$0xff] %v2340
        %s2349 = sand.u32 %s186, 1
        %s2350 = scalar_lea.sflag [#allocation10], %s2349
        %s2351 = sand.u32 %s186, 1
        %s2352 = smul.addr %s2351, 64
        %s2353 = scalar_lea.vmem [#allocation13], %s2352
        // Predicated region
        $region57: #{tpu_custom_call.1} parent=47 // pred_check
          %p2354 = pneg %p196
        $region58: #{tpu_custom_call.1} parent=47 // pred_check_branch
          %2356 = sbr.rel (%p2354) target = $region60
        $region59: #{tpu_custom_call.1} parent=47 // pred_region
          %2358 = vsyncadd %s2350, 0
          %s2359 = smul.addr %s26, 8
          %s2360 = smul.addr %s2359, 8
          %s2361 = scalar_lea.hbm %s7, %s2360
          %s2362 = sshll.u32 %s2353, 4
          %s2363 = int_to_ptr.vmem [resolvable:$true] %s2362
          %s2364 = sshll.u32 %s2361, 4
          %s2365 = int_to_ptr.hbm [resolvable:$true] %s2364
          %2370 = dma.vmem_to_hbm [thread:$0]  %s2363, 1024, %s2365, %s2350, 256, 256, 16
        $region60: #{tpu_custom_call.1} parent=47 // pred_fallthru
          _
      $region48: #{tpu_custom_call.1} parent=5 // pred_fallthru
        _
      %p2371 = scmp.le.s32.totalorder 2, %s21
      // Predicated region
      $region61: #{tpu_custom_call.1} parent=5 // pred_check
        %p2372 = pneg %p2371
      $region62: #{tpu_custom_call.1} parent=5 // pred_check_branch
        %2374 = sbr.rel (%p2372) target = $region64
      $region63: #{tpu_custom_call.1} parent=5 // pred_region
        %s2375 = ssub.s32 %s21, 2
        // Predicated region
        $region65: #{tpu_custom_call.1} parent=63 // pred_check
          %p2376 = pneg %p202
        $region66: #{tpu_custom_call.1} parent=63 // pred_check_branch
          %2378 = sbr.rel (%p2376) target = $region68
        $region67: #{tpu_custom_call.1} parent=63 // pred_region
          %s2379 = sand.u32 %s187, 1
          %s2380 = scalar_lea.sflag [#allocation10], %s2379
          %s2381 = sand.u32 %s187, 1
          %s2382 = smul.addr %s2381, 64
          %s2383 = scalar_lea.vmem [#allocation13], %s2382
          %2385 = dma.done %s2380, 1024
        $region68: #{tpu_custom_call.1} parent=63 // pred_fallthru
          _
      $region64: #{tpu_custom_call.1} parent=5 // pred_fallthru
        _
    $region6: #{tpu_custom_call.1} parent=1 // loop_footer
      %s25 = sadd.s32 1, %s21
    $region7: #{tpu_custom_call.1} parent=1 // loop_footer_branch
      %20 = sbr.rel target = $region3
    $region8: #{tpu_custom_call.1} parent=1 // loop_exit
      _
    %2386 = vsyncpa [#allocation9], 1
    %s2387 = scalar_lea.sflag [#allocation9], 1
    %2388 = vsyncpa %s2387, 1
    %2389 = vsyncpa [#allocation10], 1
    %s2390 = scalar_lea.sflag [#allocation10], 1
    %2391 = vsyncpa %s2390, 1
    %2392 = vsyncpa [#allocation11], 1
    %s2393 = scalar_lea.sflag [#allocation11], 1
    %2394 = vsyncpa %s2393, 1

</llo_original>
